<compile_context>
chip_gen: v7x
topology: tpu7x:2x2x1
jax: 0.10.0
libtpu: 0.0.40
codegen_flags: <defaults>
</compile_context>

<pallas_src>
import numpy as np
import jax
import jax.numpy as jnp
from jax import lax
from jax.experimental import pallas as pl
from jax.experimental.pallas import tpu as pltpu


# ---------------------------------------------------------------------------
# Fused whole-network kernel (one block of `bb` images per grid step)
# ---------------------------------------------------------------------------
def _net_kernel(x_ref, rs1_ref, wb1_ref, b1_ref, hs1_ref, ws1_ref,
                rs2_ref, wb2_ref, b2_ref, hs2_ref, ws2_ref,
                fsel_ref, fc1w_ref, fc1b_ref, fc2w_ref, fc2b_ref,
                fc3w_ref, fc3b_ref, out_ref):
    f32 = jnp.float32
    x = x_ref[...]                                           # (bb*32, 96)  rows=b*32+r, cols=w*3+c

    # ---- conv1 (3->6, 5x5): 5 banded matmuls over kh-shifted row slabs -----
    acc1 = None
    for kh in range(5):
        xs = jnp.dot(rs1_ref[kh], x, preferred_element_type=f32)       # (bb*28, 96)  row shift by kh
        t = jnp.dot(xs, wb1_ref[kh], preferred_element_type=f32)       # (bb*28, 168) cols=ow*6+oc
        acc1 = t if acc1 is None else acc1 + t

    # 2x2 max-pool via exact 0/1 selection matmuls; bias+ReLU after pooling
    hp = jnp.maximum(jnp.dot(hs1_ref[0], acc1, preferred_element_type=f32),
                     jnp.dot(hs1_ref[1], acc1, preferred_element_type=f32))   # (bb*14, 168)
    p1 = jnp.maximum(jnp.dot(hp, ws1_ref[0], preferred_element_type=f32),
                     jnp.dot(hp, ws1_ref[1], preferred_element_type=f32))     # (bb*14, 84)
    a1 = jnp.maximum(p1 + b1_ref[...], 0.0)                  # rows=b*14+h, cols=w*6+c

    # ---- conv2 (6->16, 5x5): same banded-matmul structure ------------------
    acc2 = None
    for kh in range(5):
        s = jnp.dot(rs2_ref[kh], a1, preferred_element_type=f32)       # (bb*10, 84)
        t = jnp.dot(s, wb2_ref[kh], preferred_element_type=f32)        # (bb*10, 160) cols=ow*16+oc
        acc2 = t if acc2 is None else acc2 + t

    hp2 = jnp.maximum(jnp.dot(hs2_ref[0], acc2, preferred_element_type=f32),
                      jnp.dot(hs2_ref[1], acc2, preferred_element_type=f32))  # (bb*5, 160)
    p2 = jnp.maximum(jnp.dot(hp2, ws2_ref[0], preferred_element_type=f32),
                     jnp.dot(hp2, ws2_ref[1], preferred_element_type=f32))    # (bb*5, 80)
    a2 = jnp.maximum(p2 + b2_ref[...], 0.0)                  # rows=b*5+h, cols=w*16+c

    # ---- flatten + fc1 fused (fc1 weight rows pre-permuted to (h,w,c)) -----
    h1 = None
    for h in range(5):
        rows = jnp.dot(fsel_ref[h], a2, preferred_element_type=f32)    # (bb, 80)
        t = jnp.dot(rows, fc1w_ref[h * 80:(h + 1) * 80, :],
                    preferred_element_type=f32)                        # (bb, 120)
        h1 = t if h1 is None else h1 + t
    h1 = jnp.maximum(h1 + fc1b_ref[...], 0.0)

    # ---- fc2 -> relu -> fc3 -------------------------------------------------
    h2 = jnp.maximum(jnp.dot(h1, fc2w_ref[...], preferred_element_type=f32)
                     + fc2b_ref[...], 0.0)
    out = jnp.dot(h2, fc3w_ref[...], preferred_element_type=f32) + fc3b_ref[...]
    out_ref[...] = out.astype(out_ref.dtype)                 # one (bb, 10) slab per step


# ---------------------------------------------------------------------------
# Host-side constant builders (trace-time numpy -> embedded constants)
# ---------------------------------------------------------------------------
def _shift_rows(bb, out_h, in_h, k):
    """rs[kh, b*out_h+oh, b*in_h+oh+kh] = 1  (per-image kh row shift)."""
    m = np.zeros((k, bb * out_h, bb * in_h), np.float32)
    for kh in range(k):
        for b in range(bb):
            for oh in range(out_h):
                m[kh, b * out_h + oh, b * in_h + oh + kh] = 1.0
    return jnp.asarray(m)


def _pool_rows(bb, out_h):
    """H-pool selectors: [0] picks row 2p, [1] picks row 2p+1 (per image)."""
    in_h = 2 * out_h
    m = np.zeros((2, bb * out_h, bb * in_h), np.float32)
    for b in range(bb):
        for p in range(out_h):
            m[0, b * out_h + p, b * in_h + 2 * p] = 1.0
            m[1, b * out_h + p, b * in_h + 2 * p + 1] = 1.0
    return jnp.asarray(m)


def _pool_lanes(out_w, c):
    """W-pool selectors over (w*c+ch) lanes: [0] picks w=2p, [1] picks w=2p+1."""
    in_w = 2 * out_w
    m = np.zeros((2, in_w * c, out_w * c), np.float32)
    for p in range(out_w):
        for ch in range(c):
            m[0, (2 * p) * c + ch, p * c + ch] = 1.0
            m[1, (2 * p + 1) * c + ch, p * c + ch] = 1.0
    return jnp.asarray(m)


def _flatten_rows(bb, n_h):
    """fsel[h, b, b*n_h+h] = 1  (pick pooled row h of image b)."""
    m = np.zeros((n_h, bb, bb * n_h), np.float32)
    for h in range(n_h):
        for b in range(bb):
            m[h, b, b * n_h + h] = 1.0
    return jnp.asarray(m)


def _banded_weight(w_oihw, in_w, out_w):
    """Fold the kW/cin contraction of a conv into a banded (in_w*I, out_w*O)
    matrix per kh:  band[kh][wi*I+c, ow*O+oc] = w[oc, c, kh, wi-ow]."""
    o, i, kh_n, kw_n = w_oihw.shape
    w = jnp.transpose(w_oihw, (2, 3, 1, 0))                  # (KH, KW, I, O)
    wi = np.arange(in_w)[:, None]
    ow = np.arange(out_w)[None, :]
    kw = wi - ow
    valid = ((kw >= 0) & (kw < kw_n)).astype(np.float32)     # (in_w, out_w)
    kw_c = np.clip(kw, 0, kw_n - 1)
    bands = []
    for k in range(kh_n):
        g = w[k][kw_c] * valid[:, :, None, None]             # (in_w, out_w, I, O)
        bands.append(jnp.transpose(g, (0, 2, 1, 3)).reshape(in_w * i, out_w * o))
    return jnp.stack(bands)                                  # (KH, in_w*I, out_w*O)


# ---------------------------------------------------------------------------
# Wrapper: weight re-layouts + single batch-blocked pallas_call
# ---------------------------------------------------------------------------
def net_forward(params, x, block_batch=8):
    assert x.shape[1:] == (3, 32, 32), "Net expects (N, 3, 32, 32) input"
    n = x.shape[0]
    bb = int(min(block_batch, n))                 # images per grid step
    n_pad = ((n + bb - 1) // bb) * bb
    num_blocks = n_pad // bb

    x_nhwc = jnp.transpose(x, (0, 2, 3, 1)).astype(jnp.float32)    # (N, 32, 32, 3)
    if n_pad != n:
        x_nhwc = jnp.pad(x_nhwc, ((0, n_pad - n), (0, 0), (0, 0), (0, 0)))
    # Lane-dense layout: rows = b*32 + h, cols = w*3 + c  (96 lanes, no 3->128 pad)
    x2d = x_nhwc.reshape(n_pad * 32, 32 * 3)

    # Banded conv weights + tiled biases
    wb1 = _banded_weight(params["conv1_w"], 32, 28)                 # (5, 96, 168)
    wb2 = _banded_weight(params["conv2_w"], 14, 10)                 # (5, 84, 160)
    b1t = jnp.tile(params["conv1_b"], 14).reshape(1, 84)
    b2t = jnp.tile(params["conv2_b"], 5).reshape(1, 80)

    # 0/1 selection constants (depend only on bb; built once at trace time)
    rs1 = _shift_rows(bb, 28, 32, 5)              # (5, bb*28, bb*32)
    hs1 = _pool_rows(bb, 14)                      # (2, bb*14, bb*28)
    ws1 = _pool_lanes(14, 6)                      # (2, 168, 84)
    rs2 = _shift_rows(bb, 10, 14, 5)              # (5, bb*10, bb*14)
    hs2 = _pool_rows(bb, 5)                       # (2, bb*5, bb*10)
    ws2 = _pool_lanes(5, 16)                      # (2, 160, 80)
    fsel = _flatten_rows(bb, 5)                   # (5, bb, bb*5)

    # fc1 rows permuted from torch flatten order (c*25+h*5+w) to (h*80+w*16+c)
    fc1w = params["fc1_w"].reshape(16, 5, 5, 120).transpose(1, 2, 0, 3).reshape(400, 120)
    fc1b = params["fc1_b"].reshape(1, 120)
    fc2w = params["fc2_w"]
    fc2b = params["fc2_b"].reshape(1, 84)
    fc3w = params["fc3_w"]
    fc3b = params["fc3_b"].reshape(1, 10)

    def const2(a):
        return pl.BlockSpec(a.shape, lambda i: (0, 0))

    def const3(a):
        return pl.BlockSpec(a.shape, lambda i: (0, 0, 0))

    out = pl.pallas_call(
        _net_kernel,
        out_shape=jax.ShapeDtypeStruct((n_pad, 10), jnp.float32),
        grid=(num_blocks,),
        in_specs=[
            pl.BlockSpec((bb * 32, 96), lambda i: (i, 0)),   # one block of images
            const3(rs1), const3(wb1), const2(b1t), const3(hs1), const3(ws1),
            const3(rs2), const3(wb2), const2(b2t), const3(hs2), const3(ws2),
            const3(fsel),
            const2(fc1w), const2(fc1b), const2(fc2w), const2(fc2b),
            const2(fc3w), const2(fc3b),
        ],
        out_specs=pl.BlockSpec((bb, 10), lambda i: (i, 0)),
        compiler_params=pltpu.CompilerParams(
            dimension_semantics=("parallel",)),
    )(x2d, rs1, wb1, b1t, hs1, ws1, rs2, wb2, b2t, hs2, ws2, fsel,
      fc1w, fc1b, fc2w, fc2b, fc3w, fc3b)
    return out[:n]


# ---------------------------------------------------------------------------
# Parameters (deterministic, PyTorch-default-style uniform init)
# ---------------------------------------------------------------------------
def init_params(key):
    ks = jax.random.split(key, 10)

    def u(k, shape, fan_in):
        bound = 1.0 / (fan_in ** 0.5)
        return jax.random.uniform(k, shape, jnp.float32, -bound, bound)

    return {
        "conv1_w": u(ks[0], (6, 3, 5, 5), 3 * 5 * 5),
        "conv1_b": u(ks[1], (6,), 3 * 5 * 5),
        "conv2_w": u(ks[2], (16, 6, 5, 5), 6 * 5 * 5),
        "conv2_b": u(ks[3], (16,), 6 * 5 * 5),
        # FC weights stored as (in, out) so forward does x @ w directly.
        "fc1_w": u(ks[4], (16 * 5 * 5, 120), 16 * 5 * 5),
        "fc1_b": u(ks[5], (120,), 16 * 5 * 5),
        "fc2_w": u(ks[6], (120, 84), 120),
        "fc2_b": u(ks[7], (84,), 120),
        "fc3_w": u(ks[8], (84, 10), 84),
        "fc3_b": u(ks[9], (10,), 84),
    }


# Pure-JAX reference (same math as the PyTorch module) for a sanity check.
def net_reference(params, x):
    dn = ("NCHW", "OIHW", "NCHW")
    y = lax.conv_general_dilated(x, params["conv1_w"], (1, 1), "VALID",
                                 dimension_numbers=dn)
    y = jnp.maximum(y + params["conv1_b"][None, :, None, None], 0.0)
    y = lax.reduce_window(y, -jnp.inf, lax.max, (1, 1, 2, 2), (1, 1, 2, 2), "VALID")
    y = lax.conv_general_dilated(y, params["conv2_w"], (1, 1), "VALID",
                                 dimension_numbers=dn)
    y = jnp.maximum(y + params["conv2_b"][None, :, None, None], 0.0)
    y = lax.reduce_window(y, -jnp.inf, lax.max, (1, 1, 2, 2), (1, 1, 2, 2), "VALID")
    y = y.reshape(y.shape[0], 16 * 5 * 5)
    y = jnp.maximum(y @ params["fc1_w"] + params["fc1_b"], 0.0)
    y = jnp.maximum(y @ params["fc2_w"] + params["fc2_b"], 0.0)
    return y @ params["fc3_w"] + params["fc3_b"]


if __name__ == "__main__":
    key = jax.random.PRNGKey(0)
    pkey, xkey = jax.random.split(key)
    params = init_params(pkey)

    # Small run (batch=2 -> block of 2 images, single grid step).
    x = jax.random.normal(xkey, (2, 3, 32, 32), dtype=jnp.float32)
    out = jax.block_until_ready(jax.jit(net_forward)(params, x))
    assert out.shape == (2, 10) and out.dtype == jnp.float32
    ref = net_reference(params, x)
    assert bool(jnp.allclose(out, ref, rtol=5e-2, atol=5e-2)), (
        "mismatch vs reference (batch=2), max abs diff = "
        f"{float(jnp.max(jnp.abs(out - ref)))}")

    # Batched path: block_batch=8, batch padded 10->16, 2 "parallel" grid steps.
    x2 = jax.random.normal(jax.random.PRNGKey(1), (10, 3, 32, 32), dtype=jnp.float32)
    out2 = jax.block_until_ready(jax.jit(net_forward)(params, x2))
    ref2 = net_reference(params, x2)
    assert out2.shape == (10, 10)
    assert bool(jnp.allclose(out2, ref2, rtol=5e-2, atol=5e-2)), (
        "mismatch vs reference (batch=10), max abs diff = "
        f"{float(jnp.max(jnp.abs(out2 - ref2)))}")

    print("KERNEL_OK")
</pallas_src>

<mosaic_0001>
module attributes {stable_mosaic.version = 11 : i64} {
  func.func @_net_kernel(%arg0: i32, %arg1: memref<64x96xf32, #tpu.memory_space<vmem>>, %arg2: memref<5x56x64xf32, #tpu.memory_space<vmem>>, %arg3: memref<5x96x168xf32, #tpu.memory_space<vmem>>, %arg4: memref<1x84xf32, #tpu.memory_space<vmem>>, %arg5: memref<2x28x56xf32, #tpu.memory_space<vmem>>, %arg6: memref<2x168x84xf32, #tpu.memory_space<vmem>>, %arg7: memref<5x20x28xf32, #tpu.memory_space<vmem>>, %arg8: memref<5x84x160xf32, #tpu.memory_space<vmem>>, %arg9: memref<1x80xf32, #tpu.memory_space<vmem>>, %arg10: memref<2x10x20xf32, #tpu.memory_space<vmem>>, %arg11: memref<2x160x80xf32, #tpu.memory_space<vmem>>, %arg12: memref<5x2x10xf32, #tpu.memory_space<vmem>>, %arg13: memref<400x120xf32, #tpu.memory_space<vmem>>, %arg14: memref<1x120xf32, #tpu.memory_space<vmem>>, %arg15: memref<120x84xf32, #tpu.memory_space<vmem>>, %arg16: memref<1x84xf32, #tpu.memory_space<vmem>>, %arg17: memref<84x10xf32, #tpu.memory_space<vmem>>, %arg18: memref<1x10xf32, #tpu.memory_space<vmem>>, %arg19: memref<2x10xf32, #tpu.memory_space<vmem>>) attributes {dimension_semantics = [#tpu.dimension_semantics<parallel>], iteration_bounds = array<i64: 1>, scalar_prefetch = 0 : i64, scratch_operands = 0 : i64, tpu.core_type = #tpu.core_type<tc>, window_params = [{transform_indices = @transform_0, window_bounds = array<i64: 64, 96>}, {pipeline_mode = #tpu.pipeline_mode<synchronous>, transform_indices = @transform_1, window_bounds = array<i64: 5, 56, 64>}, {pipeline_mode = #tpu.pipeline_mode<synchronous>, transform_indices = @transform_2, window_bounds = array<i64: 5, 96, 168>}, {pipeline_mode = #tpu.pipeline_mode<synchronous>, transform_indices = @transform_3, window_bounds = array<i64: 1, 84>}, {pipeline_mode = #tpu.pipeline_mode<synchronous>, transform_indices = @transform_4, window_bounds = array<i64: 2, 28, 56>}, {pipeline_mode = #tpu.pipeline_mode<synchronous>, transform_indices = @transform_5, window_bounds = array<i64: 2, 168, 84>}, {pipeline_mode = #tpu.pipeline_mode<synchronous>, transform_indices = @transform_6, window_bounds = array<i64: 5, 20, 28>}, {pipeline_mode = #tpu.pipeline_mode<synchronous>, transform_indices = @transform_7, window_bounds = array<i64: 5, 84, 160>}, {pipeline_mode = #tpu.pipeline_mode<synchronous>, transform_indices = @transform_8, window_bounds = array<i64: 1, 80>}, {pipeline_mode = #tpu.pipeline_mode<synchronous>, transform_indices = @transform_9, window_bounds = array<i64: 2, 10, 20>}, {pipeline_mode = #tpu.pipeline_mode<synchronous>, transform_indices = @transform_10, window_bounds = array<i64: 2, 160, 80>}, {pipeline_mode = #tpu.pipeline_mode<synchronous>, transform_indices = @transform_11, window_bounds = array<i64: 5, 2, 10>}, {pipeline_mode = #tpu.pipeline_mode<synchronous>, transform_indices = @transform_12, window_bounds = array<i64: 400, 120>}, {pipeline_mode = #tpu.pipeline_mode<synchronous>, transform_indices = @transform_13, window_bounds = array<i64: 1, 120>}, {pipeline_mode = #tpu.pipeline_mode<synchronous>, transform_indices = @transform_14, window_bounds = array<i64: 120, 84>}, {pipeline_mode = #tpu.pipeline_mode<synchronous>, transform_indices = @transform_15, window_bounds = array<i64: 1, 84>}, {pipeline_mode = #tpu.pipeline_mode<synchronous>, transform_indices = @transform_16, window_bounds = array<i64: 84, 10>}, {pipeline_mode = #tpu.pipeline_mode<synchronous>, transform_indices = @transform_17, window_bounds = array<i64: 1, 10>}, {transform_indices = @transform_18, window_bounds = array<i64: 2, 10>}]} {
    %c0 = arith.constant 0 : index
    %c0_0 = arith.constant 0 : index
    %0 = vector.load %arg1[%c0, %c0_0] : memref<64x96xf32, #tpu.memory_space<vmem>>, vector<64x96xf32>
    %c0_1 = arith.constant 0 : index
    %c0_2 = arith.constant 0 : index
    %c0_3 = arith.constant 0 : index
    %1 = vector.load %arg2[%c0_1, %c0_2, %c0_3] : memref<5x56x64xf32, #tpu.memory_space<vmem>>, vector<1x56x64xf32>
    %2 = vector.shape_cast %1 : vector<1x56x64xf32> to vector<56x64xf32>
    %cst = arith.constant dense<0.000000e+00> : vector<56x96xf32>
    %3 = tpu.matmul %2, %0, %cst {dimension_numbers = #tpu.dot_dimension_numbers<[1], [0], [0], [1], [0, 0, 1, 1], [], []>} : vector<56x64xf32>, vector<64x96xf32>, vector<56x96xf32> -> vector<56x96xf32>
    %c0_4 = arith.constant 0 : index
    %c0_5 = arith.constant 0 : index
    %c0_6 = arith.constant 0 : index
    %4 = vector.load %arg3[%c0_4, %c0_5, %c0_6] : memref<5x96x168xf32, #tpu.memory_space<vmem>>, vector<1x96x168xf32>
    %5 = vector.shape_cast %4 : vector<1x96x168xf32> to vector<96x168xf32>
    %cst_7 = arith.constant dense<0.000000e+00> : vector<56x168xf32>
    %6 = tpu.matmul %3, %5, %cst_7 {dimension_numbers = #tpu.dot_dimension_numbers<[1], [0], [0], [1], [0, 0, 1, 1], [], []>} : vector<56x96xf32>, vector<96x168xf32>, vector<56x168xf32> -> vector<56x168xf32>
    %c1 = arith.constant 1 : index
    %c0_8 = arith.constant 0 : index
    %c0_9 = arith.constant 0 : index
    %7 = vector.load %arg2[%c1, %c0_8, %c0_9] : memref<5x56x64xf32, #tpu.memory_space<vmem>>, vector<1x56x64xf32>
    %8 = vector.shape_cast %7 : vector<1x56x64xf32> to vector<56x64xf32>
    %cst_10 = arith.constant dense<0.000000e+00> : vector<56x96xf32>
    %9 = tpu.matmul %8, %0, %cst_10 {dimension_numbers = #tpu.dot_dimension_numbers<[1], [0], [0], [1], [0, 0, 1, 1], [], []>} : vector<56x64xf32>, vector<64x96xf32>, vector<56x96xf32> -> vector<56x96xf32>
    %c1_11 = arith.constant 1 : index
    %c0_12 = arith.constant 0 : index
    %c0_13 = arith.constant 0 : index
    %10 = vector.load %arg3[%c1_11, %c0_12, %c0_13] : memref<5x96x168xf32, #tpu.memory_space<vmem>>, vector<1x96x168xf32>
    %11 = vector.shape_cast %10 : vector<1x96x168xf32> to vector<96x168xf32>
    %cst_14 = arith.constant dense<0.000000e+00> : vector<56x168xf32>
    %12 = tpu.matmul %9, %11, %cst_14 {dimension_numbers = #tpu.dot_dimension_numbers<[1], [0], [0], [1], [0, 0, 1, 1], [], []>} : vector<56x96xf32>, vector<96x168xf32>, vector<56x168xf32> -> vector<56x168xf32>
    %13 = arith.addf %6, %12 : vector<56x168xf32>
    %c2 = arith.constant 2 : index
    %c0_15 = arith.constant 0 : index
    %c0_16 = arith.constant 0 : index
    %14 = vector.load %arg2[%c2, %c0_15, %c0_16] : memref<5x56x64xf32, #tpu.memory_space<vmem>>, vector<1x56x64xf32>
    %15 = vector.shape_cast %14 : vector<1x56x64xf32> to vector<56x64xf32>
    %cst_17 = arith.constant dense<0.000000e+00> : vector<56x96xf32>
    %16 = tpu.matmul %15, %0, %cst_17 {dimension_numbers = #tpu.dot_dimension_numbers<[1], [0], [0], [1], [0, 0, 1, 1], [], []>} : vector<56x64xf32>, vector<64x96xf32>, vector<56x96xf32> -> vector<56x96xf32>
    %c2_18 = arith.constant 2 : index
    %c0_19 = arith.constant 0 : index
    %c0_20 = arith.constant 0 : index
    %17 = vector.load %arg3[%c2_18, %c0_19, %c0_20] : memref<5x96x168xf32, #tpu.memory_space<vmem>>, vector<1x96x168xf32>
    %18 = vector.shape_cast %17 : vector<1x96x168xf32> to vector<96x168xf32>
    %cst_21 = arith.constant dense<0.000000e+00> : vector<56x168xf32>
    %19 = tpu.matmul %16, %18, %cst_21 {dimension_numbers = #tpu.dot_dimension_numbers<[1], [0], [0], [1], [0, 0, 1, 1], [], []>} : vector<56x96xf32>, vector<96x168xf32>, vector<56x168xf32> -> vector<56x168xf32>
    %20 = arith.addf %13, %19 : vector<56x168xf32>
    %c3 = arith.constant 3 : index
    %c0_22 = arith.constant 0 : index
    %c0_23 = arith.constant 0 : index
    %21 = vector.load %arg2[%c3, %c0_22, %c0_23] : memref<5x56x64xf32, #tpu.memory_space<vmem>>, vector<1x56x64xf32>
    %22 = vector.shape_cast %21 : vector<1x56x64xf32> to vector<56x64xf32>
    %cst_24 = arith.constant dense<0.000000e+00> : vector<56x96xf32>
    %23 = tpu.matmul %22, %0, %cst_24 {dimension_numbers = #tpu.dot_dimension_numbers<[1], [0], [0], [1], [0, 0, 1, 1], [], []>} : vector<56x64xf32>, vector<64x96xf32>, vector<56x96xf32> -> vector<56x96xf32>
    %c3_25 = arith.constant 3 : index
    %c0_26 = arith.constant 0 : index
    %c0_27 = arith.constant 0 : index
    %24 = vector.load %arg3[%c3_25, %c0_26, %c0_27] : memref<5x96x168xf32, #tpu.memory_space<vmem>>, vector<1x96x168xf32>
    %25 = vector.shape_cast %24 : vector<1x96x168xf32> to vector<96x168xf32>
    %cst_28 = arith.constant dense<0.000000e+00> : vector<56x168xf32>
    %26 = tpu.matmul %23, %25, %cst_28 {dimension_numbers = #tpu.dot_dimension_numbers<[1], [0], [0], [1], [0, 0, 1, 1], [], []>} : vector<56x96xf32>, vector<96x168xf32>, vector<56x168xf32> -> vector<56x168xf32>
    %27 = arith.addf %20, %26 : vector<56x168xf32>
    %c4 = arith.constant 4 : index
    %c0_29 = arith.constant 0 : index
    %c0_30 = arith.constant 0 : index
    %28 = vector.load %arg2[%c4, %c0_29, %c0_30] : memref<5x56x64xf32, #tpu.memory_space<vmem>>, vector<1x56x64xf32>
    %29 = vector.shape_cast %28 : vector<1x56x64xf32> to vector<56x64xf32>
    %cst_31 = arith.constant dense<0.000000e+00> : vector<56x96xf32>
    %30 = tpu.matmul %29, %0, %cst_31 {dimension_numbers = #tpu.dot_dimension_numbers<[1], [0], [0], [1], [0, 0, 1, 1], [], []>} : vector<56x64xf32>, vector<64x96xf32>, vector<56x96xf32> -> vector<56x96xf32>
    %c4_32 = arith.constant 4 : index
    %c0_33 = arith.constant 0 : index
    %c0_34 = arith.constant 0 : index
    %31 = vector.load %arg3[%c4_32, %c0_33, %c0_34] : memref<5x96x168xf32, #tpu.memory_space<vmem>>, vector<1x96x168xf32>
    %32 = vector.shape_cast %31 : vector<1x96x168xf32> to vector<96x168xf32>
    %cst_35 = arith.constant dense<0.000000e+00> : vector<56x168xf32>
    %33 = tpu.matmul %30, %32, %cst_35 {dimension_numbers = #tpu.dot_dimension_numbers<[1], [0], [0], [1], [0, 0, 1, 1], [], []>} : vector<56x96xf32>, vector<96x168xf32>, vector<56x168xf32> -> vector<56x168xf32>
    %34 = arith.addf %27, %33 : vector<56x168xf32>
    %c0_36 = arith.constant 0 : index
    %c0_37 = arith.constant 0 : index
    %c0_38 = arith.constant 0 : index
    %35 = vector.load %arg5[%c0_36, %c0_37, %c0_38] : memref<2x28x56xf32, #tpu.memory_space<vmem>>, vector<1x28x56xf32>
    %36 = vector.shape_cast %35 : vector<1x28x56xf32> to vector<28x56xf32>
    %cst_39 = arith.constant dense<0.000000e+00> : vector<28x168xf32>
    %37 = tpu.matmul %36, %34, %cst_39 {dimension_numbers = #tpu.dot_dimension_numbers<[1], [0], [0], [1], [0, 0, 1, 1], [], []>} : vector<28x56xf32>, vector<56x168xf32>, vector<28x168xf32> -> vector<28x168xf32>
    %c1_40 = arith.constant 1 : index
    %c0_41 = arith.constant 0 : index
    %c0_42 = arith.constant 0 : index
    %38 = vector.load %arg5[%c1_40, %c0_41, %c0_42] : memref<2x28x56xf32, #tpu.memory_space<vmem>>, vector<1x28x56xf32>
    %39 = vector.shape_cast %38 : vector<1x28x56xf32> to vector<28x56xf32>
    %cst_43 = arith.constant dense<0.000000e+00> : vector<28x168xf32>
    %40 = tpu.matmul %39, %34, %cst_43 {dimension_numbers = #tpu.dot_dimension_numbers<[1], [0], [0], [1], [0, 0, 1, 1], [], []>} : vector<28x56xf32>, vector<56x168xf32>, vector<28x168xf32> -> vector<28x168xf32>
    %41 = arith.maximumf %37, %40 : vector<28x168xf32>
    %c0_44 = arith.constant 0 : index
    %c0_45 = arith.constant 0 : index
    %c0_46 = arith.constant 0 : index
    %42 = vector.load %arg6[%c0_44, %c0_45, %c0_46] : memref<2x168x84xf32, #tpu.memory_space<vmem>>, vector<1x168x84xf32>
    %43 = vector.shape_cast %42 : vector<1x168x84xf32> to vector<168x84xf32>
    %cst_47 = arith.constant dense<0.000000e+00> : vector<28x84xf32>
    %44 = tpu.matmul %41, %43, %cst_47 {dimension_numbers = #tpu.dot_dimension_numbers<[1], [0], [0], [1], [0, 0, 1, 1], [], []>} : vector<28x168xf32>, vector<168x84xf32>, vector<28x84xf32> -> vector<28x84xf32>
    %c1_48 = arith.constant 1 : index
    %c0_49 = arith.constant 0 : index
    %c0_50 = arith.constant 0 : index
    %45 = vector.load %arg6[%c1_48, %c0_49, %c0_50] : memref<2x168x84xf32, #tpu.memory_space<vmem>>, vector<1x168x84xf32>
    %46 = vector.shape_cast %45 : vector<1x168x84xf32> to vector<168x84xf32>
    %cst_51 = arith.constant dense<0.000000e+00> : vector<28x84xf32>
    %47 = tpu.matmul %41, %46, %cst_51 {dimension_numbers = #tpu.dot_dimension_numbers<[1], [0], [0], [1], [0, 0, 1, 1], [], []>} : vector<28x168xf32>, vector<168x84xf32>, vector<28x84xf32> -> vector<28x84xf32>
    %48 = arith.maximumf %44, %47 : vector<28x84xf32>
    %c0_52 = arith.constant 0 : index
    %c0_53 = arith.constant 0 : index
    %49 = vector.load %arg4[%c0_52, %c0_53] : memref<1x84xf32, #tpu.memory_space<vmem>>, vector<1x84xf32>
    %50 = vector.broadcast %49 : vector<1x84xf32> to vector<28x84xf32>
    %51 = arith.addf %48, %50 : vector<28x84xf32>
    %cst_54 = arith.constant 0.000000e+00 : f32
    %52 = vector.broadcast %cst_54 : f32 to vector<28x84xf32>
    %53 = arith.maximumf %51, %52 : vector<28x84xf32>
    %c0_55 = arith.constant 0 : index
    %c0_56 = arith.constant 0 : index
    %c0_57 = arith.constant 0 : index
    %54 = vector.load %arg7[%c0_55, %c0_56, %c0_57] : memref<5x20x28xf32, #tpu.memory_space<vmem>>, vector<1x20x28xf32>
    %55 = vector.shape_cast %54 : vector<1x20x28xf32> to vector<20x28xf32>
    %cst_58 = arith.constant dense<0.000000e+00> : vector<20x84xf32>
    %56 = tpu.matmul %55, %53, %cst_58 {dimension_numbers = #tpu.dot_dimension_numbers<[1], [0], [0], [1], [0, 0, 1, 1], [], []>} : vector<20x28xf32>, vector<28x84xf32>, vector<20x84xf32> -> vector<20x84xf32>
    %c0_59 = arith.constant 0 : index
    %c0_60 = arith.constant 0 : index
    %c0_61 = arith.constant 0 : index
    %57 = vector.load %arg8[%c0_59, %c0_60, %c0_61] : memref<5x84x160xf32, #tpu.memory_space<vmem>>, vector<1x84x160xf32>
    %58 = vector.shape_cast %57 : vector<1x84x160xf32> to vector<84x160xf32>
    %cst_62 = arith.constant dense<0.000000e+00> : vector<20x160xf32>
    %59 = tpu.matmul %56, %58, %cst_62 {dimension_numbers = #tpu.dot_dimension_numbers<[1], [0], [0], [1], [0, 0, 1, 1], [], []>} : vector<20x84xf32>, vector<84x160xf32>, vector<20x160xf32> -> vector<20x160xf32>
    %c1_63 = arith.constant 1 : index
    %c0_64 = arith.constant 0 : index
    %c0_65 = arith.constant 0 : index
    %60 = vector.load %arg7[%c1_63, %c0_64, %c0_65] : memref<5x20x28xf32, #tpu.memory_space<vmem>>, vector<1x20x28xf32>
    %61 = vector.shape_cast %60 : vector<1x20x28xf32> to vector<20x28xf32>
    %cst_66 = arith.constant dense<0.000000e+00> : vector<20x84xf32>
    %62 = tpu.matmul %61, %53, %cst_66 {dimension_numbers = #tpu.dot_dimension_numbers<[1], [0], [0], [1], [0, 0, 1, 1], [], []>} : vector<20x28xf32>, vector<28x84xf32>, vector<20x84xf32> -> vector<20x84xf32>
    %c1_67 = arith.constant 1 : index
    %c0_68 = arith.constant 0 : index
    %c0_69 = arith.constant 0 : index
    %63 = vector.load %arg8[%c1_67, %c0_68, %c0_69] : memref<5x84x160xf32, #tpu.memory_space<vmem>>, vector<1x84x160xf32>
    %64 = vector.shape_cast %63 : vector<1x84x160xf32> to vector<84x160xf32>
    %cst_70 = arith.constant dense<0.000000e+00> : vector<20x160xf32>
    %65 = tpu.matmul %62, %64, %cst_70 {dimension_numbers = #tpu.dot_dimension_numbers<[1], [0], [0], [1], [0, 0, 1, 1], [], []>} : vector<20x84xf32>, vector<84x160xf32>, vector<20x160xf32> -> vector<20x160xf32>
    %66 = arith.addf %59, %65 : vector<20x160xf32>
    %c2_71 = arith.constant 2 : index
    %c0_72 = arith.constant 0 : index
    %c0_73 = arith.constant 0 : index
    %67 = vector.load %arg7[%c2_71, %c0_72, %c0_73] : memref<5x20x28xf32, #tpu.memory_space<vmem>>, vector<1x20x28xf32>
    %68 = vector.shape_cast %67 : vector<1x20x28xf32> to vector<20x28xf32>
    %cst_74 = arith.constant dense<0.000000e+00> : vector<20x84xf32>
    %69 = tpu.matmul %68, %53, %cst_74 {dimension_numbers = #tpu.dot_dimension_numbers<[1], [0], [0], [1], [0, 0, 1, 1], [], []>} : vector<20x28xf32>, vector<28x84xf32>, vector<20x84xf32> -> vector<20x84xf32>
    %c2_75 = arith.constant 2 : index
    %c0_76 = arith.constant 0 : index
    %c0_77 = arith.constant 0 : index
    %70 = vector.load %arg8[%c2_75, %c0_76, %c0_77] : memref<5x84x160xf32, #tpu.memory_space<vmem>>, vector<1x84x160xf32>
    %71 = vector.shape_cast %70 : vector<1x84x160xf32> to vector<84x160xf32>
    %cst_78 = arith.constant dense<0.000000e+00> : vector<20x160xf32>
    %72 = tpu.matmul %69, %71, %cst_78 {dimension_numbers = #tpu.dot_dimension_numbers<[1], [0], [0], [1], [0, 0, 1, 1], [], []>} : vector<20x84xf32>, vector<84x160xf32>, vector<20x160xf32> -> vector<20x160xf32>
    %73 = arith.addf %66, %72 : vector<20x160xf32>
    %c3_79 = arith.constant 3 : index
    %c0_80 = arith.constant 0 : index
    %c0_81 = arith.constant 0 : index
    %74 = vector.load %arg7[%c3_79, %c0_80, %c0_81] : memref<5x20x28xf32, #tpu.memory_space<vmem>>, vector<1x20x28xf32>
    %75 = vector.shape_cast %74 : vector<1x20x28xf32> to vector<20x28xf32>
    %cst_82 = arith.constant dense<0.000000e+00> : vector<20x84xf32>
    %76 = tpu.matmul %75, %53, %cst_82 {dimension_numbers = #tpu.dot_dimension_numbers<[1], [0], [0], [1], [0, 0, 1, 1], [], []>} : vector<20x28xf32>, vector<28x84xf32>, vector<20x84xf32> -> vector<20x84xf32>
    %c3_83 = arith.constant 3 : index
    %c0_84 = arith.constant 0 : index
    %c0_85 = arith.constant 0 : index
    %77 = vector.load %arg8[%c3_83, %c0_84, %c0_85] : memref<5x84x160xf32, #tpu.memory_space<vmem>>, vector<1x84x160xf32>
    %78 = vector.shape_cast %77 : vector<1x84x160xf32> to vector<84x160xf32>
    %cst_86 = arith.constant dense<0.000000e+00> : vector<20x160xf32>
    %79 = tpu.matmul %76, %78, %cst_86 {dimension_numbers = #tpu.dot_dimension_numbers<[1], [0], [0], [1], [0, 0, 1, 1], [], []>} : vector<20x84xf32>, vector<84x160xf32>, vector<20x160xf32> -> vector<20x160xf32>
    %80 = arith.addf %73, %79 : vector<20x160xf32>
    %c4_87 = arith.constant 4 : index
    %c0_88 = arith.constant 0 : index
    %c0_89 = arith.constant 0 : index
    %81 = vector.load %arg7[%c4_87, %c0_88, %c0_89] : memref<5x20x28xf32, #tpu.memory_space<vmem>>, vector<1x20x28xf32>
    %82 = vector.shape_cast %81 : vector<1x20x28xf32> to vector<20x28xf32>
    %cst_90 = arith.constant dense<0.000000e+00> : vector<20x84xf32>
    %83 = tpu.matmul %82, %53, %cst_90 {dimension_numbers = #tpu.dot_dimension_numbers<[1], [0], [0], [1], [0, 0, 1, 1], [], []>} : vector<20x28xf32>, vector<28x84xf32>, vector<20x84xf32> -> vector<20x84xf32>
    %c4_91 = arith.constant 4 : index
    %c0_92 = arith.constant 0 : index
    %c0_93 = arith.constant 0 : index
    %84 = vector.load %arg8[%c4_91, %c0_92, %c0_93] : memref<5x84x160xf32, #tpu.memory_space<vmem>>, vector<1x84x160xf32>
    %85 = vector.shape_cast %84 : vector<1x84x160xf32> to vector<84x160xf32>
    %cst_94 = arith.constant dense<0.000000e+00> : vector<20x160xf32>
    %86 = tpu.matmul %83, %85, %cst_94 {dimension_numbers = #tpu.dot_dimension_numbers<[1], [0], [0], [1], [0, 0, 1, 1], [], []>} : vector<20x84xf32>, vector<84x160xf32>, vector<20x160xf32> -> vector<20x160xf32>
    %87 = arith.addf %80, %86 : vector<20x160xf32>
    %c0_95 = arith.constant 0 : index
    %c0_96 = arith.constant 0 : index
    %c0_97 = arith.constant 0 : index
    %88 = vector.load %arg10[%c0_95, %c0_96, %c0_97] : memref<2x10x20xf32, #tpu.memory_space<vmem>>, vector<1x10x20xf32>
    %89 = vector.shape_cast %88 : vector<1x10x20xf32> to vector<10x20xf32>
    %cst_98 = arith.constant dense<0.000000e+00> : vector<10x160xf32>
    %90 = tpu.matmul %89, %87, %cst_98 {dimension_numbers = #tpu.dot_dimension_numbers<[1], [0], [0], [1], [0, 0, 1, 1], [], []>} : vector<10x20xf32>, vector<20x160xf32>, vector<10x160xf32> -> vector<10x160xf32>
    %c1_99 = arith.constant 1 : index
    %c0_100 = arith.constant 0 : index
    %c0_101 = arith.constant 0 : index
    %91 = vector.load %arg10[%c1_99, %c0_100, %c0_101] : memref<2x10x20xf32, #tpu.memory_space<vmem>>, vector<1x10x20xf32>
    %92 = vector.shape_cast %91 : vector<1x10x20xf32> to vector<10x20xf32>
    %cst_102 = arith.constant dense<0.000000e+00> : vector<10x160xf32>
    %93 = tpu.matmul %92, %87, %cst_102 {dimension_numbers = #tpu.dot_dimension_numbers<[1], [0], [0], [1], [0, 0, 1, 1], [], []>} : vector<10x20xf32>, vector<20x160xf32>, vector<10x160xf32> -> vector<10x160xf32>
    %94 = arith.maximumf %90, %93 : vector<10x160xf32>
    %c0_103 = arith.constant 0 : index
    %c0_104 = arith.constant 0 : index
    %c0_105 = arith.constant 0 : index
    %95 = vector.load %arg11[%c0_103, %c0_104, %c0_105] : memref<2x160x80xf32, #tpu.memory_space<vmem>>, vector<1x160x80xf32>
    %96 = vector.shape_cast %95 : vector<1x160x80xf32> to vector<160x80xf32>
    %cst_106 = arith.constant dense<0.000000e+00> : vector<10x80xf32>
    %97 = tpu.matmul %94, %96, %cst_106 {dimension_numbers = #tpu.dot_dimension_numbers<[1], [0], [0], [1], [0, 0, 1, 1], [], []>} : vector<10x160xf32>, vector<160x80xf32>, vector<10x80xf32> -> vector<10x80xf32>
    %c1_107 = arith.constant 1 : index
    %c0_108 = arith.constant 0 : index
    %c0_109 = arith.constant 0 : index
    %98 = vector.load %arg11[%c1_107, %c0_108, %c0_109] : memref<2x160x80xf32, #tpu.memory_space<vmem>>, vector<1x160x80xf32>
    %99 = vector.shape_cast %98 : vector<1x160x80xf32> to vector<160x80xf32>
    %cst_110 = arith.constant dense<0.000000e+00> : vector<10x80xf32>
    %100 = tpu.matmul %94, %99, %cst_110 {dimension_numbers = #tpu.dot_dimension_numbers<[1], [0], [0], [1], [0, 0, 1, 1], [], []>} : vector<10x160xf32>, vector<160x80xf32>, vector<10x80xf32> -> vector<10x80xf32>
    %101 = arith.maximumf %97, %100 : vector<10x80xf32>
    %c0_111 = arith.constant 0 : index
    %c0_112 = arith.constant 0 : index
    %102 = vector.load %arg9[%c0_111, %c0_112] : memref<1x80xf32, #tpu.memory_space<vmem>>, vector<1x80xf32>
    %103 = vector.broadcast %102 : vector<1x80xf32> to vector<10x80xf32>
    %104 = arith.addf %101, %103 : vector<10x80xf32>
    %cst_113 = arith.constant 0.000000e+00 : f32
    %105 = vector.broadcast %cst_113 : f32 to vector<10x80xf32>
    %106 = arith.maximumf %104, %105 : vector<10x80xf32>
    %c0_114 = arith.constant 0 : index
    %c0_115 = arith.constant 0 : index
    %c0_116 = arith.constant 0 : index
    %107 = vector.load %arg12[%c0_114, %c0_115, %c0_116] : memref<5x2x10xf32, #tpu.memory_space<vmem>>, vector<1x2x10xf32>
    %108 = vector.shape_cast %107 : vector<1x2x10xf32> to vector<2x10xf32>
    %cst_117 = arith.constant dense<0.000000e+00> : vector<2x80xf32>
    %109 = tpu.matmul %108, %106, %cst_117 {dimension_numbers = #tpu.dot_dimension_numbers<[1], [0], [0], [1], [0, 0, 1, 1], [], []>} : vector<2x10xf32>, vector<10x80xf32>, vector<2x80xf32> -> vector<2x80xf32>
    %c0_118 = arith.constant 0 : index
    %c0_119 = arith.constant 0 : index
    %110 = vector.load %arg13[%c0_118, %c0_119] : memref<400x120xf32, #tpu.memory_space<vmem>>, vector<80x120xf32>
    %cst_120 = arith.constant dense<0.000000e+00> : vector<2x120xf32>
    %111 = tpu.matmul %109, %110, %cst_120 {dimension_numbers = #tpu.dot_dimension_numbers<[1], [0], [0], [1], [0, 0, 1, 1], [], []>} : vector<2x80xf32>, vector<80x120xf32>, vector<2x120xf32> -> vector<2x120xf32>
    %c1_121 = arith.constant 1 : index
    %c0_122 = arith.constant 0 : index
    %c0_123 = arith.constant 0 : index
    %112 = vector.load %arg12[%c1_121, %c0_122, %c0_123] : memref<5x2x10xf32, #tpu.memory_space<vmem>>, vector<1x2x10xf32>
    %113 = vector.shape_cast %112 : vector<1x2x10xf32> to vector<2x10xf32>
    %cst_124 = arith.constant dense<0.000000e+00> : vector<2x80xf32>
    %114 = tpu.matmul %113, %106, %cst_124 {dimension_numbers = #tpu.dot_dimension_numbers<[1], [0], [0], [1], [0, 0, 1, 1], [], []>} : vector<2x10xf32>, vector<10x80xf32>, vector<2x80xf32> -> vector<2x80xf32>
    %c80 = arith.constant 80 : index
    %c0_125 = arith.constant 0 : index
    %115 = vector.load %arg13[%c80, %c0_125] : memref<400x120xf32, #tpu.memory_space<vmem>>, vector<80x120xf32>
    %cst_126 = arith.constant dense<0.000000e+00> : vector<2x120xf32>
    %116 = tpu.matmul %114, %115, %cst_126 {dimension_numbers = #tpu.dot_dimension_numbers<[1], [0], [0], [1], [0, 0, 1, 1], [], []>} : vector<2x80xf32>, vector<80x120xf32>, vector<2x120xf32> -> vector<2x120xf32>
    %117 = arith.addf %111, %116 : vector<2x120xf32>
    %c2_127 = arith.constant 2 : index
    %c0_128 = arith.constant 0 : index
    %c0_129 = arith.constant 0 : index
    %118 = vector.load %arg12[%c2_127, %c0_128, %c0_129] : memref<5x2x10xf32, #tpu.memory_space<vmem>>, vector<1x2x10xf32>
    %119 = vector.shape_cast %118 : vector<1x2x10xf32> to vector<2x10xf32>
    %cst_130 = arith.constant dense<0.000000e+00> : vector<2x80xf32>
    %120 = tpu.matmul %119, %106, %cst_130 {dimension_numbers = #tpu.dot_dimension_numbers<[1], [0], [0], [1], [0, 0, 1, 1], [], []>} : vector<2x10xf32>, vector<10x80xf32>, vector<2x80xf32> -> vector<2x80xf32>
    %c160 = arith.constant 160 : index
    %c0_131 = arith.constant 0 : index
    %121 = vector.load %arg13[%c160, %c0_131] : memref<400x120xf32, #tpu.memory_space<vmem>>, vector<80x120xf32>
    %cst_132 = arith.constant dense<0.000000e+00> : vector<2x120xf32>
    %122 = tpu.matmul %120, %121, %cst_132 {dimension_numbers = #tpu.dot_dimension_numbers<[1], [0], [0], [1], [0, 0, 1, 1], [], []>} : vector<2x80xf32>, vector<80x120xf32>, vector<2x120xf32> -> vector<2x120xf32>
    %123 = arith.addf %117, %122 : vector<2x120xf32>
    %c3_133 = arith.constant 3 : index
    %c0_134 = arith.constant 0 : index
    %c0_135 = arith.constant 0 : index
    %124 = vector.load %arg12[%c3_133, %c0_134, %c0_135] : memref<5x2x10xf32, #tpu.memory_space<vmem>>, vector<1x2x10xf32>
    %125 = vector.shape_cast %124 : vector<1x2x10xf32> to vector<2x10xf32>
    %cst_136 = arith.constant dense<0.000000e+00> : vector<2x80xf32>
    %126 = tpu.matmul %125, %106, %cst_136 {dimension_numbers = #tpu.dot_dimension_numbers<[1], [0], [0], [1], [0, 0, 1, 1], [], []>} : vector<2x10xf32>, vector<10x80xf32>, vector<2x80xf32> -> vector<2x80xf32>
    %c240 = arith.constant 240 : index
    %c0_137 = arith.constant 0 : index
    %127 = vector.load %arg13[%c240, %c0_137] : memref<400x120xf32, #tpu.memory_space<vmem>>, vector<80x120xf32>
    %cst_138 = arith.constant dense<0.000000e+00> : vector<2x120xf32>
    %128 = tpu.matmul %126, %127, %cst_138 {dimension_numbers = #tpu.dot_dimension_numbers<[1], [0], [0], [1], [0, 0, 1, 1], [], []>} : vector<2x80xf32>, vector<80x120xf32>, vector<2x120xf32> -> vector<2x120xf32>
    %129 = arith.addf %123, %128 : vector<2x120xf32>
    %c4_139 = arith.constant 4 : index
    %c0_140 = arith.constant 0 : index
    %c0_141 = arith.constant 0 : index
    %130 = vector.load %arg12[%c4_139, %c0_140, %c0_141] : memref<5x2x10xf32, #tpu.memory_space<vmem>>, vector<1x2x10xf32>
    %131 = vector.shape_cast %130 : vector<1x2x10xf32> to vector<2x10xf32>
    %cst_142 = arith.constant dense<0.000000e+00> : vector<2x80xf32>
    %132 = tpu.matmul %131, %106, %cst_142 {dimension_numbers = #tpu.dot_dimension_numbers<[1], [0], [0], [1], [0, 0, 1, 1], [], []>} : vector<2x10xf32>, vector<10x80xf32>, vector<2x80xf32> -> vector<2x80xf32>
    %c320 = arith.constant 320 : index
    %c0_143 = arith.constant 0 : index
    %133 = vector.load %arg13[%c320, %c0_143] : memref<400x120xf32, #tpu.memory_space<vmem>>, vector<80x120xf32>
    %cst_144 = arith.constant dense<0.000000e+00> : vector<2x120xf32>
    %134 = tpu.matmul %132, %133, %cst_144 {dimension_numbers = #tpu.dot_dimension_numbers<[1], [0], [0], [1], [0, 0, 1, 1], [], []>} : vector<2x80xf32>, vector<80x120xf32>, vector<2x120xf32> -> vector<2x120xf32>
    %135 = arith.addf %129, %134 : vector<2x120xf32>
    %c0_145 = arith.constant 0 : index
    %c0_146 = arith.constant 0 : index
    %136 = vector.load %arg14[%c0_145, %c0_146] : memref<1x120xf32, #tpu.memory_space<vmem>>, vector<1x120xf32>
    %137 = vector.broadcast %136 : vector<1x120xf32> to vector<2x120xf32>
    %138 = arith.addf %135, %137 : vector<2x120xf32>
    %cst_147 = arith.constant 0.000000e+00 : f32
    %139 = vector.broadcast %cst_147 : f32 to vector<2x120xf32>
    %140 = arith.maximumf %138, %139 : vector<2x120xf32>
    %c0_148 = arith.constant 0 : index
    %c0_149 = arith.constant 0 : index
    %141 = vector.load %arg15[%c0_148, %c0_149] : memref<120x84xf32, #tpu.memory_space<vmem>>, vector<120x84xf32>
    %cst_150 = arith.constant dense<0.000000e+00> : vector<2x84xf32>
    %142 = tpu.matmul %140, %141, %cst_150 {dimension_numbers = #tpu.dot_dimension_numbers<[1], [0], [0], [1], [0, 0, 1, 1], [], []>} : vector<2x120xf32>, vector<120x84xf32>, vector<2x84xf32> -> vector<2x84xf32>
    %c0_151 = arith.constant 0 : index
    %c0_152 = arith.constant 0 : index
    %143 = vector.load %arg16[%c0_151, %c0_152] : memref<1x84xf32, #tpu.memory_space<vmem>>, vector<1x84xf32>
    %144 = vector.broadcast %143 : vector<1x84xf32> to vector<2x84xf32>
    %145 = arith.addf %142, %144 : vector<2x84xf32>
    %cst_153 = arith.constant 0.000000e+00 : f32
    %146 = vector.broadcast %cst_153 : f32 to vector<2x84xf32>
    %147 = arith.maximumf %145, %146 : vector<2x84xf32>
    %c0_154 = arith.constant 0 : index
    %c0_155 = arith.constant 0 : index
    %148 = vector.load %arg17[%c0_154, %c0_155] : memref<84x10xf32, #tpu.memory_space<vmem>>, vector<84x10xf32>
    %cst_156 = arith.constant dense<0.000000e+00> : vector<2x10xf32>
    %149 = tpu.matmul %147, %148, %cst_156 {dimension_numbers = #tpu.dot_dimension_numbers<[1], [0], [0], [1], [0, 0, 1, 1], [], []>} : vector<2x84xf32>, vector<84x10xf32>, vector<2x10xf32> -> vector<2x10xf32>
    %c0_157 = arith.constant 0 : index
    %c0_158 = arith.constant 0 : index
    %150 = vector.load %arg18[%c0_157, %c0_158] : memref<1x10xf32, #tpu.memory_space<vmem>>, vector<1x10xf32>
    %151 = vector.broadcast %150 : vector<1x10xf32> to vector<2x10xf32>
    %152 = arith.addf %149, %151 : vector<2x10xf32>
    %c0_159 = arith.constant 0 : index
    %c0_160 = arith.constant 0 : index
    %153 = vector.load %arg19[%c0_159, %c0_160] : memref<2x10xf32, #tpu.memory_space<vmem>>, vector<2x10xf32>
    tpu.vector_store %arg19[%c0_159, %c0_160], %152 {strides = array<i32>} : memref<2x10xf32, #tpu.memory_space<vmem>>, vector<2x10xf32>,
    return
  }
  func.func @transform_0(%arg0: i32) -> (i32, i32) {
    %c0_i32 = arith.constant 0 : i32
    %c0_i32_0 = arith.constant 0 : i32
    return %arg0, %c0_i32 : i32, i32
  }
  func.func @transform_1(%arg0: i32) -> (i32, i32, i32) {
    %c0_i32 = arith.constant 0 : i32
    %c0_i32_0 = arith.constant 0 : i32
    %c0_i32_1 = arith.constant 0 : i32
    %c0_i32_2 = arith.constant 0 : i32
    return %c0_i32, %c0_i32_0, %c0_i32_1 : i32, i32, i32
  }
  func.func @transform_2(%arg0: i32) -> (i32, i32, i32) {
    %c0_i32 = arith.constant 0 : i32
    %c0_i32_0 = arith.constant 0 : i32
    %c0_i32_1 = arith.constant 0 : i32
    %c0_i32_2 = arith.constant 0 : i32
    return %c0_i32, %c0_i32_0, %c0_i32_1 : i32, i32, i32
  }
  func.func @transform_3(%arg0: i32) -> (i32, i32) {
    %c0_i32 = arith.constant 0 : i32
    %c0_i32_0 = arith.constant 0 : i32
    %c0_i32_1 = arith.constant 0 : i32
    return %c0_i32, %c0_i32_0 : i32, i32
  }
  func.func @transform_4(%arg0: i32) -> (i32, i32, i32) {
    %c0_i32 = arith.constant 0 : i32
    %c0_i32_0 = arith.constant 0 : i32
    %c0_i32_1 = arith.constant 0 : i32
    %c0_i32_2 = arith.constant 0 : i32
    return %c0_i32, %c0_i32_0, %c0_i32_1 : i32, i32, i32
  }
  func.func @transform_5(%arg0: i32) -> (i32, i32, i32) {
    %c0_i32 = arith.constant 0 : i32
    %c0_i32_0 = arith.constant 0 : i32
    %c0_i32_1 = arith.constant 0 : i32
    %c0_i32_2 = arith.constant 0 : i32
    return %c0_i32, %c0_i32_0, %c0_i32_1 : i32, i32, i32
  }
  func.func @transform_6(%arg0: i32) -> (i32, i32, i32) {
    %c0_i32 = arith.constant 0 : i32
    %c0_i32_0 = arith.constant 0 : i32
    %c0_i32_1 = arith.constant 0 : i32
    %c0_i32_2 = arith.constant 0 : i32
    return %c0_i32, %c0_i32_0, %c0_i32_1 : i32, i32, i32
  }
  func.func @transform_7(%arg0: i32) -> (i32, i32, i32) {
    %c0_i32 = arith.constant 0 : i32
    %c0_i32_0 = arith.constant 0 : i32
    %c0_i32_1 = arith.constant 0 : i32
    %c0_i32_2 = arith.constant 0 : i32
    return %c0_i32, %c0_i32_0, %c0_i32_1 : i32, i32, i32
  }
  func.func @transform_8(%arg0: i32) -> (i32, i32) {
    %c0_i32 = arith.constant 0 : i32
    %c0_i32_0 = arith.constant 0 : i32
    %c0_i32_1 = arith.constant 0 : i32
    return %c0_i32, %c0_i32_0 : i32, i32
  }
  func.func @transform_9(%arg0: i32) -> (i32, i32, i32) {
    %c0_i32 = arith.constant 0 : i32
    %c0_i32_0 = arith.constant 0 : i32
    %c0_i32_1 = arith.constant 0 : i32
    %c0_i32_2 = arith.constant 0 : i32
    return %c0_i32, %c0_i32_0, %c0_i32_1 : i32, i32, i32
  }
  func.func @transform_10(%arg0: i32) -> (i32, i32, i32) {
    %c0_i32 = arith.constant 0 : i32
    %c0_i32_0 = arith.constant 0 : i32
    %c0_i32_1 = arith.constant 0 : i32
    %c0_i32_2 = arith.constant 0 : i32
    return %c0_i32, %c0_i32_0, %c0_i32_1 : i32, i32, i32
  }
  func.func @transform_11(%arg0: i32) -> (i32, i32, i32) {
    %c0_i32 = arith.constant 0 : i32
    %c0_i32_0 = arith.constant 0 : i32
    %c0_i32_1 = arith.constant 0 : i32
    %c0_i32_2 = arith.constant 0 : i32
    return %c0_i32, %c0_i32_0, %c0_i32_1 : i32, i32, i32
  }
  func.func @transform_12(%arg0: i32) -> (i32, i32) {
    %c0_i32 = arith.constant 0 : i32
    %c0_i32_0 = arith.constant 0 : i32
    %c0_i32_1 = arith.constant 0 : i32
    return %c0_i32, %c0_i32_0 : i32, i32
  }
  func.func @transform_13(%arg0: i32) -> (i32, i32) {
    %c0_i32 = arith.constant 0 : i32
    %c0_i32_0 = arith.constant 0 : i32
    %c0_i32_1 = arith.constant 0 : i32
    return %c0_i32, %c0_i32_0 : i32, i32
  }
  func.func @transform_14(%arg0: i32) -> (i32, i32) {
    %c0_i32 = arith.constant 0 : i32
    %c0_i32_0 = arith.constant 0 : i32
    %c0_i32_1 = arith.constant 0 : i32
    return %c0_i32, %c0_i32_0 : i32, i32
  }
  func.func @transform_15(%arg0: i32) -> (i32, i32) {
    %c0_i32 = arith.constant 0 : i32
    %c0_i32_0 = arith.constant 0 : i32
    %c0_i32_1 = arith.constant 0 : i32
    return %c0_i32, %c0_i32_0 : i32, i32
  }
  func.func @transform_16(%arg0: i32) -> (i32, i32) {
    %c0_i32 = arith.constant 0 : i32
    %c0_i32_0 = arith.constant 0 : i32
    %c0_i32_1 = arith.constant 0 : i32
    return %c0_i32, %c0_i32_0 : i32, i32
  }
  func.func @transform_17(%arg0: i32) -> (i32, i32) {
    %c0_i32 = arith.constant 0 : i32
    %c0_i32_0 = arith.constant 0 : i32
    %c0_i32_1 = arith.constant 0 : i32
    return %c0_i32, %c0_i32_0 : i32, i32
  }
  func.func @transform_18(%arg0: i32) -> (i32, i32) {
    %c0_i32 = arith.constant 0 : i32
    %c0_i32_0 = arith.constant 0 : i32
    return %arg0, %c0_i32 : i32, i32
  }
}

</mosaic_0001>

<llo_original>
// kernel: tile.13
$region0: #{tile.13}
  #allocation0 [shape = 's32[1]{0}', space=sflag, size = 0x4, scoped, tag = 'scoped memory for tile.13']
  %s0 = inlined_call_operand.vmem [shape: f32[6], index: 0, kind: input, shape index: {}]
  %s1 = inlined_call_operand.vmem [shape: f32[14,6], index: 1, kind: output, shape index: {}]
  // Predicated region
  $region2: #{tile.13} parent=0 // pred_check
    _
  $region3: #{tile.13} parent=0 // pred_check_branch
    %3 = sbr.rel (0) target = $region5
  $region4: #{tile.13} parent=0 // pred_region
    _
  $region5: #{tile.13} parent=0 // pred_fallthru
    _
  %v4 = vld [vmem:[%s0] ss:$0 sm:$0xff]
  %5 = vst [vmem:[%s1] sm:$0xff] %v4
  %s6 = scalar_lea.vmem %s1, 8
  %7 = vst [vmem:[%s6] sm:$0xff] %v4

// kernel: tile.14
$region0: #{tile.14}
  %s0 = inlined_call_operand.vmem [shape: f32[14,6], index: 0, kind: input, shape index: {}]
  %s1 = inlined_call_operand.vmem [shape: f32[1,84], index: 1, kind: output, shape index: {}]
  $region1: #{tile.14} parent=0
    #allocation0 [shape = 'u8[4096]{0}', space=vmem, size = 0x1000, scoped, tag = 'scoped mem for output reshape']
    %v2 = vld [vmem:[%s0] sm:$0x1]
    %vm3 = vcmask 48128
    %4 = vst.msk [vmem:[#allocation0] sm:$0x1] %vm3, %v2
    %s5 = scalar_lea.vmem %s0, 13
    %v6 = vld [vmem:[%s5] sm:$0x1]
    %7 = vrot.lane.b32.xlu0 %v6, 78
    %v8 = vpop.permute.xlu0 %7
    %vm9 = vcmask 687728
    %10 = vst.msk [vmem:[#allocation0] sm:$0x1] %vm9, %v8
    %s11 = scalar_lea.vmem %s0, 12
    %v12 = vld [vmem:[%s11] sm:$0x1]
    %13 = vrot.lane.b32.xlu0 %v12, 72
    %v14 = vpop.permute.xlu0 %13
    %vm15 = vcmask 638528
    %16 = vst.msk [vmem:[#allocation0] sm:$0x1] %vm15, %v14
    %s17 = scalar_lea.vmem %s0, 11
    %v18 = vld [vmem:[%s17] sm:$0x1]
    %19 = vrot.lane.b32.xlu0 %v18, 66
    %v20 = vpop.permute.xlu0 %19
    %vm21 = vcmask 589328
    %22 = vst.msk [vmem:[#allocation0] sm:$0x1] %vm21, %v20
    %s23 = scalar_lea.vmem %s0, 10
    %v24 = vld [vmem:[%s23] sm:$0x1]
    %25 = vrot.lane.b32.xlu0 %v24, 60
    %v26 = vpop.permute.xlu0 %25
    %vm27 = vcmask 540128
    %28 = vst.msk [vmem:[#allocation0] sm:$0x1] %vm27, %v26
    %s29 = scalar_lea.vmem %s0, 9
    %v30 = vld [vmem:[%s29] sm:$0x1]
    %31 = vrot.lane.b32.xlu0 %v30, 54
    %v32 = vpop.permute.xlu0 %31
    %vm33 = vcmask 490928
    %34 = vst.msk [vmem:[#allocation0] sm:$0x1] %vm33, %v32
    %s35 = scalar_lea.vmem %s0, 8
    %v36 = vld [vmem:[%s35] sm:$0x1]
    %37 = vrot.lane.b32.xlu0 %v36, 48
    %v38 = vpop.permute.xlu0 %37
    %vm39 = vcmask 441728
    %40 = vst.msk [vmem:[#allocation0] sm:$0x1] %vm39, %v38
    %s41 = scalar_lea.vmem %s0, 7
    %v42 = vld [vmem:[%s41] sm:$0x1]
    %43 = vrot.lane.b32.xlu0 %v42, 42
    %v44 = vpop.permute.xlu0 %43
    %vm45 = vcmask 392528
    %46 = vst.msk [vmem:[#allocation0] sm:$0x1] %vm45, %v44
    %s47 = scalar_lea.vmem %s0, 6
    %v48 = vld [vmem:[%s47] sm:$0x1]
    %49 = vrot.lane.b32.xlu0 %v48, 36
    %v50 = vpop.permute.xlu0 %49
    %vm51 = vcmask 343328
    %52 = vst.msk [vmem:[#allocation0] sm:$0x1] %vm51, %v50
    %s53 = scalar_lea.vmem %s0, 5
    %v54 = vld [vmem:[%s53] sm:$0x1]
    %55 = vrot.lane.b32.xlu0 %v54, 30
    %v56 = vpop.permute.xlu0 %55
    %vm57 = vcmask 294128
    %58 = vst.msk [vmem:[#allocation0] sm:$0x1] %vm57, %v56
    %s59 = scalar_lea.vmem %s0, 4
    %v60 = vld [vmem:[%s59] sm:$0x1]
    %61 = vrot.lane.b32.xlu0 %v60, 24
    %v62 = vpop.permute.xlu0 %61
    %vm63 = vcmask 244928
    %64 = vst.msk [vmem:[#allocation0] sm:$0x1] %vm63, %v62
    %s65 = scalar_lea.vmem %s0, 3
    %v66 = vld [vmem:[%s65] sm:$0x1]
    %67 = vrot.lane.b32.xlu0 %v66, 18
    %v68 = vpop.permute.xlu0 %67
    %vm69 = vcmask 195728
    %70 = vst.msk [vmem:[#allocation0] sm:$0x1] %vm69, %v68
    %s71 = scalar_lea.vmem %s0, 2
    %v72 = vld [vmem:[%s71] sm:$0x1]
    %73 = vrot.lane.b32.xlu0 %v72, 12
    %v74 = vpop.permute.xlu0 %73
    %vm75 = vcmask 146528
    %76 = vst.msk [vmem:[#allocation0] sm:$0x1] %vm75, %v74
    %s77 = scalar_lea.vmem %s0, 1
    %v78 = vld [vmem:[%s77] sm:$0x1]
    %79 = vrot.lane.b32.xlu0 %v78, 6
    %v80 = vpop.permute.xlu0 %79
    %vm81 = vcmask 97328
    %82 = vst.msk [vmem:[#allocation0] sm:$0x1] %vm81, %v80
    %s84 = sshllo.u32 0, 1
    %v86 = vld [vmem:[#allocation0] sm:%s84]
    %s87 = sshllo.u32 0, 1
    %88 = vst [vmem:[%s1] sm:%s87] %v86

// kernel: tile.18
$region0: #{tile.18}
  #allocation0 [shape = 's32[1]{0}', space=sflag, size = 0x4, scoped, tag = 'scoped memory for tile.18']
  %s0 = inlined_call_operand.vmem [shape: f32[16], index: 0, kind: input, shape index: {}]
  %s1 = inlined_call_operand.vmem [shape: f32[5,16], index: 1, kind: output, shape index: {}]
  // Predicated region
  $region2: #{tile.18} parent=0 // pred_check
    _
  $region3: #{tile.18} parent=0 // pred_check_branch
    %3 = sbr.rel (0) target = $region5
  $region4: #{tile.18} parent=0 // pred_region
    _
  $region5: #{tile.18} parent=0 // pred_fallthru
    _
  %v4 = vld [vmem:[%s0] ss:$0 sm:$0xff]
  %5 = vst [vmem:[%s1] sm:$0xff] %v4

// kernel: tile.19
$region0: #{tile.19}
  %s0 = inlined_call_operand.vmem [shape: f32[5,16], index: 0, kind: input, shape index: {}]
  %s1 = inlined_call_operand.vmem [shape: f32[1,80], index: 1, kind: output, shape index: {}]
  $region1: #{tile.19} parent=0
    #allocation0 [shape = 'u8[4096]{0}', space=vmem, size = 0x1000, scoped, tag = 'scoped mem for output reshape']
    %v2 = vld [vmem:[%s0] sm:$0x1]
    %vm3 = vcmask 130048
    %4 = vst.msk [vmem:[#allocation0] sm:$0x1] %vm3, %v2
    %s5 = scalar_lea.vmem %s0, 4
    %v6 = vld [vmem:[%s5] sm:$0x1]
    %7 = vrot.lane.b32.xlu0 %v6, 64
    %v8 = vpop.permute.xlu0 %7
    %vm9 = vcmask 654848
    %10 = vst.msk [vmem:[#allocation0] sm:$0x1] %vm9, %v8
    %s11 = scalar_lea.vmem %s0, 3
    %v12 = vld [vmem:[%s11] sm:$0x1]
    %13 = vrot.lane.b32.xlu0 %v12, 48
    %v14 = vpop.permute.xlu0 %13
    %vm15 = vcmask 523648
    %16 = vst.msk [vmem:[#allocation0] sm:$0x1] %vm15, %v14
    %s17 = scalar_lea.vmem %s0, 2
    %v18 = vld [vmem:[%s17] sm:$0x1]
    %19 = vrot.lane.b32.xlu0 %v18, 32
    %v20 = vpop.permute.xlu0 %19
    %vm21 = vcmask 392448
    %22 = vst.msk [vmem:[#allocation0] sm:$0x1] %vm21, %v20
    %s23 = scalar_lea.vmem %s0, 1
    %v24 = vld [vmem:[%s23] sm:$0x1]
    %25 = vrot.lane.b32.xlu0 %v24, 16
    %v26 = vpop.permute.xlu0 %25
    %vm27 = vcmask 261248
    %28 = vst.msk [vmem:[#allocation0] sm:$0x1] %vm27, %v26
    %s30 = sshllo.u32 0, 1
    %v32 = vld [vmem:[#allocation0] sm:%s30]
    %s33 = sshllo.u32 0, 1
    %34 = vst [vmem:[%s1] sm:%s33] %v32

// kernel: net_forward.1
$region0: #{net_forward.1}
  #allocation0 [shape = 'u32[]', space=smem, size = 0x4, offset = 0x4, fixed_abs, tag = 'smem constant byte address 0x4 - core index']
  #allocation1 [shape = 'u32[144,128]{1,0:T(1,128)}', space=vmem, size = 0x12000, scoped, tag = 'internal scratch']
  %s0 = inlined_call_operand.vmem [shape: f32[64,96], index: 0, kind: input, shape index: {}]
  %s1 = inlined_call_operand.vmem [shape: f32[5,56,64], index: 1, kind: input, shape index: {}]
  %s2 = inlined_call_operand.vmem [shape: f32[5,96,168], index: 2, kind: input, shape index: {}]
  %s3 = inlined_call_operand.vmem [shape: f32[1,84], index: 3, kind: input, shape index: {}]
  %s4 = inlined_call_operand.vmem [shape: f32[2,28,56], index: 4, kind: input, shape index: {}]
  %s5 = inlined_call_operand.vmem [shape: f32[2,168,84], index: 5, kind: input, shape index: {}]
  %s6 = inlined_call_operand.vmem [shape: f32[5,20,28], index: 6, kind: input, shape index: {}]
  %s7 = inlined_call_operand.vmem [shape: f32[5,84,160], index: 7, kind: input, shape index: {}]
  %s8 = inlined_call_operand.vmem [shape: f32[1,80], index: 8, kind: input, shape index: {}]
  %s9 = inlined_call_operand.vmem [shape: f32[2,10,20], index: 9, kind: input, shape index: {}]
  %s10 = inlined_call_operand.vmem [shape: f32[2,160,80], index: 10, kind: input, shape index: {}]
  %s11 = inlined_call_operand.vmem [shape: f32[5,2,10], index: 11, kind: input, shape index: {}]
  %s12 = inlined_call_operand.vmem [shape: f32[400,120], index: 12, kind: input, shape index: {}]
  %s13 = inlined_call_operand.vmem [shape: f32[1,120], index: 13, kind: input, shape index: {}]
  %s14 = inlined_call_operand.vmem [shape: f32[120,84], index: 14, kind: input, shape index: {}]
  %s15 = inlined_call_operand.vmem [shape: f32[1,84], index: 15, kind: input, shape index: {}]
  %s16 = inlined_call_operand.vmem [shape: f32[84,10], index: 16, kind: input, shape index: {}]
  %s17 = inlined_call_operand.vmem [shape: f32[1,10], index: 17, kind: input, shape index: {}]
  %s18 = inlined_call_operand.hbm [shape: f32[2,10], index: 18, kind: output, shape index: {}]
  %s19 = sld [smem:[#allocation0]]
  $region82: #{net_forward.1} parent=0
    _
  %s21 = ssub.s32 1, %s19
  %s22 = scalar_select 0, %s21, %s19
  $region1: #{net_forward.1} parent=0
    #allocation2 [shape = 'u8[1024]{0}', space=vmem, size = 0x400, scoped, tag = 'output window, operand 0, single buffered']
    #allocation3 [shape = 's32[1]{0}', space=sflag, size = 0x4, scoped, tag = 'scoped memory for net_forward.1']
    %23 = vsyncpa [#allocation3], 0
    // Predicated region
    $region2: #{net_forward.1} parent=1 // pred_check
      _
    $region3: #{net_forward.1} parent=1 // pred_check_branch
      %25 = sbr.rel (0) target = $region5
    $region4: #{net_forward.1} parent=1 // pred_region
      _
    $region5: #{net_forward.1} parent=1 // pred_fallthru
      _
    // Predicated region
    $region6: #{net_forward.1} parent=1 // pred_check
      _
    $region7: #{net_forward.1} parent=1 // pred_check_branch
      %27 = sbr.rel (0) target = $region9
    $region8: #{net_forward.1} parent=1 // pred_region
      _
    $region9: #{net_forward.1} parent=1 // pred_fallthru
      _
    // Predicated region
    $region10: #{net_forward.1} parent=1 // pred_check
      _
    $region11: #{net_forward.1} parent=1 // pred_check_branch
      %29 = sbr.rel (0) target = $region13
    $region12: #{net_forward.1} parent=1 // pred_region
      _
    $region13: #{net_forward.1} parent=1 // pred_fallthru
      _
    // Predicated region
    $region14: #{net_forward.1} parent=1 // pred_check
      _
    $region15: #{net_forward.1} parent=1 // pred_check_branch
      %31 = sbr.rel (0) target = $region17
    $region16: #{net_forward.1} parent=1 // pred_region
      _
    $region17: #{net_forward.1} parent=1 // pred_fallthru
      _
    // Predicated region
    $region18: #{net_forward.1} parent=1 // pred_check
      _
    $region19: #{net_forward.1} parent=1 // pred_check_branch
      %33 = sbr.rel (0) target = $region21
    $region20: #{net_forward.1} parent=1 // pred_region
      _
    $region21: #{net_forward.1} parent=1 // pred_fallthru
      _
    // Predicated region
    $region22: #{net_forward.1} parent=1 // pred_check
      _
    $region23: #{net_forward.1} parent=1 // pred_check_branch
      %35 = sbr.rel (0) target = $region25
    $region24: #{net_forward.1} parent=1 // pred_region
      _
    $region25: #{net_forward.1} parent=1 // pred_fallthru
      _
    // Predicated region
    $region26: #{net_forward.1} parent=1 // pred_check
      _
    $region27: #{net_forward.1} parent=1 // pred_check_branch
      %37 = sbr.rel (0) target = $region29
    $region28: #{net_forward.1} parent=1 // pred_region
      _
    $region29: #{net_forward.1} parent=1 // pred_fallthru
      _
    // Predicated region
    $region30: #{net_forward.1} parent=1 // pred_check
      _
    $region31: #{net_forward.1} parent=1 // pred_check_branch
      %39 = sbr.rel (0) target = $region33
    $region32: #{net_forward.1} parent=1 // pred_region
      _
    $region33: #{net_forward.1} parent=1 // pred_fallthru
      _
    // Predicated region
    $region34: #{net_forward.1} parent=1 // pred_check
      _
    $region35: #{net_forward.1} parent=1 // pred_check_branch
      %41 = sbr.rel (0) target = $region37
    $region36: #{net_forward.1} parent=1 // pred_region
      _
    $region37: #{net_forward.1} parent=1 // pred_fallthru
      _
    // Predicated region
    $region38: #{net_forward.1} parent=1 // pred_check
      _
    $region39: #{net_forward.1} parent=1 // pred_check_branch
      %43 = sbr.rel (0) target = $region41
    $region40: #{net_forward.1} parent=1 // pred_region
      _
    $region41: #{net_forward.1} parent=1 // pred_fallthru
      _
    // Predicated region
    $region42: #{net_forward.1} parent=1 // pred_check
      _
    $region43: #{net_forward.1} parent=1 // pred_check_branch
      %45 = sbr.rel (0) target = $region45
    $region44: #{net_forward.1} parent=1 // pred_region
      _
    $region45: #{net_forward.1} parent=1 // pred_fallthru
      _
    // Predicated region
    $region46: #{net_forward.1} parent=1 // pred_check
      _
    $region47: #{net_forward.1} parent=1 // pred_check_branch
      %47 = sbr.rel (0) target = $region49
    $region48: #{net_forward.1} parent=1 // pred_region
      _
    $region49: #{net_forward.1} parent=1 // pred_fallthru
      _
    // Predicated region
    $region50: #{net_forward.1} parent=1 // pred_check
      _
    $region51: #{net_forward.1} parent=1 // pred_check_branch
      %49 = sbr.rel (0) target = $region53
    $region52: #{net_forward.1} parent=1 // pred_region
      _
    $region53: #{net_forward.1} parent=1 // pred_fallthru
      _
    // Predicated region
    $region54: #{net_forward.1} parent=1 // pred_check
      _
    $region55: #{net_forward.1} parent=1 // pred_check_branch
      %51 = sbr.rel (0) target = $region57
    $region56: #{net_forward.1} parent=1 // pred_region
      _
    $region57: #{net_forward.1} parent=1 // pred_fallthru
      _
    // Predicated region
    $region58: #{net_forward.1} parent=1 // pred_check
      _
    $region59: #{net_forward.1} parent=1 // pred_check_branch
      %53 = sbr.rel (0) target = $region61
    $region60: #{net_forward.1} parent=1 // pred_region
      _
    $region61: #{net_forward.1} parent=1 // pred_fallthru
      _
    // Predicated region
    $region62: #{net_forward.1} parent=1 // pred_check
      _
    $region63: #{net_forward.1} parent=1 // pred_check_branch
      %55 = sbr.rel (0) target = $region65
    $region64: #{net_forward.1} parent=1 // pred_region
      _
    $region65: #{net_forward.1} parent=1 // pred_fallthru
      _
    // Predicated region
    $region66: #{net_forward.1} parent=1 // pred_check
      _
    $region67: #{net_forward.1} parent=1 // pred_check_branch
      %57 = sbr.rel (0) target = $region69
    $region68: #{net_forward.1} parent=1 // pred_region
      _
    $region69: #{net_forward.1} parent=1 // pred_fallthru
      _
    // Predicated region
    $region70: #{net_forward.1} parent=1 // pred_check
      _
    $region71: #{net_forward.1} parent=1 // pred_check_branch
      %59 = sbr.rel (0) target = $region73
    $region72: #{net_forward.1} parent=1 // pred_region
      _
    $region73: #{net_forward.1} parent=1 // pred_fallthru
      _
    %v60 = vld [vmem:[%s0] sm:$0xff]
    %v61 = vld [vmem:[%s0 + $0x8] sm:$0xff]
    %v62 = vld [vmem:[%s0 + $0x10] sm:$0xff]
    %v63 = vld [vmem:[%s0 + $0x18] sm:$0xff]
    %v64 = vld [vmem:[%s0 + $0x20] sm:$0xff]
    %v65 = vld [vmem:[%s0 + $0x28] sm:$0xff]
    %v66 = vld [vmem:[%s0 + $0x30] sm:$0xff]
    %v67 = vld [vmem:[%s0 + $0x38] sm:$0xff]
    %v68 = vld [vmem:[%s1] sm:$0xff]
    %v69 = vld [vmem:[%s1 + $0x8] sm:$0xff]
    %v70 = vld [vmem:[%s1 + $0x10] sm:$0xff]
    %v71 = vld [vmem:[%s1 + $0x18] sm:$0xff]
    %v72 = vld [vmem:[%s1 + $0x20] sm:$0xff]
    %v73 = vld [vmem:[%s1 + $0x28] sm:$0xff]
    %v74 = vld [vmem:[%s1 + $0x30] sm:$0xff]
    %vm75 = vcmask 523264
    %v77 = vsel %vm75, %v68, 0
    %v80 = vsel %vm75, %v69, 0
    %v83 = vsel %vm75, %v70, 0
    %v86 = vsel %vm75, %v71, 0
    %v89 = vsel %vm75, %v72, 0
    %v92 = vsel %vm75, %v73, 0
    %v95 = vsel %vm75, %v74, 0
    %97 = vmatprep.subr.mxu0 0.0
    %98 = vmatpush1.msra.mxu0 %v60
    %99 = vmatprep.subr.mxu0 0.0
    %100 = vmatpush1.msra.mxu0 %v61
    %101 = vmatprep.subr.mxu0 0.0
    %102 = vmatpush1.msra.mxu0 %v62
    %103 = vmatprep.subr.mxu0 0.0
    %104 = vmatpush1.msra.mxu0 %v63
    %105 = vmatprep.subr.mxu0 0.0
    %106 = vmatpush1.msra.mxu0 %v64
    %107 = vmatprep.subr.mxu0 0.0
    %108 = vmatpush1.msra.mxu0 %v65
    %109 = vmatprep.subr.mxu0 0.0
    %110 = vmatpush1.msra.mxu0 %v66
    %111 = vmatprep.subr.mxu0 0.0
    %112 = vmatpush1.msra.mxu0 %v67
    %113 = vmatprep.subr.mxu0 0.0
    %114 = vmatpush1.msra.mxu0 0.0
    %115 = vmatprep.subr.mxu0 0.0
    %116 = vmatpush1.msra.mxu0 0.0
    %117 = vmatprep.subr.mxu0 0.0
    %118 = vmatpush1.msra.mxu0 0.0
    %119 = vmatprep.subr.mxu0 0.0
    %120 = vmatpush1.msra.mxu0 0.0
    %121 = vmatprep.subr.mxu0 0.0
    %122 = vmatpush1.msra.mxu0 0.0
    %123 = vmatprep.subr.mxu0 0.0
    %124 = vmatpush1.msra.mxu0 0.0
    %125 = vmatprep.subr.mxu0 0.0
    %126 = vmatpush1.msra.mxu0 0.0
    %127 = vmatprep.subr.mxu0 0.0
    %128 = vmatpush1.msra.mxu0 0.0
    %129 = vmatprep.subr.mxu0 0.0
    %130 = vmatpush1.msra.mxu0 0.0
    %131 = vmatprep.subr.mxu0 0.0
    %132 = vmatpush1.msra.mxu0 0.0
    %133 = vmatprep.subr.mxu0 0.0
    %134 = vmatpush1.msra.mxu0 0.0
    %135 = vmatprep.subr.mxu0 0.0
    %136 = vmatpush1.msra.mxu0 0.0
    %137 = vmatprep.subr.mxu0 0.0
    %138 = vmatpush1.msra.mxu0 0.0
    %139 = vmatprep.subr.mxu0 0.0
    %140 = vmatpush1.msra.mxu0 0.0
    %141 = vmatprep.subr.mxu0 0.0
    %142 = vmatpush1.msra.mxu0 0.0
    %143 = vmatprep.subr.mxu0 0.0
    %144 = vmatpush1.msra.mxu0 0.0
    %145 = vmatprep.subr.mxu0 0.0
    %146 = vmatpush1.msra.mxu0 0.0
    %147 = vmatprep.subr.mxu0 0.0
    %148 = vmatpush1.msra.mxu0 0.0
    %149 = vmatprep.subr.mxu0 0.0
    %150 = vmatpush1.msra.mxu0 0.0
    %151 = vmatprep.subr.mxu0 0.0
    %152 = vmatpush1.msra.mxu0 0.0
    %153 = vmatprep.subr.mxu0 0.0
    %154 = vmatpush1.msra.mxu0 0.0
    %155 = vmatprep.subr.mxu0 0.0
    %156 = vmatpush1.msra.mxu0 0.0
    %157 = vmatprep.subr.mxu0 0.0
    %158 = vmatpush1.msra.mxu0 0.0
    %159 = vmatprep.subr.mxu0 0.0
    %160 = vmatpush1.msra.mxu0 0.0
    %161 = vmatprep.mubr.f32.mxu0 0.0
    %162 = vmatmul.mubr.f32.gmra.mrb[0].mxu0 %v77
    %v163 = vpop.f32.mrb[0].mxu0
    %v164 = vadd.f32 0.0, %v163
    %v165 = vpop.f32.mrb[0].mxu0
    %166 = vmatprep.mubr.f32.mxu0 0.0
    %167 = vmatmul.mubr.f32.gmra.mrb[0].mxu0 %v80
    %v168 = vpop.f32.mrb[0].mxu0
    %v169 = vadd.f32 0.0, %v168
    %v170 = vpop.f32.mrb[0].mxu0
    %171 = vmatprep.mubr.f32.mxu0 0.0
    %172 = vmatmul.mubr.f32.gmra.mrb[0].mxu0 %v83
    %v173 = vpop.f32.mrb[0].mxu0
    %v174 = vadd.f32 0.0, %v173
    %v175 = vpop.f32.mrb[0].mxu0
    %176 = vmatprep.mubr.f32.mxu0 0.0
    %177 = vmatmul.mubr.f32.gmra.mrb[0].mxu0 %v86
    %v178 = vpop.f32.mrb[0].mxu0
    %v179 = vadd.f32 0.0, %v178
    %v180 = vpop.f32.mrb[0].mxu0
    %181 = vmatprep.mubr.f32.mxu0 0.0
    %182 = vmatmul.mubr.f32.gmra.mrb[0].mxu0 %v89
    %v183 = vpop.f32.mrb[0].mxu0
    %v184 = vadd.f32 0.0, %v183
    %v185 = vpop.f32.mrb[0].mxu0
    %186 = vmatprep.mubr.f32.mxu0 0.0
    %187 = vmatmul.mubr.f32.gmra.mrb[0].mxu0 %v92
    %v188 = vpop.f32.mrb[0].mxu0
    %v189 = vadd.f32 0.0, %v188
    %v190 = vpop.f32.mrb[0].mxu0
    %191 = vmatprep.mubr.f32.mxu0 0.0
    %192 = vmatmul.mubr.f32.gmra.mrb[0].mxu0 %v95
    %v193 = vpop.f32.mrb[0].mxu0
    %v194 = vadd.f32 0.0, %v193
    %v195 = vpop.f32.mrb[0].mxu0
    %196 = vdwg.mxu0
    %v197 = vld [vmem:[%s2] sm:$0xff]
    %v198 = vld [vmem:[%s2 + $0x8] sm:$0xff]
    %v199 = vld [vmem:[%s2 + $0x10] sm:$0xff]
    %v200 = vld [vmem:[%s2 + $0x18] sm:$0xff]
    %v201 = vld [vmem:[%s2 + $0x20] sm:$0xff]
    %v202 = vld [vmem:[%s2 + $0x28] sm:$0xff]
    %v203 = vld [vmem:[%s2 + $0x30] sm:$0xff]
    %v204 = vld [vmem:[%s2 + $0x38] sm:$0xff]
    %v205 = vld [vmem:[%s2 + $0x40] sm:$0xff]
    %v206 = vld [vmem:[%s2 + $0x48] sm:$0xff]
    %v207 = vld [vmem:[%s2 + $0x50] sm:$0xff]
    %v208 = vld [vmem:[%s2 + $0x58] sm:$0xff]
    %v209 = vld [vmem:[%s2 + $0x60] sm:$0xff]
    %v210 = vld [vmem:[%s2 + $0x68] sm:$0xff]
    %v211 = vld [vmem:[%s2 + $0x70] sm:$0xff]
    %v212 = vld [vmem:[%s2 + $0x78] sm:$0xff]
    %v213 = vld [vmem:[%s2 + $0x80] sm:$0xff]
    %v214 = vld [vmem:[%s2 + $0x88] sm:$0xff]
    %v215 = vld [vmem:[%s2 + $0x90] sm:$0xff]
    %v216 = vld [vmem:[%s2 + $0x98] sm:$0xff]
    %v217 = vld [vmem:[%s2 + $0xa0] sm:$0xff]
    %v218 = vld [vmem:[%s2 + $0xa8] sm:$0xff]
    %v219 = vld [vmem:[%s2 + $0xb0] sm:$0xff]
    %v220 = vld [vmem:[%s2 + $0xb8] sm:$0xff]
    %s221 = scalar_lea.vmem %s1, 56
    %v222 = vld [vmem:[%s221] sm:$0xff]
    %v223 = vld [vmem:[%s221 + $0x8] sm:$0xff]
    %v224 = vld [vmem:[%s221 + $0x10] sm:$0xff]
    %v225 = vld [vmem:[%s221 + $0x18] sm:$0xff]
    %v226 = vld [vmem:[%s221 + $0x20] sm:$0xff]
    %v227 = vld [vmem:[%s221 + $0x28] sm:$0xff]
    %v228 = vld [vmem:[%s221 + $0x30] sm:$0xff]
    %v230 = vsel %vm75, %v222, 0
    %v233 = vsel %vm75, %v223, 0
    %v236 = vsel %vm75, %v224, 0
    %v239 = vsel %vm75, %v225, 0
    %v242 = vsel %vm75, %v226, 0
    %v245 = vsel %vm75, %v227, 0
    %v248 = vsel %vm75, %v228, 0
    %250 = vmatprep.subr.mxu0 0.0
    %251 = vmatpush1.msra.mxu0 %v60
    %252 = vmatprep.subr.mxu0 0.0
    %253 = vmatpush1.msra.mxu0 %v61
    %254 = vmatprep.subr.mxu0 0.0
    %255 = vmatpush1.msra.mxu0 %v62
    %256 = vmatprep.subr.mxu0 0.0
    %257 = vmatpush1.msra.mxu0 %v63
    %258 = vmatprep.subr.mxu0 0.0
    %259 = vmatpush1.msra.mxu0 %v64
    %260 = vmatprep.subr.mxu0 0.0
    %261 = vmatpush1.msra.mxu0 %v65
    %262 = vmatprep.subr.mxu0 0.0
    %263 = vmatpush1.msra.mxu0 %v66
    %264 = vmatprep.subr.mxu0 0.0
    %265 = vmatpush1.msra.mxu0 %v67
    %266 = vmatprep.subr.mxu0 0.0
    %267 = vmatpush1.msra.mxu0 0.0
    %268 = vmatprep.subr.mxu0 0.0
    %269 = vmatpush1.msra.mxu0 0.0
    %270 = vmatprep.subr.mxu0 0.0
    %271 = vmatpush1.msra.mxu0 0.0
    %272 = vmatprep.subr.mxu0 0.0
    %273 = vmatpush1.msra.mxu0 0.0
    %274 = vmatprep.subr.mxu0 0.0
    %275 = vmatpush1.msra.mxu0 0.0
    %276 = vmatprep.subr.mxu0 0.0
    %277 = vmatpush1.msra.mxu0 0.0
    %278 = vmatprep.subr.mxu0 0.0
    %279 = vmatpush1.msra.mxu0 0.0
    %280 = vmatprep.subr.mxu0 0.0
    %281 = vmatpush1.msra.mxu0 0.0
    %282 = vmatprep.subr.mxu0 0.0
    %283 = vmatpush1.msra.mxu0 0.0
    %284 = vmatprep.subr.mxu0 0.0
    %285 = vmatpush1.msra.mxu0 0.0
    %286 = vmatprep.subr.mxu0 0.0
    %287 = vmatpush1.msra.mxu0 0.0
    %288 = vmatprep.subr.mxu0 0.0
    %289 = vmatpush1.msra.mxu0 0.0
    %290 = vmatprep.subr.mxu0 0.0
    %291 = vmatpush1.msra.mxu0 0.0
    %292 = vmatprep.subr.mxu0 0.0
    %293 = vmatpush1.msra.mxu0 0.0
    %294 = vmatprep.subr.mxu0 0.0
    %295 = vmatpush1.msra.mxu0 0.0
    %296 = vmatprep.subr.mxu0 0.0
    %297 = vmatpush1.msra.mxu0 0.0
    %298 = vmatprep.subr.mxu0 0.0
    %299 = vmatpush1.msra.mxu0 0.0
    %300 = vmatprep.subr.mxu0 0.0
    %301 = vmatpush1.msra.mxu0 0.0
    %302 = vmatprep.subr.mxu0 0.0
    %303 = vmatpush1.msra.mxu0 0.0
    %304 = vmatprep.subr.mxu0 0.0
    %305 = vmatpush1.msra.mxu0 0.0
    %306 = vmatprep.subr.mxu0 0.0
    %307 = vmatpush1.msra.mxu0 0.0
    %308 = vmatprep.subr.mxu0 0.0
    %309 = vmatpush1.msra.mxu0 0.0
    %310 = vmatprep.subr.mxu0 0.0
    %311 = vmatpush1.msra.mxu0 0.0
    %312 = vmatprep.subr.mxu0 0.0
    %313 = vmatpush1.msra.mxu0 0.0
    %314 = vmatprep.mubr.f32.mxu0 0.0
    %315 = vmatmul.mubr.f32.gmra.mrb[0].mxu0 %v230
    %v316 = vpop.f32.mrb[0].mxu0
    %v317 = vadd.f32 0.0, %v316
    %v318 = vpop.f32.mrb[0].mxu0
    %319 = vmatprep.mubr.f32.mxu0 0.0
    %320 = vmatmul.mubr.f32.gmra.mrb[0].mxu0 %v233
    %v321 = vpop.f32.mrb[0].mxu0
    %v322 = vadd.f32 0.0, %v321
    %v323 = vpop.f32.mrb[0].mxu0
    %324 = vmatprep.mubr.f32.mxu0 0.0
    %325 = vmatmul.mubr.f32.gmra.mrb[0].mxu0 %v236
    %v326 = vpop.f32.mrb[0].mxu0
    %v327 = vadd.f32 0.0, %v326
    %v328 = vpop.f32.mrb[0].mxu0
    %329 = vmatprep.mubr.f32.mxu0 0.0
    %330 = vmatmul.mubr.f32.gmra.mrb[0].mxu0 %v239
    %v331 = vpop.f32.mrb[0].mxu0
    %v332 = vadd.f32 0.0, %v331
    %v333 = vpop.f32.mrb[0].mxu0
    %334 = vmatprep.mubr.f32.mxu0 0.0
    %335 = vmatmul.mubr.f32.gmra.mrb[0].mxu0 %v242
    %v336 = vpop.f32.mrb[0].mxu0
    %v337 = vadd.f32 0.0, %v336
    %v338 = vpop.f32.mrb[0].mxu0
    %339 = vmatprep.mubr.f32.mxu0 0.0
    %340 = vmatmul.mubr.f32.gmra.mrb[0].mxu0 %v245
    %v341 = vpop.f32.mrb[0].mxu0
    %v342 = vadd.f32 0.0, %v341
    %v343 = vpop.f32.mrb[0].mxu0
    %344 = vmatprep.mubr.f32.mxu0 0.0
    %345 = vmatmul.mubr.f32.gmra.mrb[0].mxu0 %v248
    %v346 = vpop.f32.mrb[0].mxu0
    %v347 = vadd.f32 0.0, %v346
    %v348 = vpop.f32.mrb[0].mxu0
    %349 = vdwg.mxu0
    %s350 = scalar_lea.vmem %s2, 192
    %v351 = vld [vmem:[%s350] sm:$0xff]
    %v352 = vld [vmem:[%s350 + $0x8] sm:$0xff]
    %v353 = vld [vmem:[%s350 + $0x10] sm:$0xff]
    %v354 = vld [vmem:[%s350 + $0x18] sm:$0xff]
    %v355 = vld [vmem:[%s350 + $0x20] sm:$0xff]
    %v356 = vld [vmem:[%s350 + $0x28] sm:$0xff]
    %v357 = vld [vmem:[%s350 + $0x30] sm:$0xff]
    %v358 = vld [vmem:[%s350 + $0x38] sm:$0xff]
    %v359 = vld [vmem:[%s350 + $0x40] sm:$0xff]
    %v360 = vld [vmem:[%s350 + $0x48] sm:$0xff]
    %v361 = vld [vmem:[%s350 + $0x50] sm:$0xff]
    %v362 = vld [vmem:[%s350 + $0x58] sm:$0xff]
    %v363 = vld [vmem:[%s350 + $0x60] sm:$0xff]
    %v364 = vld [vmem:[%s350 + $0x68] sm:$0xff]
    %v365 = vld [vmem:[%s350 + $0x70] sm:$0xff]
    %v366 = vld [vmem:[%s350 + $0x78] sm:$0xff]
    %v367 = vld [vmem:[%s350 + $0x80] sm:$0xff]
    %v368 = vld [vmem:[%s350 + $0x88] sm:$0xff]
    %v369 = vld [vmem:[%s350 + $0x90] sm:$0xff]
    %v370 = vld [vmem:[%s350 + $0x98] sm:$0xff]
    %v371 = vld [vmem:[%s350 + $0xa0] sm:$0xff]
    %v372 = vld [vmem:[%s350 + $0xa8] sm:$0xff]
    %v373 = vld [vmem:[%s350 + $0xb0] sm:$0xff]
    %v374 = vld [vmem:[%s350 + $0xb8] sm:$0xff]
    %vm375 = vcmask 785408
    %v377 = vsel %vm375, %v317, 0
    %v380 = vsel %vm375, %v322, 0
    %v383 = vsel %vm375, %v327, 0
    %v386 = vsel %vm375, %v332, 0
    %v389 = vsel %vm375, %v337, 0
    %v392 = vsel %vm375, %v342, 0
    %v395 = vsel %vm375, %v347, 0
    %397 = vmatprep.subr.mxu0 %v352
    %398 = vmatpush1.msra.mxu0 %v351
    %399 = vmatprep.subr.mxu0 %v354
    %400 = vmatpush1.msra.mxu0 %v353
    %401 = vmatprep.subr.mxu0 %v356
    %402 = vmatpush1.msra.mxu0 %v355
    %403 = vmatprep.subr.mxu0 %v358
    %404 = vmatpush1.msra.mxu0 %v357
    %405 = vmatprep.subr.mxu0 %v360
    %406 = vmatpush1.msra.mxu0 %v359
    %407 = vmatprep.subr.mxu0 %v362
    %408 = vmatpush1.msra.mxu0 %v361
    %409 = vmatprep.subr.mxu0 %v364
    %410 = vmatpush1.msra.mxu0 %v363
    %411 = vmatprep.subr.mxu0 %v366
    %412 = vmatpush1.msra.mxu0 %v365
    %413 = vmatprep.subr.mxu0 %v368
    %414 = vmatpush1.msra.mxu0 %v367
    %415 = vmatprep.subr.mxu0 %v370
    %416 = vmatpush1.msra.mxu0 %v369
    %417 = vmatprep.subr.mxu0 %v372
    %418 = vmatpush1.msra.mxu0 %v371
    %419 = vmatprep.subr.mxu0 %v374
    %420 = vmatpush1.msra.mxu0 %v373
    %421 = vmatprep.subr.mxu0 0.0
    %422 = vmatpush1.msra.mxu0 0.0
    %423 = vmatprep.subr.mxu0 0.0
    %424 = vmatpush1.msra.mxu0 0.0
    %425 = vmatprep.subr.mxu0 0.0
    %426 = vmatpush1.msra.mxu0 0.0
    %427 = vmatprep.subr.mxu0 0.0
    %428 = vmatpush1.msra.mxu0 0.0
    %429 = vmatprep.subr.mxu0 0.0
    %430 = vmatpush1.msra.mxu0 0.0
    %431 = vmatprep.subr.mxu0 0.0
    %432 = vmatpush1.msra.mxu0 0.0
    %433 = vmatprep.subr.mxu0 0.0
    %434 = vmatpush1.msra.mxu0 0.0
    %435 = vmatprep.subr.mxu0 0.0
    %436 = vmatpush1.msra.mxu0 0.0
    %437 = vmatprep.subr.mxu0 0.0
    %438 = vmatpush1.msra.mxu0 0.0
    %439 = vmatprep.subr.mxu0 0.0
    %440 = vmatpush1.msra.mxu0 0.0
    %441 = vmatprep.subr.mxu0 0.0
    %442 = vmatpush1.msra.mxu0 0.0
    %443 = vmatprep.subr.mxu0 0.0
    %444 = vmatpush1.msra.mxu0 0.0
    %445 = vmatprep.subr.mxu0 0.0
    %446 = vmatpush1.msra.mxu0 0.0
    %447 = vmatprep.subr.mxu0 0.0
    %448 = vmatpush1.msra.mxu0 0.0
    %449 = vmatprep.subr.mxu0 0.0
    %450 = vmatpush1.msra.mxu0 0.0
    %451 = vmatprep.subr.mxu0 0.0
    %452 = vmatpush1.msra.mxu0 0.0
    %453 = vmatprep.subr.mxu0 0.0
    %454 = vmatpush1.msra.mxu0 0.0
    %455 = vmatprep.subr.mxu0 0.0
    %456 = vmatpush1.msra.mxu0 0.0
    %457 = vmatprep.subr.mxu0 0.0
    %458 = vmatpush1.msra.mxu0 0.0
    %459 = vmatprep.subr.mxu0 0.0
    %460 = vmatpush1.msra.mxu0 0.0
    %461 = vmatprep.mubr.f32.mxu0 0.0
    %462 = vmatmul.mubr.f32.gmra.mrb[0].mxu0 %v377
    %v463 = vpop.f32.mrb[0].mxu0
    %v464 = vadd.f32 0.0, %v463
    %v465 = vpop.f32.mrb[0].mxu0
    %v466 = vadd.f32 0.0, %v465
    %467 = vmatprep.mubr.f32.mxu0 0.0
    %468 = vmatmul.mubr.f32.gmra.mrb[0].mxu0 %v380
    %v469 = vpop.f32.mrb[0].mxu0
    %v470 = vadd.f32 0.0, %v469
    %v471 = vpop.f32.mrb[0].mxu0
    %v472 = vadd.f32 0.0, %v471
    %473 = vmatprep.mubr.f32.mxu0 0.0
    %474 = vmatmul.mubr.f32.gmra.mrb[0].mxu0 %v383
    %v475 = vpop.f32.mrb[0].mxu0
    %v476 = vadd.f32 0.0, %v475
    %v477 = vpop.f32.mrb[0].mxu0
    %v478 = vadd.f32 0.0, %v477
    %479 = vmatprep.mubr.f32.mxu0 0.0
    %480 = vmatmul.mubr.f32.gmra.mrb[0].mxu0 %v386
    %v481 = vpop.f32.mrb[0].mxu0
    %v482 = vadd.f32 0.0, %v481
    %v483 = vpop.f32.mrb[0].mxu0
    %v484 = vadd.f32 0.0, %v483
    %485 = vmatprep.mubr.f32.mxu0 0.0
    %486 = vmatmul.mubr.f32.gmra.mrb[0].mxu0 %v389
    %v487 = vpop.f32.mrb[0].mxu0
    %v488 = vadd.f32 0.0, %v487
    %v489 = vpop.f32.mrb[0].mxu0
    %v490 = vadd.f32 0.0, %v489
    %491 = vmatprep.mubr.f32.mxu0 0.0
    %492 = vmatmul.mubr.f32.gmra.mrb[0].mxu0 %v392
    %v493 = vpop.f32.mrb[0].mxu0
    %v494 = vadd.f32 0.0, %v493
    %v495 = vpop.f32.mrb[0].mxu0
    %v496 = vadd.f32 0.0, %v495
    %497 = vmatprep.mubr.f32.mxu0 0.0
    %498 = vmatmul.mubr.f32.gmra.mrb[0].mxu0 %v395
    %v499 = vpop.f32.mrb[0].mxu0
    %v500 = vadd.f32 0.0, %v499
    %v501 = vpop.f32.mrb[0].mxu0
    %v502 = vadd.f32 0.0, %v501
    %503 = vdwg.mxu0
    %v505 = vsel %vm375, %v164, 0
    %v508 = vsel %vm375, %v169, 0
    %v511 = vsel %vm375, %v174, 0
    %v514 = vsel %vm375, %v179, 0
    %v517 = vsel %vm375, %v184, 0
    %v520 = vsel %vm375, %v189, 0
    %v523 = vsel %vm375, %v194, 0
    %525 = vmatprep.subr.mxu0 %v198
    %526 = vmatpush1.msra.mxu0 %v197
    %527 = vmatprep.subr.mxu0 %v200
    %528 = vmatpush1.msra.mxu0 %v199
    %529 = vmatprep.subr.mxu0 %v202
    %530 = vmatpush1.msra.mxu0 %v201
    %531 = vmatprep.subr.mxu0 %v204
    %532 = vmatpush1.msra.mxu0 %v203
    %533 = vmatprep.subr.mxu0 %v206
    %534 = vmatpush1.msra.mxu0 %v205
    %535 = vmatprep.subr.mxu0 %v208
    %536 = vmatpush1.msra.mxu0 %v207
    %537 = vmatprep.subr.mxu0 %v210
    %538 = vmatpush1.msra.mxu0 %v209
    %539 = vmatprep.subr.mxu0 %v212
    %540 = vmatpush1.msra.mxu0 %v211
    %541 = vmatprep.subr.mxu0 %v214
    %542 = vmatpush1.msra.mxu0 %v213
    %543 = vmatprep.subr.mxu0 %v216
    %544 = vmatpush1.msra.mxu0 %v215
    %545 = vmatprep.subr.mxu0 %v218
    %546 = vmatpush1.msra.mxu0 %v217
    %547 = vmatprep.subr.mxu0 %v220
    %548 = vmatpush1.msra.mxu0 %v219
    %549 = vmatprep.subr.mxu0 0.0
    %550 = vmatpush1.msra.mxu0 0.0
    %551 = vmatprep.subr.mxu0 0.0
    %552 = vmatpush1.msra.mxu0 0.0
    %553 = vmatprep.subr.mxu0 0.0
    %554 = vmatpush1.msra.mxu0 0.0
    %555 = vmatprep.subr.mxu0 0.0
    %556 = vmatpush1.msra.mxu0 0.0
    %557 = vmatprep.subr.mxu0 0.0
    %558 = vmatpush1.msra.mxu0 0.0
    %559 = vmatprep.subr.mxu0 0.0
    %560 = vmatpush1.msra.mxu0 0.0
    %561 = vmatprep.subr.mxu0 0.0
    %562 = vmatpush1.msra.mxu0 0.0
    %563 = vmatprep.subr.mxu0 0.0
    %564 = vmatpush1.msra.mxu0 0.0
    %565 = vmatprep.subr.mxu0 0.0
    %566 = vmatpush1.msra.mxu0 0.0
    %567 = vmatprep.subr.mxu0 0.0
    %568 = vmatpush1.msra.mxu0 0.0
    %569 = vmatprep.subr.mxu0 0.0
    %570 = vmatpush1.msra.mxu0 0.0
    %571 = vmatprep.subr.mxu0 0.0
    %572 = vmatpush1.msra.mxu0 0.0
    %573 = vmatprep.subr.mxu0 0.0
    %574 = vmatpush1.msra.mxu0 0.0
    %575 = vmatprep.subr.mxu0 0.0
    %576 = vmatpush1.msra.mxu0 0.0
    %577 = vmatprep.subr.mxu0 0.0
    %578 = vmatpush1.msra.mxu0 0.0
    %579 = vmatprep.subr.mxu0 0.0
    %580 = vmatpush1.msra.mxu0 0.0
    %581 = vmatprep.subr.mxu0 0.0
    %582 = vmatpush1.msra.mxu0 0.0
    %583 = vmatprep.subr.mxu0 0.0
    %584 = vmatpush1.msra.mxu0 0.0
    %585 = vmatprep.subr.mxu0 0.0
    %586 = vmatpush1.msra.mxu0 0.0
    %587 = vmatprep.subr.mxu0 0.0
    %588 = vmatpush1.msra.mxu0 0.0
    %589 = vmatprep.mubr.f32.mxu0 0.0
    %590 = vmatmul.mubr.f32.gmra.mrb[0].mxu0 %v505
    %v591 = vpop.f32.mrb[0].mxu0
    %v592 = vadd.f32 %v464, %v591
    %v593 = vpop.f32.mrb[0].mxu0
    %v594 = vadd.f32 %v466, %v593
    %595 = vmatprep.mubr.f32.mxu0 0.0
    %596 = vmatmul.mubr.f32.gmra.mrb[0].mxu0 %v508
    %v597 = vpop.f32.mrb[0].mxu0
    %v598 = vadd.f32 %v470, %v597
    %v599 = vpop.f32.mrb[0].mxu0
    %v600 = vadd.f32 %v472, %v599
    %601 = vmatprep.mubr.f32.mxu0 0.0
    %602 = vmatmul.mubr.f32.gmra.mrb[0].mxu0 %v511
    %v603 = vpop.f32.mrb[0].mxu0
    %v604 = vadd.f32 %v476, %v603
    %v605 = vpop.f32.mrb[0].mxu0
    %v606 = vadd.f32 %v478, %v605
    %607 = vmatprep.mubr.f32.mxu0 0.0
    %608 = vmatmul.mubr.f32.gmra.mrb[0].mxu0 %v514
    %v609 = vpop.f32.mrb[0].mxu0
    %v610 = vadd.f32 %v482, %v609
    %v611 = vpop.f32.mrb[0].mxu0
    %v612 = vadd.f32 %v484, %v611
    %613 = vmatprep.mubr.f32.mxu0 0.0
    %614 = vmatmul.mubr.f32.gmra.mrb[0].mxu0 %v517
    %v615 = vpop.f32.mrb[0].mxu0
    %v616 = vadd.f32 %v488, %v615
    %v617 = vpop.f32.mrb[0].mxu0
    %v618 = vadd.f32 %v490, %v617
    %619 = vmatprep.mubr.f32.mxu0 0.0
    %620 = vmatmul.mubr.f32.gmra.mrb[0].mxu0 %v520
    %v621 = vpop.f32.mrb[0].mxu0
    %v622 = vadd.f32 %v494, %v621
    %v623 = vpop.f32.mrb[0].mxu0
    %v624 = vadd.f32 %v496, %v623
    %625 = vmatprep.mubr.f32.mxu0 0.0
    %626 = vmatmul.mubr.f32.gmra.mrb[0].mxu0 %v523
    %v627 = vpop.f32.mrb[0].mxu0
    %v628 = vadd.f32 %v500, %v627
    %v629 = vpop.f32.mrb[0].mxu0
    %v630 = vadd.f32 %v502, %v629
    %631 = vdwg.mxu0
    %s632 = scalar_lea.vmem %s1, 112
    %v633 = vld [vmem:[%s632] sm:$0xff]
    %v634 = vld [vmem:[%s632 + $0x8] sm:$0xff]
    %v635 = vld [vmem:[%s632 + $0x10] sm:$0xff]
    %v636 = vld [vmem:[%s632 + $0x18] sm:$0xff]
    %v637 = vld [vmem:[%s632 + $0x20] sm:$0xff]
    %v638 = vld [vmem:[%s632 + $0x28] sm:$0xff]
    %v639 = vld [vmem:[%s632 + $0x30] sm:$0xff]
    %v641 = vsel %vm75, %v633, 0
    %v644 = vsel %vm75, %v634, 0
    %v647 = vsel %vm75, %v635, 0
    %v650 = vsel %vm75, %v636, 0
    %v653 = vsel %vm75, %v637, 0
    %v656 = vsel %vm75, %v638, 0
    %v659 = vsel %vm75, %v639, 0
    %661 = vmatprep.subr.mxu0 0.0
    %662 = vmatpush1.msra.mxu0 %v60
    %663 = vmatprep.subr.mxu0 0.0
    %664 = vmatpush1.msra.mxu0 %v61
    %665 = vmatprep.subr.mxu0 0.0
    %666 = vmatpush1.msra.mxu0 %v62
    %667 = vmatprep.subr.mxu0 0.0
    %668 = vmatpush1.msra.mxu0 %v63
    %669 = vmatprep.subr.mxu0 0.0
    %670 = vmatpush1.msra.mxu0 %v64
    %671 = vmatprep.subr.mxu0 0.0
    %672 = vmatpush1.msra.mxu0 %v65
    %673 = vmatprep.subr.mxu0 0.0
    %674 = vmatpush1.msra.mxu0 %v66
    %675 = vmatprep.subr.mxu0 0.0
    %676 = vmatpush1.msra.mxu0 %v67
    %677 = vmatprep.subr.mxu0 0.0
    %678 = vmatpush1.msra.mxu0 0.0
    %679 = vmatprep.subr.mxu0 0.0
    %680 = vmatpush1.msra.mxu0 0.0
    %681 = vmatprep.subr.mxu0 0.0
    %682 = vmatpush1.msra.mxu0 0.0
    %683 = vmatprep.subr.mxu0 0.0
    %684 = vmatpush1.msra.mxu0 0.0
    %685 = vmatprep.subr.mxu0 0.0
    %686 = vmatpush1.msra.mxu0 0.0
    %687 = vmatprep.subr.mxu0 0.0
    %688 = vmatpush1.msra.mxu0 0.0
    %689 = vmatprep.subr.mxu0 0.0
    %690 = vmatpush1.msra.mxu0 0.0
    %691 = vmatprep.subr.mxu0 0.0
    %692 = vmatpush1.msra.mxu0 0.0
    %693 = vmatprep.subr.mxu0 0.0
    %694 = vmatpush1.msra.mxu0 0.0
    %695 = vmatprep.subr.mxu0 0.0
    %696 = vmatpush1.msra.mxu0 0.0
    %697 = vmatprep.subr.mxu0 0.0
    %698 = vmatpush1.msra.mxu0 0.0
    %699 = vmatprep.subr.mxu0 0.0
    %700 = vmatpush1.msra.mxu0 0.0
    %701 = vmatprep.subr.mxu0 0.0
    %702 = vmatpush1.msra.mxu0 0.0
    %703 = vmatprep.subr.mxu0 0.0
    %704 = vmatpush1.msra.mxu0 0.0
    %705 = vmatprep.subr.mxu0 0.0
    %706 = vmatpush1.msra.mxu0 0.0
    %707 = vmatprep.subr.mxu0 0.0
    %708 = vmatpush1.msra.mxu0 0.0
    %709 = vmatprep.subr.mxu0 0.0
    %710 = vmatpush1.msra.mxu0 0.0
    %711 = vmatprep.subr.mxu0 0.0
    %712 = vmatpush1.msra.mxu0 0.0
    %713 = vmatprep.subr.mxu0 0.0
    %714 = vmatpush1.msra.mxu0 0.0
    %715 = vmatprep.subr.mxu0 0.0
    %716 = vmatpush1.msra.mxu0 0.0
    %717 = vmatprep.subr.mxu0 0.0
    %718 = vmatpush1.msra.mxu0 0.0
    %719 = vmatprep.subr.mxu0 0.0
    %720 = vmatpush1.msra.mxu0 0.0
    %721 = vmatprep.subr.mxu0 0.0
    %722 = vmatpush1.msra.mxu0 0.0
    %723 = vmatprep.subr.mxu0 0.0
    %724 = vmatpush1.msra.mxu0 0.0
    %725 = vmatprep.mubr.f32.mxu0 0.0
    %726 = vmatmul.mubr.f32.gmra.mrb[0].mxu0 %v641
    %v727 = vpop.f32.mrb[0].mxu0
    %v728 = vadd.f32 0.0, %v727
    %v729 = vpop.f32.mrb[0].mxu0
    %730 = vmatprep.mubr.f32.mxu0 0.0
    %731 = vmatmul.mubr.f32.gmra.mrb[0].mxu0 %v644
    %v732 = vpop.f32.mrb[0].mxu0
    %v733 = vadd.f32 0.0, %v732
    %v734 = vpop.f32.mrb[0].mxu0
    %735 = vmatprep.mubr.f32.mxu0 0.0
    %736 = vmatmul.mubr.f32.gmra.mrb[0].mxu0 %v647
    %v737 = vpop.f32.mrb[0].mxu0
    %v738 = vadd.f32 0.0, %v737
    %v739 = vpop.f32.mrb[0].mxu0
    %740 = vmatprep.mubr.f32.mxu0 0.0
    %741 = vmatmul.mubr.f32.gmra.mrb[0].mxu0 %v650
    %v742 = vpop.f32.mrb[0].mxu0
    %v743 = vadd.f32 0.0, %v742
    %v744 = vpop.f32.mrb[0].mxu0
    %745 = vmatprep.mubr.f32.mxu0 0.0
    %746 = vmatmul.mubr.f32.gmra.mrb[0].mxu0 %v653
    %v747 = vpop.f32.mrb[0].mxu0
    %v748 = vadd.f32 0.0, %v747
    %v749 = vpop.f32.mrb[0].mxu0
    %750 = vmatprep.mubr.f32.mxu0 0.0
    %751 = vmatmul.mubr.f32.gmra.mrb[0].mxu0 %v656
    %v752 = vpop.f32.mrb[0].mxu0
    %v753 = vadd.f32 0.0, %v752
    %v754 = vpop.f32.mrb[0].mxu0
    %755 = vmatprep.mubr.f32.mxu0 0.0
    %756 = vmatmul.mubr.f32.gmra.mrb[0].mxu0 %v659
    %v757 = vpop.f32.mrb[0].mxu0
    %v758 = vadd.f32 0.0, %v757
    %v759 = vpop.f32.mrb[0].mxu0
    %760 = vdwg.mxu0
    %s761 = scalar_lea.vmem %s2, 384
    %v762 = vld [vmem:[%s761] sm:$0xff]
    %v763 = vld [vmem:[%s761 + $0x8] sm:$0xff]
    %v764 = vld [vmem:[%s761 + $0x10] sm:$0xff]
    %v765 = vld [vmem:[%s761 + $0x18] sm:$0xff]
    %v766 = vld [vmem:[%s761 + $0x20] sm:$0xff]
    %v767 = vld [vmem:[%s761 + $0x28] sm:$0xff]
    %v768 = vld [vmem:[%s761 + $0x30] sm:$0xff]
    %v769 = vld [vmem:[%s761 + $0x38] sm:$0xff]
    %v770 = vld [vmem:[%s761 + $0x40] sm:$0xff]
    %v771 = vld [vmem:[%s761 + $0x48] sm:$0xff]
    %v772 = vld [vmem:[%s761 + $0x50] sm:$0xff]
    %v773 = vld [vmem:[%s761 + $0x58] sm:$0xff]
    %v774 = vld [vmem:[%s761 + $0x60] sm:$0xff]
    %v775 = vld [vmem:[%s761 + $0x68] sm:$0xff]
    %v776 = vld [vmem:[%s761 + $0x70] sm:$0xff]
    %v777 = vld [vmem:[%s761 + $0x78] sm:$0xff]
    %v778 = vld [vmem:[%s761 + $0x80] sm:$0xff]
    %v779 = vld [vmem:[%s761 + $0x88] sm:$0xff]
    %v780 = vld [vmem:[%s761 + $0x90] sm:$0xff]
    %v781 = vld [vmem:[%s761 + $0x98] sm:$0xff]
    %v782 = vld [vmem:[%s761 + $0xa0] sm:$0xff]
    %v783 = vld [vmem:[%s761 + $0xa8] sm:$0xff]
    %v784 = vld [vmem:[%s761 + $0xb0] sm:$0xff]
    %v785 = vld [vmem:[%s761 + $0xb8] sm:$0xff]
    %v787 = vsel %vm375, %v728, 0
    %v790 = vsel %vm375, %v733, 0
    %v793 = vsel %vm375, %v738, 0
    %v796 = vsel %vm375, %v743, 0
    %v799 = vsel %vm375, %v748, 0
    %v802 = vsel %vm375, %v753, 0
    %v805 = vsel %vm375, %v758, 0
    %807 = vmatprep.subr.mxu0 %v763
    %808 = vmatpush1.msra.mxu0 %v762
    %809 = vmatprep.subr.mxu0 %v765
    %810 = vmatpush1.msra.mxu0 %v764
    %811 = vmatprep.subr.mxu0 %v767
    %812 = vmatpush1.msra.mxu0 %v766
    %813 = vmatprep.subr.mxu0 %v769
    %814 = vmatpush1.msra.mxu0 %v768
    %815 = vmatprep.subr.mxu0 %v771
    %816 = vmatpush1.msra.mxu0 %v770
    %817 = vmatprep.subr.mxu0 %v773
    %818 = vmatpush1.msra.mxu0 %v772
    %819 = vmatprep.subr.mxu0 %v775
    %820 = vmatpush1.msra.mxu0 %v774
    %821 = vmatprep.subr.mxu0 %v777
    %822 = vmatpush1.msra.mxu0 %v776
    %823 = vmatprep.subr.mxu0 %v779
    %824 = vmatpush1.msra.mxu0 %v778
    %825 = vmatprep.subr.mxu0 %v781
    %826 = vmatpush1.msra.mxu0 %v780
    %827 = vmatprep.subr.mxu0 %v783
    %828 = vmatpush1.msra.mxu0 %v782
    %829 = vmatprep.subr.mxu0 %v785
    %830 = vmatpush1.msra.mxu0 %v784
    %831 = vmatprep.subr.mxu0 0.0
    %832 = vmatpush1.msra.mxu0 0.0
    %833 = vmatprep.subr.mxu0 0.0
    %834 = vmatpush1.msra.mxu0 0.0
    %835 = vmatprep.subr.mxu0 0.0
    %836 = vmatpush1.msra.mxu0 0.0
    %837 = vmatprep.subr.mxu0 0.0
    %838 = vmatpush1.msra.mxu0 0.0
    %839 = vmatprep.subr.mxu0 0.0
    %840 = vmatpush1.msra.mxu0 0.0
    %841 = vmatprep.subr.mxu0 0.0
    %842 = vmatpush1.msra.mxu0 0.0
    %843 = vmatprep.subr.mxu0 0.0
    %844 = vmatpush1.msra.mxu0 0.0
    %845 = vmatprep.subr.mxu0 0.0
    %846 = vmatpush1.msra.mxu0 0.0
    %847 = vmatprep.subr.mxu0 0.0
    %848 = vmatpush1.msra.mxu0 0.0
    %849 = vmatprep.subr.mxu0 0.0
    %850 = vmatpush1.msra.mxu0 0.0
    %851 = vmatprep.subr.mxu0 0.0
    %852 = vmatpush1.msra.mxu0 0.0
    %853 = vmatprep.subr.mxu0 0.0
    %854 = vmatpush1.msra.mxu0 0.0
    %855 = vmatprep.subr.mxu0 0.0
    %856 = vmatpush1.msra.mxu0 0.0
    %857 = vmatprep.subr.mxu0 0.0
    %858 = vmatpush1.msra.mxu0 0.0
    %859 = vmatprep.subr.mxu0 0.0
    %860 = vmatpush1.msra.mxu0 0.0
    %861 = vmatprep.subr.mxu0 0.0
    %862 = vmatpush1.msra.mxu0 0.0
    %863 = vmatprep.subr.mxu0 0.0
    %864 = vmatpush1.msra.mxu0 0.0
    %865 = vmatprep.subr.mxu0 0.0
    %866 = vmatpush1.msra.mxu0 0.0
    %867 = vmatprep.subr.mxu0 0.0
    %868 = vmatpush1.msra.mxu0 0.0
    %869 = vmatprep.subr.mxu0 0.0
    %870 = vmatpush1.msra.mxu0 0.0
    %871 = vmatprep.mubr.f32.mxu0 0.0
    %872 = vmatmul.mubr.f32.gmra.mrb[0].mxu0 %v787
    %v873 = vpop.f32.mrb[0].mxu0
    %v874 = vadd.f32 0.0, %v873
    %v875 = vpop.f32.mrb[0].mxu0
    %v876 = vadd.f32 0.0, %v875
    %877 = vmatprep.mubr.f32.mxu0 0.0
    %878 = vmatmul.mubr.f32.gmra.mrb[0].mxu0 %v790
    %v879 = vpop.f32.mrb[0].mxu0
    %v880 = vadd.f32 0.0, %v879
    %v881 = vpop.f32.mrb[0].mxu0
    %v882 = vadd.f32 0.0, %v881
    %883 = vmatprep.mubr.f32.mxu0 0.0
    %884 = vmatmul.mubr.f32.gmra.mrb[0].mxu0 %v793
    %v885 = vpop.f32.mrb[0].mxu0
    %v886 = vadd.f32 0.0, %v885
    %v887 = vpop.f32.mrb[0].mxu0
    %v888 = vadd.f32 0.0, %v887
    %889 = vmatprep.mubr.f32.mxu0 0.0
    %890 = vmatmul.mubr.f32.gmra.mrb[0].mxu0 %v796
    %v891 = vpop.f32.mrb[0].mxu0
    %v892 = vadd.f32 0.0, %v891
    %v893 = vpop.f32.mrb[0].mxu0
    %v894 = vadd.f32 0.0, %v893
    %895 = vmatprep.mubr.f32.mxu0 0.0
    %896 = vmatmul.mubr.f32.gmra.mrb[0].mxu0 %v799
    %v897 = vpop.f32.mrb[0].mxu0
    %v898 = vadd.f32 0.0, %v897
    %v899 = vpop.f32.mrb[0].mxu0
    %v900 = vadd.f32 0.0, %v899
    %901 = vmatprep.mubr.f32.mxu0 0.0
    %902 = vmatmul.mubr.f32.gmra.mrb[0].mxu0 %v802
    %v903 = vpop.f32.mrb[0].mxu0
    %v904 = vadd.f32 0.0, %v903
    %v905 = vpop.f32.mrb[0].mxu0
    %v906 = vadd.f32 0.0, %v905
    %907 = vmatprep.mubr.f32.mxu0 0.0
    %908 = vmatmul.mubr.f32.gmra.mrb[0].mxu0 %v805
    %v909 = vpop.f32.mrb[0].mxu0
    %v910 = vadd.f32 0.0, %v909
    %v911 = vpop.f32.mrb[0].mxu0
    %v912 = vadd.f32 0.0, %v911
    %913 = vdwg.mxu0
    %v914 = vadd.f32 %v592, %v874
    %v915 = vadd.f32 %v594, %v876
    %v916 = vadd.f32 %v598, %v880
    %v917 = vadd.f32 %v600, %v882
    %v918 = vadd.f32 %v604, %v886
    %v919 = vadd.f32 %v606, %v888
    %v920 = vadd.f32 %v610, %v892
    %v921 = vadd.f32 %v612, %v894
    %v922 = vadd.f32 %v616, %v898
    %v923 = vadd.f32 %v618, %v900
    %v924 = vadd.f32 %v622, %v904
    %v925 = vadd.f32 %v624, %v906
    %v926 = vadd.f32 %v628, %v910
    %v927 = vadd.f32 %v630, %v912
    %s928 = scalar_lea.vmem %s1, 168
    %v929 = vld [vmem:[%s928] sm:$0xff]
    %v930 = vld [vmem:[%s928 + $0x8] sm:$0xff]
    %v931 = vld [vmem:[%s928 + $0x10] sm:$0xff]
    %v932 = vld [vmem:[%s928 + $0x18] sm:$0xff]
    %v933 = vld [vmem:[%s928 + $0x20] sm:$0xff]
    %v934 = vld [vmem:[%s928 + $0x28] sm:$0xff]
    %v935 = vld [vmem:[%s928 + $0x30] sm:$0xff]
    %v937 = vsel %vm75, %v929, 0
    %v940 = vsel %vm75, %v930, 0
    %v943 = vsel %vm75, %v931, 0
    %v946 = vsel %vm75, %v932, 0
    %v949 = vsel %vm75, %v933, 0
    %v952 = vsel %vm75, %v934, 0
    %v955 = vsel %vm75, %v935, 0
    %957 = vmatprep.subr.mxu0 0.0
    %958 = vmatpush1.msra.mxu0 %v60
    %959 = vmatprep.subr.mxu0 0.0
    %960 = vmatpush1.msra.mxu0 %v61
    %961 = vmatprep.subr.mxu0 0.0
    %962 = vmatpush1.msra.mxu0 %v62
    %963 = vmatprep.subr.mxu0 0.0
    %964 = vmatpush1.msra.mxu0 %v63
    %965 = vmatprep.subr.mxu0 0.0
    %966 = vmatpush1.msra.mxu0 %v64
    %967 = vmatprep.subr.mxu0 0.0
    %968 = vmatpush1.msra.mxu0 %v65
    %969 = vmatprep.subr.mxu0 0.0
    %970 = vmatpush1.msra.mxu0 %v66
    %971 = vmatprep.subr.mxu0 0.0
    %972 = vmatpush1.msra.mxu0 %v67
    %973 = vmatprep.subr.mxu0 0.0
    %974 = vmatpush1.msra.mxu0 0.0
    %975 = vmatprep.subr.mxu0 0.0
    %976 = vmatpush1.msra.mxu0 0.0
    %977 = vmatprep.subr.mxu0 0.0
    %978 = vmatpush1.msra.mxu0 0.0
    %979 = vmatprep.subr.mxu0 0.0
    %980 = vmatpush1.msra.mxu0 0.0
    %981 = vmatprep.subr.mxu0 0.0
    %982 = vmatpush1.msra.mxu0 0.0
    %983 = vmatprep.subr.mxu0 0.0
    %984 = vmatpush1.msra.mxu0 0.0
    %985 = vmatprep.subr.mxu0 0.0
    %986 = vmatpush1.msra.mxu0 0.0
    %987 = vmatprep.subr.mxu0 0.0
    %988 = vmatpush1.msra.mxu0 0.0
    %989 = vmatprep.subr.mxu0 0.0
    %990 = vmatpush1.msra.mxu0 0.0
    %991 = vmatprep.subr.mxu0 0.0
    %992 = vmatpush1.msra.mxu0 0.0
    %993 = vmatprep.subr.mxu0 0.0
    %994 = vmatpush1.msra.mxu0 0.0
    %995 = vmatprep.subr.mxu0 0.0
    %996 = vmatpush1.msra.mxu0 0.0
    %997 = vmatprep.subr.mxu0 0.0
    %998 = vmatpush1.msra.mxu0 0.0
    %999 = vmatprep.subr.mxu0 0.0
    %1000 = vmatpush1.msra.mxu0 0.0
    %1001 = vmatprep.subr.mxu0 0.0
    %1002 = vmatpush1.msra.mxu0 0.0
    %1003 = vmatprep.subr.mxu0 0.0
    %1004 = vmatpush1.msra.mxu0 0.0
    %1005 = vmatprep.subr.mxu0 0.0
    %1006 = vmatpush1.msra.mxu0 0.0
    %1007 = vmatprep.subr.mxu0 0.0
    %1008 = vmatpush1.msra.mxu0 0.0
    %1009 = vmatprep.subr.mxu0 0.0
    %1010 = vmatpush1.msra.mxu0 0.0
    %1011 = vmatprep.subr.mxu0 0.0
    %1012 = vmatpush1.msra.mxu0 0.0
    %1013 = vmatprep.subr.mxu0 0.0
    %1014 = vmatpush1.msra.mxu0 0.0
    %1015 = vmatprep.subr.mxu0 0.0
    %1016 = vmatpush1.msra.mxu0 0.0
    %1017 = vmatprep.subr.mxu0 0.0
    %1018 = vmatpush1.msra.mxu0 0.0
    %1019 = vmatprep.subr.mxu0 0.0
    %1020 = vmatpush1.msra.mxu0 0.0
    %1021 = vmatprep.mubr.f32.mxu0 0.0
    %1022 = vmatmul.mubr.f32.gmra.mrb[0].mxu0 %v937
    %v1023 = vpop.f32.mrb[0].mxu0
    %v1024 = vadd.f32 0.0, %v1023
    %v1025 = vpop.f32.mrb[0].mxu0
    %1026 = vmatprep.mubr.f32.mxu0 0.0
    %1027 = vmatmul.mubr.f32.gmra.mrb[0].mxu0 %v940
    %v1028 = vpop.f32.mrb[0].mxu0
    %v1029 = vadd.f32 0.0, %v1028
    %v1030 = vpop.f32.mrb[0].mxu0
    %1031 = vmatprep.mubr.f32.mxu0 0.0
    %1032 = vmatmul.mubr.f32.gmra.mrb[0].mxu0 %v943
    %v1033 = vpop.f32.mrb[0].mxu0
    %v1034 = vadd.f32 0.0, %v1033
    %v1035 = vpop.f32.mrb[0].mxu0
    %1036 = vmatprep.mubr.f32.mxu0 0.0
    %1037 = vmatmul.mubr.f32.gmra.mrb[0].mxu0 %v946
    %v1038 = vpop.f32.mrb[0].mxu0
    %v1039 = vadd.f32 0.0, %v1038
    %v1040 = vpop.f32.mrb[0].mxu0
    %1041 = vmatprep.mubr.f32.mxu0 0.0
    %1042 = vmatmul.mubr.f32.gmra.mrb[0].mxu0 %v949
    %v1043 = vpop.f32.mrb[0].mxu0
    %v1044 = vadd.f32 0.0, %v1043
    %v1045 = vpop.f32.mrb[0].mxu0
    %1046 = vmatprep.mubr.f32.mxu0 0.0
    %1047 = vmatmul.mubr.f32.gmra.mrb[0].mxu0 %v952
    %v1048 = vpop.f32.mrb[0].mxu0
    %v1049 = vadd.f32 0.0, %v1048
    %v1050 = vpop.f32.mrb[0].mxu0
    %1051 = vmatprep.mubr.f32.mxu0 0.0
    %1052 = vmatmul.mubr.f32.gmra.mrb[0].mxu0 %v955
    %v1053 = vpop.f32.mrb[0].mxu0
    %v1054 = vadd.f32 0.0, %v1053
    %v1055 = vpop.f32.mrb[0].mxu0
    %1056 = vdwg.mxu0
    %s1057 = scalar_lea.vmem %s2, 576
    %v1058 = vld [vmem:[%s1057] sm:$0xff]
    %v1059 = vld [vmem:[%s1057 + $0x8] sm:$0xff]
    %v1060 = vld [vmem:[%s1057 + $0x10] sm:$0xff]
    %v1061 = vld [vmem:[%s1057 + $0x18] sm:$0xff]
    %v1062 = vld [vmem:[%s1057 + $0x20] sm:$0xff]
    %v1063 = vld [vmem:[%s1057 + $0x28] sm:$0xff]
    %v1064 = vld [vmem:[%s1057 + $0x30] sm:$0xff]
    %v1065 = vld [vmem:[%s1057 + $0x38] sm:$0xff]
    %v1066 = vld [vmem:[%s1057 + $0x40] sm:$0xff]
    %v1067 = vld [vmem:[%s1057 + $0x48] sm:$0xff]
    %v1068 = vld [vmem:[%s1057 + $0x50] sm:$0xff]
    %v1069 = vld [vmem:[%s1057 + $0x58] sm:$0xff]
    %v1070 = vld [vmem:[%s1057 + $0x60] sm:$0xff]
    %v1071 = vld [vmem:[%s1057 + $0x68] sm:$0xff]
    %v1072 = vld [vmem:[%s1057 + $0x70] sm:$0xff]
    %v1073 = vld [vmem:[%s1057 + $0x78] sm:$0xff]
    %v1074 = vld [vmem:[%s1057 + $0x80] sm:$0xff]
    %v1075 = vld [vmem:[%s1057 + $0x88] sm:$0xff]
    %v1076 = vld [vmem:[%s1057 + $0x90] sm:$0xff]
    %v1077 = vld [vmem:[%s1057 + $0x98] sm:$0xff]
    %v1078 = vld [vmem:[%s1057 + $0xa0] sm:$0xff]
    %v1079 = vld [vmem:[%s1057 + $0xa8] sm:$0xff]
    %v1080 = vld [vmem:[%s1057 + $0xb0] sm:$0xff]
    %v1081 = vld [vmem:[%s1057 + $0xb8] sm:$0xff]
    %v1083 = vsel %vm375, %v1024, 0
    %v1086 = vsel %vm375, %v1029, 0
    %v1089 = vsel %vm375, %v1034, 0
    %v1092 = vsel %vm375, %v1039, 0
    %v1095 = vsel %vm375, %v1044, 0
    %v1098 = vsel %vm375, %v1049, 0
    %v1101 = vsel %vm375, %v1054, 0
    %1103 = vmatprep.subr.mxu0 %v1059
    %1104 = vmatpush1.msra.mxu0 %v1058
    %1105 = vmatprep.subr.mxu0 %v1061
    %1106 = vmatpush1.msra.mxu0 %v1060
    %1107 = vmatprep.subr.mxu0 %v1063
    %1108 = vmatpush1.msra.mxu0 %v1062
    %1109 = vmatprep.subr.mxu0 %v1065
    %1110 = vmatpush1.msra.mxu0 %v1064
    %1111 = vmatprep.subr.mxu0 %v1067
    %1112 = vmatpush1.msra.mxu0 %v1066
    %1113 = vmatprep.subr.mxu0 %v1069
    %1114 = vmatpush1.msra.mxu0 %v1068
    %1115 = vmatprep.subr.mxu0 %v1071
    %1116 = vmatpush1.msra.mxu0 %v1070
    %1117 = vmatprep.subr.mxu0 %v1073
    %1118 = vmatpush1.msra.mxu0 %v1072
    %1119 = vmatprep.subr.mxu0 %v1075
    %1120 = vmatpush1.msra.mxu0 %v1074
    %1121 = vmatprep.subr.mxu0 %v1077
    %1122 = vmatpush1.msra.mxu0 %v1076
    %1123 = vmatprep.subr.mxu0 %v1079
    %1124 = vmatpush1.msra.mxu0 %v1078
    %1125 = vmatprep.subr.mxu0 %v1081
    %1126 = vmatpush1.msra.mxu0 %v1080
    %1127 = vmatprep.subr.mxu0 0.0
    %1128 = vmatpush1.msra.mxu0 0.0
    %1129 = vmatprep.subr.mxu0 0.0
    %1130 = vmatpush1.msra.mxu0 0.0
    %1131 = vmatprep.subr.mxu0 0.0
    %1132 = vmatpush1.msra.mxu0 0.0
    %1133 = vmatprep.subr.mxu0 0.0
    %1134 = vmatpush1.msra.mxu0 0.0
    %1135 = vmatprep.subr.mxu0 0.0
    %1136 = vmatpush1.msra.mxu0 0.0
    %1137 = vmatprep.subr.mxu0 0.0
    %1138 = vmatpush1.msra.mxu0 0.0
    %1139 = vmatprep.subr.mxu0 0.0
    %1140 = vmatpush1.msra.mxu0 0.0
    %1141 = vmatprep.subr.mxu0 0.0
    %1142 = vmatpush1.msra.mxu0 0.0
    %1143 = vmatprep.subr.mxu0 0.0
    %1144 = vmatpush1.msra.mxu0 0.0
    %1145 = vmatprep.subr.mxu0 0.0
    %1146 = vmatpush1.msra.mxu0 0.0
    %1147 = vmatprep.subr.mxu0 0.0
    %1148 = vmatpush1.msra.mxu0 0.0
    %1149 = vmatprep.subr.mxu0 0.0
    %1150 = vmatpush1.msra.mxu0 0.0
    %1151 = vmatprep.subr.mxu0 0.0
    %1152 = vmatpush1.msra.mxu0 0.0
    %1153 = vmatprep.subr.mxu0 0.0
    %1154 = vmatpush1.msra.mxu0 0.0
    %1155 = vmatprep.subr.mxu0 0.0
    %1156 = vmatpush1.msra.mxu0 0.0
    %1157 = vmatprep.subr.mxu0 0.0
    %1158 = vmatpush1.msra.mxu0 0.0
    %1159 = vmatprep.subr.mxu0 0.0
    %1160 = vmatpush1.msra.mxu0 0.0
    %1161 = vmatprep.subr.mxu0 0.0
    %1162 = vmatpush1.msra.mxu0 0.0
    %1163 = vmatprep.subr.mxu0 0.0
    %1164 = vmatpush1.msra.mxu0 0.0
    %1165 = vmatprep.subr.mxu0 0.0
    %1166 = vmatpush1.msra.mxu0 0.0
    %1167 = vmatprep.mubr.f32.mxu0 0.0
    %1168 = vmatmul.mubr.f32.gmra.mrb[0].mxu0 %v1083
    %v1169 = vpop.f32.mrb[0].mxu0
    %v1170 = vadd.f32 0.0, %v1169
    %v1171 = vpop.f32.mrb[0].mxu0
    %v1172 = vadd.f32 0.0, %v1171
    %1173 = vmatprep.mubr.f32.mxu0 0.0
    %1174 = vmatmul.mubr.f32.gmra.mrb[0].mxu0 %v1086
    %v1175 = vpop.f32.mrb[0].mxu0
    %v1176 = vadd.f32 0.0, %v1175
    %v1177 = vpop.f32.mrb[0].mxu0
    %v1178 = vadd.f32 0.0, %v1177
    %1179 = vmatprep.mubr.f32.mxu0 0.0
    %1180 = vmatmul.mubr.f32.gmra.mrb[0].mxu0 %v1089
    %v1181 = vpop.f32.mrb[0].mxu0
    %v1182 = vadd.f32 0.0, %v1181
    %v1183 = vpop.f32.mrb[0].mxu0
    %v1184 = vadd.f32 0.0, %v1183
    %1185 = vmatprep.mubr.f32.mxu0 0.0
    %1186 = vmatmul.mubr.f32.gmra.mrb[0].mxu0 %v1092
    %v1187 = vpop.f32.mrb[0].mxu0
    %v1188 = vadd.f32 0.0, %v1187
    %v1189 = vpop.f32.mrb[0].mxu0
    %v1190 = vadd.f32 0.0, %v1189
    %1191 = vmatprep.mubr.f32.mxu0 0.0
    %1192 = vmatmul.mubr.f32.gmra.mrb[0].mxu0 %v1095
    %v1193 = vpop.f32.mrb[0].mxu0
    %v1194 = vadd.f32 0.0, %v1193
    %v1195 = vpop.f32.mrb[0].mxu0
    %v1196 = vadd.f32 0.0, %v1195
    %1197 = vmatprep.mubr.f32.mxu0 0.0
    %1198 = vmatmul.mubr.f32.gmra.mrb[0].mxu0 %v1098
    %v1199 = vpop.f32.mrb[0].mxu0
    %v1200 = vadd.f32 0.0, %v1199
    %v1201 = vpop.f32.mrb[0].mxu0
    %v1202 = vadd.f32 0.0, %v1201
    %1203 = vmatprep.mubr.f32.mxu0 0.0
    %1204 = vmatmul.mubr.f32.gmra.mrb[0].mxu0 %v1101
    %v1205 = vpop.f32.mrb[0].mxu0
    %v1206 = vadd.f32 0.0, %v1205
    %v1207 = vpop.f32.mrb[0].mxu0
    %v1208 = vadd.f32 0.0, %v1207
    %1209 = vdwg.mxu0
    %v1210 = vadd.f32 %v914, %v1170
    %v1211 = vadd.f32 %v915, %v1172
    %v1212 = vadd.f32 %v916, %v1176
    %v1213 = vadd.f32 %v917, %v1178
    %v1214 = vadd.f32 %v918, %v1182
    %v1215 = vadd.f32 %v919, %v1184
    %v1216 = vadd.f32 %v920, %v1188
    %v1217 = vadd.f32 %v921, %v1190
    %v1218 = vadd.f32 %v922, %v1194
    %v1219 = vadd.f32 %v923, %v1196
    %v1220 = vadd.f32 %v924, %v1200
    %v1221 = vadd.f32 %v925, %v1202
    %v1222 = vadd.f32 %v926, %v1206
    %v1223 = vadd.f32 %v927, %v1208
    %s1224 = scalar_lea.vmem %s1, 224
    %v1225 = vld [vmem:[%s1224] sm:$0xff]
    %v1226 = vld [vmem:[%s1224 + $0x8] sm:$0xff]
    %v1227 = vld [vmem:[%s1224 + $0x10] sm:$0xff]
    %v1228 = vld [vmem:[%s1224 + $0x18] sm:$0xff]
    %v1229 = vld [vmem:[%s1224 + $0x20] sm:$0xff]
    %v1230 = vld [vmem:[%s1224 + $0x28] sm:$0xff]
    %v1231 = vld [vmem:[%s1224 + $0x30] sm:$0xff]
    %v1233 = vsel %vm75, %v1225, 0
    %v1236 = vsel %vm75, %v1226, 0
    %v1239 = vsel %vm75, %v1227, 0
    %v1242 = vsel %vm75, %v1228, 0
    %v1245 = vsel %vm75, %v1229, 0
    %v1248 = vsel %vm75, %v1230, 0
    %v1251 = vsel %vm75, %v1231, 0
    %1253 = vmatprep.subr.mxu0 0.0
    %1254 = vmatpush1.msra.mxu0 %v60
    %1255 = vmatprep.subr.mxu0 0.0
    %1256 = vmatpush1.msra.mxu0 %v61
    %1257 = vmatprep.subr.mxu0 0.0
    %1258 = vmatpush1.msra.mxu0 %v62
    %1259 = vmatprep.subr.mxu0 0.0
    %1260 = vmatpush1.msra.mxu0 %v63
    %1261 = vmatprep.subr.mxu0 0.0
    %1262 = vmatpush1.msra.mxu0 %v64
    %1263 = vmatprep.subr.mxu0 0.0
    %1264 = vmatpush1.msra.mxu0 %v65
    %1265 = vmatprep.subr.mxu0 0.0
    %1266 = vmatpush1.msra.mxu0 %v66
    %1267 = vmatprep.subr.mxu0 0.0
    %1268 = vmatpush1.msra.mxu0 %v67
    %1269 = vmatprep.subr.mxu0 0.0
    %1270 = vmatpush1.msra.mxu0 0.0
    %1271 = vmatprep.subr.mxu0 0.0
    %1272 = vmatpush1.msra.mxu0 0.0
    %1273 = vmatprep.subr.mxu0 0.0
    %1274 = vmatpush1.msra.mxu0 0.0
    %1275 = vmatprep.subr.mxu0 0.0
    %1276 = vmatpush1.msra.mxu0 0.0
    %1277 = vmatprep.subr.mxu0 0.0
    %1278 = vmatpush1.msra.mxu0 0.0
    %1279 = vmatprep.subr.mxu0 0.0
    %1280 = vmatpush1.msra.mxu0 0.0
    %1281 = vmatprep.subr.mxu0 0.0
    %1282 = vmatpush1.msra.mxu0 0.0
    %1283 = vmatprep.subr.mxu0 0.0
    %1284 = vmatpush1.msra.mxu0 0.0
    %1285 = vmatprep.subr.mxu0 0.0
    %1286 = vmatpush1.msra.mxu0 0.0
    %1287 = vmatprep.subr.mxu0 0.0
    %1288 = vmatpush1.msra.mxu0 0.0
    %1289 = vmatprep.subr.mxu0 0.0
    %1290 = vmatpush1.msra.mxu0 0.0
    %1291 = vmatprep.subr.mxu0 0.0
    %1292 = vmatpush1.msra.mxu0 0.0
    %1293 = vmatprep.subr.mxu0 0.0
    %1294 = vmatpush1.msra.mxu0 0.0
    %1295 = vmatprep.subr.mxu0 0.0
    %1296 = vmatpush1.msra.mxu0 0.0
    %1297 = vmatprep.subr.mxu0 0.0
    %1298 = vmatpush1.msra.mxu0 0.0
    %1299 = vmatprep.subr.mxu0 0.0
    %1300 = vmatpush1.msra.mxu0 0.0
    %1301 = vmatprep.subr.mxu0 0.0
    %1302 = vmatpush1.msra.mxu0 0.0
    %1303 = vmatprep.subr.mxu0 0.0
    %1304 = vmatpush1.msra.mxu0 0.0
    %1305 = vmatprep.subr.mxu0 0.0
    %1306 = vmatpush1.msra.mxu0 0.0
    %1307 = vmatprep.subr.mxu0 0.0
    %1308 = vmatpush1.msra.mxu0 0.0
    %1309 = vmatprep.subr.mxu0 0.0
    %1310 = vmatpush1.msra.mxu0 0.0
    %1311 = vmatprep.subr.mxu0 0.0
    %1312 = vmatpush1.msra.mxu0 0.0
    %1313 = vmatprep.subr.mxu0 0.0
    %1314 = vmatpush1.msra.mxu0 0.0
    %1315 = vmatprep.subr.mxu0 0.0
    %1316 = vmatpush1.msra.mxu0 0.0
    %1317 = vmatprep.mubr.f32.mxu0 0.0
    %1318 = vmatmul.mubr.f32.gmra.mrb[0].mxu0 %v1233
    %v1319 = vpop.f32.mrb[0].mxu0
    %v1320 = vadd.f32 0.0, %v1319
    %v1321 = vpop.f32.mrb[0].mxu0
    %1322 = vmatprep.mubr.f32.mxu0 0.0
    %1323 = vmatmul.mubr.f32.gmra.mrb[0].mxu0 %v1236
    %v1324 = vpop.f32.mrb[0].mxu0
    %v1325 = vadd.f32 0.0, %v1324
    %v1326 = vpop.f32.mrb[0].mxu0
    %1327 = vmatprep.mubr.f32.mxu0 0.0
    %1328 = vmatmul.mubr.f32.gmra.mrb[0].mxu0 %v1239
    %v1329 = vpop.f32.mrb[0].mxu0
    %v1330 = vadd.f32 0.0, %v1329
    %v1331 = vpop.f32.mrb[0].mxu0
    %1332 = vmatprep.mubr.f32.mxu0 0.0
    %1333 = vmatmul.mubr.f32.gmra.mrb[0].mxu0 %v1242
    %v1334 = vpop.f32.mrb[0].mxu0
    %v1335 = vadd.f32 0.0, %v1334
    %v1336 = vpop.f32.mrb[0].mxu0
    %1337 = vmatprep.mubr.f32.mxu0 0.0
    %1338 = vmatmul.mubr.f32.gmra.mrb[0].mxu0 %v1245
    %v1339 = vpop.f32.mrb[0].mxu0
    %v1340 = vadd.f32 0.0, %v1339
    %v1341 = vpop.f32.mrb[0].mxu0
    %1342 = vmatprep.mubr.f32.mxu0 0.0
    %1343 = vmatmul.mubr.f32.gmra.mrb[0].mxu0 %v1248
    %v1344 = vpop.f32.mrb[0].mxu0
    %v1345 = vadd.f32 0.0, %v1344
    %v1346 = vpop.f32.mrb[0].mxu0
    %1347 = vmatprep.mubr.f32.mxu0 0.0
    %1348 = vmatmul.mubr.f32.gmra.mrb[0].mxu0 %v1251
    %v1349 = vpop.f32.mrb[0].mxu0
    %v1350 = vadd.f32 0.0, %v1349
    %v1351 = vpop.f32.mrb[0].mxu0
    %1352 = vdwg.mxu0
    %s1353 = scalar_lea.vmem %s2, 768
    %v1354 = vld [vmem:[%s1353] sm:$0xff]
    %v1355 = vld [vmem:[%s1353 + $0x8] sm:$0xff]
    %v1356 = vld [vmem:[%s1353 + $0x10] sm:$0xff]
    %v1357 = vld [vmem:[%s1353 + $0x18] sm:$0xff]
    %v1358 = vld [vmem:[%s1353 + $0x20] sm:$0xff]
    %v1359 = vld [vmem:[%s1353 + $0x28] sm:$0xff]
    %v1360 = vld [vmem:[%s1353 + $0x30] sm:$0xff]
    %v1361 = vld [vmem:[%s1353 + $0x38] sm:$0xff]
    %v1362 = vld [vmem:[%s1353 + $0x40] sm:$0xff]
    %v1363 = vld [vmem:[%s1353 + $0x48] sm:$0xff]
    %v1364 = vld [vmem:[%s1353 + $0x50] sm:$0xff]
    %v1365 = vld [vmem:[%s1353 + $0x58] sm:$0xff]
    %v1366 = vld [vmem:[%s1353 + $0x60] sm:$0xff]
    %v1367 = vld [vmem:[%s1353 + $0x68] sm:$0xff]
    %v1368 = vld [vmem:[%s1353 + $0x70] sm:$0xff]
    %v1369 = vld [vmem:[%s1353 + $0x78] sm:$0xff]
    %v1370 = vld [vmem:[%s1353 + $0x80] sm:$0xff]
    %v1371 = vld [vmem:[%s1353 + $0x88] sm:$0xff]
    %v1372 = vld [vmem:[%s1353 + $0x90] sm:$0xff]
    %v1373 = vld [vmem:[%s1353 + $0x98] sm:$0xff]
    %v1374 = vld [vmem:[%s1353 + $0xa0] sm:$0xff]
    %v1375 = vld [vmem:[%s1353 + $0xa8] sm:$0xff]
    %v1376 = vld [vmem:[%s1353 + $0xb0] sm:$0xff]
    %v1377 = vld [vmem:[%s1353 + $0xb8] sm:$0xff]
    %v1379 = vsel %vm375, %v1320, 0
    %v1382 = vsel %vm375, %v1325, 0
    %v1385 = vsel %vm375, %v1330, 0
    %v1388 = vsel %vm375, %v1335, 0
    %v1391 = vsel %vm375, %v1340, 0
    %v1394 = vsel %vm375, %v1345, 0
    %v1397 = vsel %vm375, %v1350, 0
    %1399 = vmatprep.subr.mxu0 %v1355
    %1400 = vmatpush1.msra.mxu0 %v1354
    %1401 = vmatprep.subr.mxu0 %v1357
    %1402 = vmatpush1.msra.mxu0 %v1356
    %1403 = vmatprep.subr.mxu0 %v1359
    %1404 = vmatpush1.msra.mxu0 %v1358
    %1405 = vmatprep.subr.mxu0 %v1361
    %1406 = vmatpush1.msra.mxu0 %v1360
    %1407 = vmatprep.subr.mxu0 %v1363
    %1408 = vmatpush1.msra.mxu0 %v1362
    %1409 = vmatprep.subr.mxu0 %v1365
    %1410 = vmatpush1.msra.mxu0 %v1364
    %1411 = vmatprep.subr.mxu0 %v1367
    %1412 = vmatpush1.msra.mxu0 %v1366
    %1413 = vmatprep.subr.mxu0 %v1369
    %1414 = vmatpush1.msra.mxu0 %v1368
    %1415 = vmatprep.subr.mxu0 %v1371
    %1416 = vmatpush1.msra.mxu0 %v1370
    %1417 = vmatprep.subr.mxu0 %v1373
    %1418 = vmatpush1.msra.mxu0 %v1372
    %1419 = vmatprep.subr.mxu0 %v1375
    %1420 = vmatpush1.msra.mxu0 %v1374
    %1421 = vmatprep.subr.mxu0 %v1377
    %1422 = vmatpush1.msra.mxu0 %v1376
    %1423 = vmatprep.subr.mxu0 0.0
    %1424 = vmatpush1.msra.mxu0 0.0
    %1425 = vmatprep.subr.mxu0 0.0
    %1426 = vmatpush1.msra.mxu0 0.0
    %1427 = vmatprep.subr.mxu0 0.0
    %1428 = vmatpush1.msra.mxu0 0.0
    %1429 = vmatprep.subr.mxu0 0.0
    %1430 = vmatpush1.msra.mxu0 0.0
    %1431 = vmatprep.subr.mxu0 0.0
    %1432 = vmatpush1.msra.mxu0 0.0
    %1433 = vmatprep.subr.mxu0 0.0
    %1434 = vmatpush1.msra.mxu0 0.0
    %1435 = vmatprep.subr.mxu0 0.0
    %1436 = vmatpush1.msra.mxu0 0.0
    %1437 = vmatprep.subr.mxu0 0.0
    %1438 = vmatpush1.msra.mxu0 0.0
    %1439 = vmatprep.subr.mxu0 0.0
    %1440 = vmatpush1.msra.mxu0 0.0
    %1441 = vmatprep.subr.mxu0 0.0
    %1442 = vmatpush1.msra.mxu0 0.0
    %1443 = vmatprep.subr.mxu0 0.0
    %1444 = vmatpush1.msra.mxu0 0.0
    %1445 = vmatprep.subr.mxu0 0.0
    %1446 = vmatpush1.msra.mxu0 0.0
    %1447 = vmatprep.subr.mxu0 0.0
    %1448 = vmatpush1.msra.mxu0 0.0
    %1449 = vmatprep.subr.mxu0 0.0
    %1450 = vmatpush1.msra.mxu0 0.0
    %1451 = vmatprep.subr.mxu0 0.0
    %1452 = vmatpush1.msra.mxu0 0.0
    %1453 = vmatprep.subr.mxu0 0.0
    %1454 = vmatpush1.msra.mxu0 0.0
    %1455 = vmatprep.subr.mxu0 0.0
    %1456 = vmatpush1.msra.mxu0 0.0
    %1457 = vmatprep.subr.mxu0 0.0
    %1458 = vmatpush1.msra.mxu0 0.0
    %1459 = vmatprep.subr.mxu0 0.0
    %1460 = vmatpush1.msra.mxu0 0.0
    %1461 = vmatprep.subr.mxu0 0.0
    %1462 = vmatpush1.msra.mxu0 0.0
    %1463 = vmatprep.mubr.f32.mxu0 0.0
    %1464 = vmatmul.mubr.f32.gmra.mrb[0].mxu0 %v1379
    %v1465 = vpop.f32.mrb[0].mxu0
    %v1466 = vadd.f32 0.0, %v1465
    %v1467 = vpop.f32.mrb[0].mxu0
    %v1468 = vadd.f32 0.0, %v1467
    %1469 = vmatprep.mubr.f32.mxu0 0.0
    %1470 = vmatmul.mubr.f32.gmra.mrb[0].mxu0 %v1382
    %v1471 = vpop.f32.mrb[0].mxu0
    %v1472 = vadd.f32 0.0, %v1471
    %v1473 = vpop.f32.mrb[0].mxu0
    %v1474 = vadd.f32 0.0, %v1473
    %1475 = vmatprep.mubr.f32.mxu0 0.0
    %1476 = vmatmul.mubr.f32.gmra.mrb[0].mxu0 %v1385
    %v1477 = vpop.f32.mrb[0].mxu0
    %v1478 = vadd.f32 0.0, %v1477
    %v1479 = vpop.f32.mrb[0].mxu0
    %v1480 = vadd.f32 0.0, %v1479
    %1481 = vmatprep.mubr.f32.mxu0 0.0
    %1482 = vmatmul.mubr.f32.gmra.mrb[0].mxu0 %v1388
    %v1483 = vpop.f32.mrb[0].mxu0
    %v1484 = vadd.f32 0.0, %v1483
    %v1485 = vpop.f32.mrb[0].mxu0
    %v1486 = vadd.f32 0.0, %v1485
    %1487 = vmatprep.mubr.f32.mxu0 0.0
    %1488 = vmatmul.mubr.f32.gmra.mrb[0].mxu0 %v1391
    %v1489 = vpop.f32.mrb[0].mxu0
    %v1490 = vadd.f32 0.0, %v1489
    %v1491 = vpop.f32.mrb[0].mxu0
    %v1492 = vadd.f32 0.0, %v1491
    %1493 = vmatprep.mubr.f32.mxu0 0.0
    %1494 = vmatmul.mubr.f32.gmra.mrb[0].mxu0 %v1394
    %v1495 = vpop.f32.mrb[0].mxu0
    %v1496 = vadd.f32 0.0, %v1495
    %v1497 = vpop.f32.mrb[0].mxu0
    %v1498 = vadd.f32 0.0, %v1497
    %1499 = vmatprep.mubr.f32.mxu0 0.0
    %1500 = vmatmul.mubr.f32.gmra.mrb[0].mxu0 %v1397
    %v1501 = vpop.f32.mrb[0].mxu0
    %v1502 = vadd.f32 0.0, %v1501
    %v1503 = vpop.f32.mrb[0].mxu0
    %v1504 = vadd.f32 0.0, %v1503
    %1505 = vdwg.mxu0
    %v1506 = vadd.f32 %v1210, %v1466
    %v1507 = vadd.f32 %v1211, %v1468
    %v1508 = vadd.f32 %v1212, %v1472
    %v1509 = vadd.f32 %v1213, %v1474
    %v1510 = vadd.f32 %v1214, %v1478
    %v1511 = vadd.f32 %v1215, %v1480
    %v1512 = vadd.f32 %v1216, %v1484
    %v1513 = vadd.f32 %v1217, %v1486
    %v1514 = vadd.f32 %v1218, %v1490
    %v1515 = vadd.f32 %v1219, %v1492
    %v1516 = vadd.f32 %v1220, %v1496
    %v1517 = vadd.f32 %v1221, %v1498
    %v1518 = vadd.f32 %v1222, %v1502
    %v1519 = vadd.f32 %v1223, %v1504
    %v1520 = vld [vmem:[%s4] sm:$0xff]
    %v1521 = vld [vmem:[%s4 + $0x8] sm:$0xff]
    %v1522 = vld [vmem:[%s4 + $0x10] sm:$0xff]
    %v1523 = vld [vmem:[%s4 + $0x18] sm:$0xf]
    %vm1524 = vcmask 457728
    %v1526 = vsel %vm1524, %v1520, 0
    %v1529 = vsel %vm1524, %v1521, 0
    %v1532 = vsel %vm1524, %v1522, 0
    %v1535 = vsel %vm1524, %v1523, 0
    %1537 = vmatprep.subr.mxu0 %v1507
    %1538 = vmatpush1.msra.mxu0 %v1506
    %1539 = vmatprep.subr.mxu0 %v1509
    %1540 = vmatpush1.msra.mxu0 %v1508
    %1541 = vmatprep.subr.mxu0 %v1511
    %1542 = vmatpush1.msra.mxu0 %v1510
    %1543 = vmatprep.subr.mxu0 %v1513
    %1544 = vmatpush1.msra.mxu0 %v1512
    %1545 = vmatprep.subr.mxu0 %v1515
    %1546 = vmatpush1.msra.mxu0 %v1514
    %1547 = vmatprep.subr.mxu0 %v1517
    %1548 = vmatpush1.msra.mxu0 %v1516
    %1549 = vmatprep.subr.mxu0 %v1519
    %1550 = vmatpush1.msra.mxu0 %v1518
    %1551 = vmatprep.subr.mxu0 0.0
    %1552 = vmatpush1.msra.mxu0 0.0
    %1553 = vmatprep.subr.mxu0 0.0
    %1554 = vmatpush1.msra.mxu0 0.0
    %1555 = vmatprep.subr.mxu0 0.0
    %1556 = vmatpush1.msra.mxu0 0.0
    %1557 = vmatprep.subr.mxu0 0.0
    %1558 = vmatpush1.msra.mxu0 0.0
    %1559 = vmatprep.subr.mxu0 0.0
    %1560 = vmatpush1.msra.mxu0 0.0
    %1561 = vmatprep.subr.mxu0 0.0
    %1562 = vmatpush1.msra.mxu0 0.0
    %1563 = vmatprep.subr.mxu0 0.0
    %1564 = vmatpush1.msra.mxu0 0.0
    %1565 = vmatprep.subr.mxu0 0.0
    %1566 = vmatpush1.msra.mxu0 0.0
    %1567 = vmatprep.subr.mxu0 0.0
    %1568 = vmatpush1.msra.mxu0 0.0
    %1569 = vmatprep.subr.mxu0 0.0
    %1570 = vmatpush1.msra.mxu0 0.0
    %1571 = vmatprep.subr.mxu0 0.0
    %1572 = vmatpush1.msra.mxu0 0.0
    %1573 = vmatprep.subr.mxu0 0.0
    %1574 = vmatpush1.msra.mxu0 0.0
    %1575 = vmatprep.subr.mxu0 0.0
    %1576 = vmatpush1.msra.mxu0 0.0
    %1577 = vmatprep.subr.mxu0 0.0
    %1578 = vmatpush1.msra.mxu0 0.0
    %1579 = vmatprep.subr.mxu0 0.0
    %1580 = vmatpush1.msra.mxu0 0.0
    %1581 = vmatprep.subr.mxu0 0.0
    %1582 = vmatpush1.msra.mxu0 0.0
    %1583 = vmatprep.subr.mxu0 0.0
    %1584 = vmatpush1.msra.mxu0 0.0
    %1585 = vmatprep.subr.mxu0 0.0
    %1586 = vmatpush1.msra.mxu0 0.0
    %1587 = vmatprep.subr.mxu0 0.0
    %1588 = vmatpush1.msra.mxu0 0.0
    %1589 = vmatprep.subr.mxu0 0.0
    %1590 = vmatpush1.msra.mxu0 0.0
    %1591 = vmatprep.subr.mxu0 0.0
    %1592 = vmatpush1.msra.mxu0 0.0
    %1593 = vmatprep.subr.mxu0 0.0
    %1594 = vmatpush1.msra.mxu0 0.0
    %1595 = vmatprep.subr.mxu0 0.0
    %1596 = vmatpush1.msra.mxu0 0.0
    %1597 = vmatprep.subr.mxu0 0.0
    %1598 = vmatpush1.msra.mxu0 0.0
    %1599 = vmatprep.subr.mxu0 0.0
    %1600 = vmatpush1.msra.mxu0 0.0
    %1601 = vmatprep.mubr.f32.mxu0 0.0
    %1602 = vmatmul.mubr.f32.gmra.mrb[0].mxu0 %v1526
    %v1603 = vpop.f32.mrb[0].mxu0
    %v1604 = vadd.f32 0.0, %v1603
    %v1605 = vpop.f32.mrb[0].mxu0
    %v1606 = vadd.f32 0.0, %v1605
    %1607 = vmatprep.mubr.f32.mxu0 0.0
    %1608 = vmatmul.mubr.f32.gmra.mrb[0].mxu0 %v1529
    %v1609 = vpop.f32.mrb[0].mxu0
    %v1610 = vadd.f32 0.0, %v1609
    %v1611 = vpop.f32.mrb[0].mxu0
    %v1612 = vadd.f32 0.0, %v1611
    %1613 = vmatprep.mubr.f32.mxu0 0.0
    %1614 = vmatmul.mubr.f32.gmra.mrb[0].mxu0 %v1532
    %v1615 = vpop.f32.mrb[0].mxu0
    %v1616 = vadd.f32 0.0, %v1615
    %v1617 = vpop.f32.mrb[0].mxu0
    %v1618 = vadd.f32 0.0, %v1617
    %1619 = vmatprep.mubr.f32.mxu0 0.0
    %1620 = vmatmul.mubr.f32.gmra.mrb[0].mxu0 %v1535
    %v1621 = vpop.f32.mrb[0].mxu0
    %v1622 = vadd.f32 0.0, %v1621
    %v1623 = vpop.f32.mrb[0].mxu0
    %v1624 = vadd.f32 0.0, %v1623
    %1625 = vdwg.mxu0
    %s1626 = scalar_lea.vmem %s4, 32
    %v1627 = vld [vmem:[%s1626] sm:$0xff]
    %v1628 = vld [vmem:[%s1626 + $0x8] sm:$0xff]
    %v1629 = vld [vmem:[%s1626 + $0x10] sm:$0xff]
    %v1630 = vld [vmem:[%s1626 + $0x18] sm:$0xf]
    %v1632 = vsel %vm1524, %v1627, 0
    %v1635 = vsel %vm1524, %v1628, 0
    %v1638 = vsel %vm1524, %v1629, 0
    %v1641 = vsel %vm1524, %v1630, 0
    %1643 = vmatprep.subr.mxu0 %v1507
    %1644 = vmatpush1.msra.mxu0 %v1506
    %1645 = vmatprep.subr.mxu0 %v1509
    %1646 = vmatpush1.msra.mxu0 %v1508
    %1647 = vmatprep.subr.mxu0 %v1511
    %1648 = vmatpush1.msra.mxu0 %v1510
    %1649 = vmatprep.subr.mxu0 %v1513
    %1650 = vmatpush1.msra.mxu0 %v1512
    %1651 = vmatprep.subr.mxu0 %v1515
    %1652 = vmatpush1.msra.mxu0 %v1514
    %1653 = vmatprep.subr.mxu0 %v1517
    %1654 = vmatpush1.msra.mxu0 %v1516
    %1655 = vmatprep.subr.mxu0 %v1519
    %1656 = vmatpush1.msra.mxu0 %v1518
    %1657 = vmatprep.subr.mxu0 0.0
    %1658 = vmatpush1.msra.mxu0 0.0
    %1659 = vmatprep.subr.mxu0 0.0
    %1660 = vmatpush1.msra.mxu0 0.0
    %1661 = vmatprep.subr.mxu0 0.0
    %1662 = vmatpush1.msra.mxu0 0.0
    %1663 = vmatprep.subr.mxu0 0.0
    %1664 = vmatpush1.msra.mxu0 0.0
    %1665 = vmatprep.subr.mxu0 0.0
    %1666 = vmatpush1.msra.mxu0 0.0
    %1667 = vmatprep.subr.mxu0 0.0
    %1668 = vmatpush1.msra.mxu0 0.0
    %1669 = vmatprep.subr.mxu0 0.0
    %1670 = vmatpush1.msra.mxu0 0.0
    %1671 = vmatprep.subr.mxu0 0.0
    %1672 = vmatpush1.msra.mxu0 0.0
    %1673 = vmatprep.subr.mxu0 0.0
    %1674 = vmatpush1.msra.mxu0 0.0
    %1675 = vmatprep.subr.mxu0 0.0
    %1676 = vmatpush1.msra.mxu0 0.0
    %1677 = vmatprep.subr.mxu0 0.0
    %1678 = vmatpush1.msra.mxu0 0.0
    %1679 = vmatprep.subr.mxu0 0.0
    %1680 = vmatpush1.msra.mxu0 0.0
    %1681 = vmatprep.subr.mxu0 0.0
    %1682 = vmatpush1.msra.mxu0 0.0
    %1683 = vmatprep.subr.mxu0 0.0
    %1684 = vmatpush1.msra.mxu0 0.0
    %1685 = vmatprep.subr.mxu0 0.0
    %1686 = vmatpush1.msra.mxu0 0.0
    %1687 = vmatprep.subr.mxu0 0.0
    %1688 = vmatpush1.msra.mxu0 0.0
    %1689 = vmatprep.subr.mxu0 0.0
    %1690 = vmatpush1.msra.mxu0 0.0
    %1691 = vmatprep.subr.mxu0 0.0
    %1692 = vmatpush1.msra.mxu0 0.0
    %1693 = vmatprep.subr.mxu0 0.0
    %1694 = vmatpush1.msra.mxu0 0.0
    %1695 = vmatprep.subr.mxu0 0.0
    %1696 = vmatpush1.msra.mxu0 0.0
    %1697 = vmatprep.subr.mxu0 0.0
    %1698 = vmatpush1.msra.mxu0 0.0
    %1699 = vmatprep.subr.mxu0 0.0
    %1700 = vmatpush1.msra.mxu0 0.0
    %1701 = vmatprep.subr.mxu0 0.0
    %1702 = vmatpush1.msra.mxu0 0.0
    %1703 = vmatprep.subr.mxu0 0.0
    %1704 = vmatpush1.msra.mxu0 0.0
    %1705 = vmatprep.subr.mxu0 0.0
    %1706 = vmatpush1.msra.mxu0 0.0
    %1707 = vmatprep.mubr.f32.mxu0 0.0
    %1708 = vmatmul.mubr.f32.gmra.mrb[0].mxu0 %v1632
    %v1709 = vpop.f32.mrb[0].mxu0
    %v1710 = vadd.f32 0.0, %v1709
    %v1711 = vpop.f32.mrb[0].mxu0
    %v1712 = vadd.f32 0.0, %v1711
    %1713 = vmatprep.mubr.f32.mxu0 0.0
    %1714 = vmatmul.mubr.f32.gmra.mrb[0].mxu0 %v1635
    %v1715 = vpop.f32.mrb[0].mxu0
    %v1716 = vadd.f32 0.0, %v1715
    %v1717 = vpop.f32.mrb[0].mxu0
    %v1718 = vadd.f32 0.0, %v1717
    %1719 = vmatprep.mubr.f32.mxu0 0.0
    %1720 = vmatmul.mubr.f32.gmra.mrb[0].mxu0 %v1638
    %v1721 = vpop.f32.mrb[0].mxu0
    %v1722 = vadd.f32 0.0, %v1721
    %v1723 = vpop.f32.mrb[0].mxu0
    %v1724 = vadd.f32 0.0, %v1723
    %1725 = vmatprep.mubr.f32.mxu0 0.0
    %1726 = vmatmul.mubr.f32.gmra.mrb[0].mxu0 %v1641
    %v1727 = vpop.f32.mrb[0].mxu0
    %v1728 = vadd.f32 0.0, %v1727
    %v1729 = vpop.f32.mrb[0].mxu0
    %v1730 = vadd.f32 0.0, %v1729
    %1731 = vdwg.mxu0
    %v1732 = vmax.f32 %v1604, %v1710
    %v1733 = vmax.f32 %v1606, %v1712
    %v1734 = vmax.f32 %v1610, %v1716
    %v1735 = vmax.f32 %v1612, %v1718
    %v1736 = vmax.f32 %v1616, %v1722
    %v1737 = vmax.f32 %v1618, %v1724
    %v1738 = vmax.f32 %v1622, %v1728
    %v1739 = vmax.f32 %v1624, %v1730
    %v1740 = vld [vmem:[%s5] sm:$0xff]
    %v1741 = vld [vmem:[%s5 + $0x8] sm:$0xff]
    %v1742 = vld [vmem:[%s5 + $0x10] sm:$0xff]
    %v1743 = vld [vmem:[%s5 + $0x18] sm:$0xff]
    %v1744 = vld [vmem:[%s5 + $0x20] sm:$0xff]
    %v1745 = vld [vmem:[%s5 + $0x28] sm:$0xff]
    %v1746 = vld [vmem:[%s5 + $0x30] sm:$0xff]
    %v1747 = vld [vmem:[%s5 + $0x38] sm:$0xff]
    %v1748 = vld [vmem:[%s5 + $0x40] sm:$0xff]
    %v1749 = vld [vmem:[%s5 + $0x48] sm:$0xff]
    %v1750 = vld [vmem:[%s5 + $0x50] sm:$0xff]
    %v1751 = vld [vmem:[%s5 + $0x58] sm:$0xff]
    %v1752 = vld [vmem:[%s5 + $0x60] sm:$0xff]
    %v1753 = vld [vmem:[%s5 + $0x68] sm:$0xff]
    %v1754 = vld [vmem:[%s5 + $0x70] sm:$0xff]
    %v1755 = vld [vmem:[%s5 + $0x78] sm:$0xff]
    %v1756 = vld [vmem:[%s5 + $0x80] sm:$0xff]
    %v1757 = vld [vmem:[%s5 + $0x88] sm:$0xff]
    %v1758 = vld [vmem:[%s5 + $0x90] sm:$0xff]
    %v1759 = vld [vmem:[%s5 + $0x98] sm:$0xff]
    %v1760 = vld [vmem:[%s5 + $0xa0] sm:$0xff]
    %vm1761 = vcmask 326656
    %v1763 = vsel %vm1761, %v1733, 0
    %v1766 = vsel %vm1761, %v1735, 0
    %v1769 = vsel %vm1761, %v1737, 0
    %v1772 = vsel %vm1761, %v1739, 0
    %1774 = vmatprep.subr.mxu0 0.0
    %1775 = vmatpush1.msra.mxu0 %v1740
    %1776 = vmatprep.subr.mxu0 0.0
    %1777 = vmatpush1.msra.mxu0 %v1741
    %1778 = vmatprep.subr.mxu0 0.0
    %1779 = vmatpush1.msra.mxu0 %v1742
    %1780 = vmatprep.subr.mxu0 0.0
    %1781 = vmatpush1.msra.mxu0 %v1743
    %1782 = vmatprep.subr.mxu0 0.0
    %1783 = vmatpush1.msra.mxu0 %v1744
    %1784 = vmatprep.subr.mxu0 0.0
    %1785 = vmatpush1.msra.mxu0 %v1745
    %1786 = vmatprep.subr.mxu0 0.0
    %1787 = vmatpush1.msra.mxu0 %v1746
    %1788 = vmatprep.subr.mxu0 0.0
    %1789 = vmatpush1.msra.mxu0 %v1747
    %1790 = vmatprep.subr.mxu0 0.0
    %1791 = vmatpush1.msra.mxu0 %v1748
    %1792 = vmatprep.subr.mxu0 0.0
    %1793 = vmatpush1.msra.mxu0 %v1749
    %1794 = vmatprep.subr.mxu0 0.0
    %1795 = vmatpush1.msra.mxu0 %v1750
    %1796 = vmatprep.subr.mxu0 0.0
    %1797 = vmatpush1.msra.mxu0 %v1751
    %1798 = vmatprep.subr.mxu0 0.0
    %1799 = vmatpush1.msra.mxu0 %v1752
    %1800 = vmatprep.subr.mxu0 0.0
    %1801 = vmatpush1.msra.mxu0 %v1753
    %1802 = vmatprep.subr.mxu0 0.0
    %1803 = vmatpush1.msra.mxu0 %v1754
    %1804 = vmatprep.subr.mxu0 0.0
    %1805 = vmatpush1.msra.mxu0 %v1755
    %1806 = vmatprep.subr.mxu0 0.0
    %1807 = vmatpush1.msra.mxu0 %v1756
    %1808 = vmatprep.subr.mxu0 0.0
    %1809 = vmatpush1.msra.mxu0 %v1757
    %1810 = vmatprep.subr.mxu0 0.0
    %1811 = vmatpush1.msra.mxu0 %v1758
    %1812 = vmatprep.subr.mxu0 0.0
    %1813 = vmatpush1.msra.mxu0 %v1759
    %1814 = vmatprep.subr.mxu0 0.0
    %1815 = vmatpush1.msra.mxu0 %v1760
    %1816 = vmatprep.subr.mxu0 0.0
    %1817 = vmatpush1.msra.mxu0 0.0
    %1818 = vmatprep.subr.mxu0 0.0
    %1819 = vmatpush1.msra.mxu0 0.0
    %1820 = vmatprep.subr.mxu0 0.0
    %1821 = vmatpush1.msra.mxu0 0.0
    %1822 = vmatprep.subr.mxu0 0.0
    %1823 = vmatpush1.msra.mxu0 0.0
    %1824 = vmatprep.subr.mxu0 0.0
    %1825 = vmatpush1.msra.mxu0 0.0
    %1826 = vmatprep.subr.mxu0 0.0
    %1827 = vmatpush1.msra.mxu0 0.0
    %1828 = vmatprep.subr.mxu0 0.0
    %1829 = vmatpush1.msra.mxu0 0.0
    %1830 = vmatprep.subr.mxu0 0.0
    %1831 = vmatpush1.msra.mxu0 0.0
    %1832 = vmatprep.subr.mxu0 0.0
    %1833 = vmatpush1.msra.mxu0 0.0
    %1834 = vmatprep.subr.mxu0 0.0
    %1835 = vmatpush1.msra.mxu0 0.0
    %1836 = vmatprep.subr.mxu0 0.0
    %1837 = vmatpush1.msra.mxu0 0.0
    %1838 = vmatprep.mubr.f32.mxu0 %v1763
    %1839 = vmatmul.mubr.f32.gmra.mrb[0].mxu0 %v1732
    %v1840 = vpop.f32.mrb[0].mxu0
    %v1841 = vadd.f32 0.0, %v1840
    %v1842 = vpop.f32.mrb[0].mxu0
    %1843 = vmatprep.mubr.f32.mxu0 %v1766
    %1844 = vmatmul.mubr.f32.gmra.mrb[0].mxu0 %v1734
    %v1845 = vpop.f32.mrb[0].mxu0
    %v1846 = vadd.f32 0.0, %v1845
    %v1847 = vpop.f32.mrb[0].mxu0
    %1848 = vmatprep.mubr.f32.mxu0 %v1769
    %1849 = vmatmul.mubr.f32.gmra.mrb[0].mxu0 %v1736
    %v1850 = vpop.f32.mrb[0].mxu0
    %v1851 = vadd.f32 0.0, %v1850
    %v1852 = vpop.f32.mrb[0].mxu0
    %1853 = vmatprep.mubr.f32.mxu0 %v1772
    %1854 = vmatmul.mubr.f32.gmra.mrb[0].mxu0 %v1738
    %v1855 = vpop.f32.mrb[0].mxu0
    %v1856 = vadd.f32 0.0, %v1855
    %v1857 = vpop.f32.mrb[0].mxu0
    %1858 = vdwg.mxu0
    %s1859 = scalar_lea.vmem %s5, 168
    %v1860 = vld [vmem:[%s1859] sm:$0xff]
    %v1861 = vld [vmem:[%s1859 + $0x8] sm:$0xff]
    %v1862 = vld [vmem:[%s1859 + $0x10] sm:$0xff]
    %v1863 = vld [vmem:[%s1859 + $0x18] sm:$0xff]
    %v1864 = vld [vmem:[%s1859 + $0x20] sm:$0xff]
    %v1865 = vld [vmem:[%s1859 + $0x28] sm:$0xff]
    %v1866 = vld [vmem:[%s1859 + $0x30] sm:$0xff]
    %v1867 = vld [vmem:[%s1859 + $0x38] sm:$0xff]
    %v1868 = vld [vmem:[%s1859 + $0x40] sm:$0xff]
    %v1869 = vld [vmem:[%s1859 + $0x48] sm:$0xff]
    %v1870 = vld [vmem:[%s1859 + $0x50] sm:$0xff]
    %v1871 = vld [vmem:[%s1859 + $0x58] sm:$0xff]
    %v1872 = vld [vmem:[%s1859 + $0x60] sm:$0xff]
    %v1873 = vld [vmem:[%s1859 + $0x68] sm:$0xff]
    %v1874 = vld [vmem:[%s1859 + $0x70] sm:$0xff]
    %v1875 = vld [vmem:[%s1859 + $0x78] sm:$0xff]
    %v1876 = vld [vmem:[%s1859 + $0x80] sm:$0xff]
    %v1877 = vld [vmem:[%s1859 + $0x88] sm:$0xff]
    %v1878 = vld [vmem:[%s1859 + $0x90] sm:$0xff]
    %v1879 = vld [vmem:[%s1859 + $0x98] sm:$0xff]
    %v1880 = vld [vmem:[%s1859 + $0xa0] sm:$0xff]
    %1881 = vmatprep.subr.mxu0 0.0
    %1882 = vmatpush1.msra.mxu0 %v1860
    %1883 = vmatprep.subr.mxu0 0.0
    %1884 = vmatpush1.msra.mxu0 %v1861
    %1885 = vmatprep.subr.mxu0 0.0
    %1886 = vmatpush1.msra.mxu0 %v1862
    %1887 = vmatprep.subr.mxu0 0.0
    %1888 = vmatpush1.msra.mxu0 %v1863
    %1889 = vmatprep.subr.mxu0 0.0
    %1890 = vmatpush1.msra.mxu0 %v1864
    %1891 = vmatprep.subr.mxu0 0.0
    %1892 = vmatpush1.msra.mxu0 %v1865
    %1893 = vmatprep.subr.mxu0 0.0
    %1894 = vmatpush1.msra.mxu0 %v1866
    %1895 = vmatprep.subr.mxu0 0.0
    %1896 = vmatpush1.msra.mxu0 %v1867
    %1897 = vmatprep.subr.mxu0 0.0
    %1898 = vmatpush1.msra.mxu0 %v1868
    %1899 = vmatprep.subr.mxu0 0.0
    %1900 = vmatpush1.msra.mxu0 %v1869
    %1901 = vmatprep.subr.mxu0 0.0
    %1902 = vmatpush1.msra.mxu0 %v1870
    %1903 = vmatprep.subr.mxu0 0.0
    %1904 = vmatpush1.msra.mxu0 %v1871
    %1905 = vmatprep.subr.mxu0 0.0
    %1906 = vmatpush1.msra.mxu0 %v1872
    %1907 = vmatprep.subr.mxu0 0.0
    %1908 = vmatpush1.msra.mxu0 %v1873
    %1909 = vmatprep.subr.mxu0 0.0
    %1910 = vmatpush1.msra.mxu0 %v1874
    %1911 = vmatprep.subr.mxu0 0.0
    %1912 = vmatpush1.msra.mxu0 %v1875
    %1913 = vmatprep.subr.mxu0 0.0
    %1914 = vmatpush1.msra.mxu0 %v1876
    %1915 = vmatprep.subr.mxu0 0.0
    %1916 = vmatpush1.msra.mxu0 %v1877
    %1917 = vmatprep.subr.mxu0 0.0
    %1918 = vmatpush1.msra.mxu0 %v1878
    %1919 = vmatprep.subr.mxu0 0.0
    %1920 = vmatpush1.msra.mxu0 %v1879
    %1921 = vmatprep.subr.mxu0 0.0
    %1922 = vmatpush1.msra.mxu0 %v1880
    %1923 = vmatprep.subr.mxu0 0.0
    %1924 = vmatpush1.msra.mxu0 0.0
    %1925 = vmatprep.subr.mxu0 0.0
    %1926 = vmatpush1.msra.mxu0 0.0
    %1927 = vmatprep.subr.mxu0 0.0
    %1928 = vmatpush1.msra.mxu0 0.0
    %1929 = vmatprep.subr.mxu0 0.0
    %1930 = vmatpush1.msra.mxu0 0.0
    %1931 = vmatprep.subr.mxu0 0.0
    %1932 = vmatpush1.msra.mxu0 0.0
    %1933 = vmatprep.subr.mxu0 0.0
    %1934 = vmatpush1.msra.mxu0 0.0
    %1935 = vmatprep.subr.mxu0 0.0
    %1936 = vmatpush1.msra.mxu0 0.0
    %1937 = vmatprep.subr.mxu0 0.0
    %1938 = vmatpush1.msra.mxu0 0.0
    %1939 = vmatprep.subr.mxu0 0.0
    %1940 = vmatpush1.msra.mxu0 0.0
    %1941 = vmatprep.subr.mxu0 0.0
    %1942 = vmatpush1.msra.mxu0 0.0
    %1943 = vmatprep.subr.mxu0 0.0
    %1944 = vmatpush1.msra.mxu0 0.0
    %1945 = vmatprep.mubr.f32.mxu0 %v1763
    %1946 = vmatmul.mubr.f32.gmra.mrb[0].mxu0 %v1732
    %v1947 = vpop.f32.mrb[0].mxu0
    %v1948 = vadd.f32 0.0, %v1947
    %v1949 = vpop.f32.mrb[0].mxu0
    %1950 = vmatprep.mubr.f32.mxu0 %v1766
    %1951 = vmatmul.mubr.f32.gmra.mrb[0].mxu0 %v1734
    %v1952 = vpop.f32.mrb[0].mxu0
    %v1953 = vadd.f32 0.0, %v1952
    %v1954 = vpop.f32.mrb[0].mxu0
    %1955 = vmatprep.mubr.f32.mxu0 %v1769
    %1956 = vmatmul.mubr.f32.gmra.mrb[0].mxu0 %v1736
    %v1957 = vpop.f32.mrb[0].mxu0
    %v1958 = vadd.f32 0.0, %v1957
    %v1959 = vpop.f32.mrb[0].mxu0
    %1960 = vmatprep.mubr.f32.mxu0 %v1772
    %1961 = vmatmul.mubr.f32.gmra.mrb[0].mxu0 %v1738
    %v1962 = vpop.f32.mrb[0].mxu0
    %v1963 = vadd.f32 0.0, %v1962
    %v1964 = vpop.f32.mrb[0].mxu0
    %1965 = vdwg.mxu0
    %v1966 = vmax.f32 %v1841, %v1948
    %v1967 = vmax.f32 %v1846, %v1953
    %v1968 = vmax.f32 %v1851, %v1958
    %v1969 = vmax.f32 %v1856, %v1963
    %v1970 = vld [vmem:[%s3] sm:$0x1]
    %v1972 = vlaneseq
    %v1973 = vshrl.u32 %v1972, 7
    %v1974 = vsub.s32 0, %v1973
    %v1975 = vrot.slane %v1970, %v1974
    %v1977 = vadd.f32 %v1966, %v1975
    %v1978 = vadd.f32 %v1967, %v1975
    %v1979 = vadd.f32 %v1968, %v1975
    %v1980 = vadd.f32 %v1969, %v1975
    %v1981 = vmax.f32 %v1977, 0.0
    %v1982 = vmax.f32 %v1978, 0.0
    %v1983 = vmax.f32 %v1979, 0.0
    %v1984 = vmax.f32 %v1980, 0.0
    %v1985 = vld [vmem:[%s6] sm:$0xff]
    %v1986 = vld [vmem:[%s6 + $0x8] sm:$0xff]
    %v1987 = vld [vmem:[%s6 + $0x10] sm:$0xf]
    %vm1988 = vcmask 228352
    %v1990 = vsel %vm1988, %v1985, 0
    %v1993 = vsel %vm1988, %v1986, 0
    %v1996 = vsel %vm1988, %v1987, 0
    %vm1998 = vcmask 1043456
    %v2000 = vsel %vm1998, %v1984, 0
    %2002 = vmatprep.subr.mxu0 0.0
    %2003 = vmatpush1.msra.mxu0 %v1981
    %2004 = vmatprep.subr.mxu0 0.0
    %2005 = vmatpush1.msra.mxu0 %v1982
    %2006 = vmatprep.subr.mxu0 0.0
    %2007 = vmatpush1.msra.mxu0 %v1983
    %2008 = vmatprep.subr.mxu0 0.0
    %2009 = vmatpush1.msra.mxu0 %v2000
    %2010 = vmatprep.subr.mxu0 0.0
    %2011 = vmatpush1.msra.mxu0 0.0
    %2012 = vmatprep.subr.mxu0 0.0
    %2013 = vmatpush1.msra.mxu0 0.0
    %2014 = vmatprep.subr.mxu0 0.0
    %2015 = vmatpush1.msra.mxu0 0.0
    %2016 = vmatprep.subr.mxu0 0.0
    %2017 = vmatpush1.msra.mxu0 0.0
    %2018 = vmatprep.subr.mxu0 0.0
    %2019 = vmatpush1.msra.mxu0 0.0
    %2020 = vmatprep.subr.mxu0 0.0
    %2021 = vmatpush1.msra.mxu0 0.0
    %2022 = vmatprep.subr.mxu0 0.0
    %2023 = vmatpush1.msra.mxu0 0.0
    %2024 = vmatprep.subr.mxu0 0.0
    %2025 = vmatpush1.msra.mxu0 0.0
    %2026 = vmatprep.subr.mxu0 0.0
    %2027 = vmatpush1.msra.mxu0 0.0
    %2028 = vmatprep.subr.mxu0 0.0
    %2029 = vmatpush1.msra.mxu0 0.0
    %2030 = vmatprep.subr.mxu0 0.0
    %2031 = vmatpush1.msra.mxu0 0.0
    %2032 = vmatprep.subr.mxu0 0.0
    %2033 = vmatpush1.msra.mxu0 0.0
    %2034 = vmatprep.subr.mxu0 0.0
    %2035 = vmatpush1.msra.mxu0 0.0
    %2036 = vmatprep.subr.mxu0 0.0
    %2037 = vmatpush1.msra.mxu0 0.0
    %2038 = vmatprep.subr.mxu0 0.0
    %2039 = vmatpush1.msra.mxu0 0.0
    %2040 = vmatprep.subr.mxu0 0.0
    %2041 = vmatpush1.msra.mxu0 0.0
    %2042 = vmatprep.subr.mxu0 0.0
    %2043 = vmatpush1.msra.mxu0 0.0
    %2044 = vmatprep.subr.mxu0 0.0
    %2045 = vmatpush1.msra.mxu0 0.0
    %2046 = vmatprep.subr.mxu0 0.0
    %2047 = vmatpush1.msra.mxu0 0.0
    %2048 = vmatprep.subr.mxu0 0.0
    %2049 = vmatpush1.msra.mxu0 0.0
    %2050 = vmatprep.subr.mxu0 0.0
    %2051 = vmatpush1.msra.mxu0 0.0
    %2052 = vmatprep.subr.mxu0 0.0
    %2053 = vmatpush1.msra.mxu0 0.0
    %2054 = vmatprep.subr.mxu0 0.0
    %2055 = vmatpush1.msra.mxu0 0.0
    %2056 = vmatprep.subr.mxu0 0.0
    %2057 = vmatpush1.msra.mxu0 0.0
    %2058 = vmatprep.subr.mxu0 0.0
    %2059 = vmatpush1.msra.mxu0 0.0
    %2060 = vmatprep.subr.mxu0 0.0
    %2061 = vmatpush1.msra.mxu0 0.0
    %2062 = vmatprep.subr.mxu0 0.0
    %2063 = vmatpush1.msra.mxu0 0.0
    %2064 = vmatprep.subr.mxu0 0.0
    %2065 = vmatpush1.msra.mxu0 0.0
    %2066 = vmatprep.mubr.f32.mxu0 0.0
    %2067 = vmatmul.mubr.f32.gmra.mrb[0].mxu0 %v1990
    %v2068 = vpop.f32.mrb[0].mxu0
    %v2069 = vadd.f32 0.0, %v2068
    %v2070 = vpop.f32.mrb[0].mxu0
    %2071 = vmatprep.mubr.f32.mxu0 0.0
    %2072 = vmatmul.mubr.f32.gmra.mrb[0].mxu0 %v1993
    %v2073 = vpop.f32.mrb[0].mxu0
    %v2074 = vadd.f32 0.0, %v2073
    %v2075 = vpop.f32.mrb[0].mxu0
    %2076 = vmatprep.mubr.f32.mxu0 0.0
    %2077 = vmatmul.mubr.f32.gmra.mrb[0].mxu0 %v1996
    %v2078 = vpop.f32.mrb[0].mxu0
    %v2079 = vadd.f32 0.0, %v2078
    %v2080 = vpop.f32.mrb[0].mxu0
    %2081 = vdwg.mxu0
    %v2082 = vld [vmem:[%s7] sm:$0xff]
    %v2083 = vld [vmem:[%s7 + $0x8] sm:$0xff]
    %v2084 = vld [vmem:[%s7 + $0x10] sm:$0xff]
    %v2085 = vld [vmem:[%s7 + $0x18] sm:$0xff]
    %v2086 = vld [vmem:[%s7 + $0x20] sm:$0xff]
    %v2087 = vld [vmem:[%s7 + $0x28] sm:$0xff]
    %v2088 = vld [vmem:[%s7 + $0x30] sm:$0xff]
    %v2089 = vld [vmem:[%s7 + $0x38] sm:$0xff]
    %v2090 = vld [vmem:[%s7 + $0x40] sm:$0xff]
    %v2091 = vld [vmem:[%s7 + $0x48] sm:$0xff]
    %v2092 = vld [vmem:[%s7 + $0x50] sm:$0xff]
    %v2093 = vld [vmem:[%s7 + $0x58] sm:$0xff]
    %v2094 = vld [vmem:[%s7 + $0x60] sm:$0xff]
    %v2095 = vld [vmem:[%s7 + $0x68] sm:$0xff]
    %v2096 = vld [vmem:[%s7 + $0x70] sm:$0xff]
    %v2097 = vld [vmem:[%s7 + $0x78] sm:$0xff]
    %v2098 = vld [vmem:[%s7 + $0x80] sm:$0xff]
    %v2099 = vld [vmem:[%s7 + $0x88] sm:$0xff]
    %v2100 = vld [vmem:[%s7 + $0x90] sm:$0xff]
    %v2101 = vld [vmem:[%s7 + $0x98] sm:$0xff]
    %v2102 = vld [vmem:[%s7 + $0xa0] sm:$0xf]
    %v2103 = vld [vmem:[%s7 + $0xa8] sm:$0xf]
    %s2104 = scalar_lea.vmem %s6, 24
    %v2105 = vld [vmem:[%s2104] sm:$0xff]
    %v2106 = vld [vmem:[%s2104 + $0x8] sm:$0xff]
    %v2107 = vld [vmem:[%s2104 + $0x10] sm:$0xf]
    %v2109 = vsel %vm1988, %v2105, 0
    %v2112 = vsel %vm1988, %v2106, 0
    %v2115 = vsel %vm1988, %v2107, 0
    %2117 = vmatprep.subr.mxu0 0.0
    %2118 = vmatpush1.msra.mxu0 %v1981
    %2119 = vmatprep.subr.mxu0 0.0
    %2120 = vmatpush1.msra.mxu0 %v1982
    %2121 = vmatprep.subr.mxu0 0.0
    %2122 = vmatpush1.msra.mxu0 %v1983
    %2123 = vmatprep.subr.mxu0 0.0
    %2124 = vmatpush1.msra.mxu0 %v2000
    %2125 = vmatprep.subr.mxu0 0.0
    %2126 = vmatpush1.msra.mxu0 0.0
    %2127 = vmatprep.subr.mxu0 0.0
    %2128 = vmatpush1.msra.mxu0 0.0
    %2129 = vmatprep.subr.mxu0 0.0
    %2130 = vmatpush1.msra.mxu0 0.0
    %2131 = vmatprep.subr.mxu0 0.0
    %2132 = vmatpush1.msra.mxu0 0.0
    %2133 = vmatprep.subr.mxu0 0.0
    %2134 = vmatpush1.msra.mxu0 0.0
    %2135 = vmatprep.subr.mxu0 0.0
    %2136 = vmatpush1.msra.mxu0 0.0
    %2137 = vmatprep.subr.mxu0 0.0
    %2138 = vmatpush1.msra.mxu0 0.0
    %2139 = vmatprep.subr.mxu0 0.0
    %2140 = vmatpush1.msra.mxu0 0.0
    %2141 = vmatprep.subr.mxu0 0.0
    %2142 = vmatpush1.msra.mxu0 0.0
    %2143 = vmatprep.subr.mxu0 0.0
    %2144 = vmatpush1.msra.mxu0 0.0
    %2145 = vmatprep.subr.mxu0 0.0
    %2146 = vmatpush1.msra.mxu0 0.0
    %2147 = vmatprep.subr.mxu0 0.0
    %2148 = vmatpush1.msra.mxu0 0.0
    %2149 = vmatprep.subr.mxu0 0.0
    %2150 = vmatpush1.msra.mxu0 0.0
    %2151 = vmatprep.subr.mxu0 0.0
    %2152 = vmatpush1.msra.mxu0 0.0
    %2153 = vmatprep.subr.mxu0 0.0
    %2154 = vmatpush1.msra.mxu0 0.0
    %2155 = vmatprep.subr.mxu0 0.0
    %2156 = vmatpush1.msra.mxu0 0.0
    %2157 = vmatprep.subr.mxu0 0.0
    %2158 = vmatpush1.msra.mxu0 0.0
    %2159 = vmatprep.subr.mxu0 0.0
    %2160 = vmatpush1.msra.mxu0 0.0
    %2161 = vmatprep.subr.mxu0 0.0
    %2162 = vmatpush1.msra.mxu0 0.0
    %2163 = vmatprep.subr.mxu0 0.0
    %2164 = vmatpush1.msra.mxu0 0.0
    %2165 = vmatprep.subr.mxu0 0.0
    %2166 = vmatpush1.msra.mxu0 0.0
    %2167 = vmatprep.subr.mxu0 0.0
    %2168 = vmatpush1.msra.mxu0 0.0
    %2169 = vmatprep.subr.mxu0 0.0
    %2170 = vmatpush1.msra.mxu0 0.0
    %2171 = vmatprep.subr.mxu0 0.0
    %2172 = vmatpush1.msra.mxu0 0.0
    %2173 = vmatprep.subr.mxu0 0.0
    %2174 = vmatpush1.msra.mxu0 0.0
    %2175 = vmatprep.subr.mxu0 0.0
    %2176 = vmatpush1.msra.mxu0 0.0
    %2177 = vmatprep.subr.mxu0 0.0
    %2178 = vmatpush1.msra.mxu0 0.0
    %2179 = vmatprep.subr.mxu0 0.0
    %2180 = vmatpush1.msra.mxu0 0.0
    %2181 = vmatprep.mubr.f32.mxu0 0.0
    %2182 = vmatmul.mubr.f32.gmra.mrb[0].mxu0 %v2109
    %v2183 = vpop.f32.mrb[0].mxu0
    %v2184 = vadd.f32 0.0, %v2183
    %v2185 = vpop.f32.mrb[0].mxu0
    %2186 = vmatprep.mubr.f32.mxu0 0.0
    %2187 = vmatmul.mubr.f32.gmra.mrb[0].mxu0 %v2112
    %v2188 = vpop.f32.mrb[0].mxu0
    %v2189 = vadd.f32 0.0, %v2188
    %v2190 = vpop.f32.mrb[0].mxu0
    %2191 = vmatprep.mubr.f32.mxu0 0.0
    %2192 = vmatmul.mubr.f32.gmra.mrb[0].mxu0 %v2115
    %v2193 = vpop.f32.mrb[0].mxu0
    %v2194 = vadd.f32 0.0, %v2193
    %v2195 = vpop.f32.mrb[0].mxu0
    %2196 = vdwg.mxu0
    %s2197 = scalar_lea.vmem %s7, 176
    %v2198 = vld [vmem:[%s2197] sm:$0xff]
    %v2199 = vld [vmem:[%s2197 + $0x8] sm:$0xff]
    %v2200 = vld [vmem:[%s2197 + $0x10] sm:$0xff]
    %v2201 = vld [vmem:[%s2197 + $0x18] sm:$0xff]
    %v2202 = vld [vmem:[%s2197 + $0x20] sm:$0xff]
    %v2203 = vld [vmem:[%s2197 + $0x28] sm:$0xff]
    %v2204 = vld [vmem:[%s2197 + $0x30] sm:$0xff]
    %v2205 = vld [vmem:[%s2197 + $0x38] sm:$0xff]
    %v2206 = vld [vmem:[%s2197 + $0x40] sm:$0xff]
    %v2207 = vld [vmem:[%s2197 + $0x48] sm:$0xff]
    %v2208 = vld [vmem:[%s2197 + $0x50] sm:$0xff]
    %v2209 = vld [vmem:[%s2197 + $0x58] sm:$0xff]
    %v2210 = vld [vmem:[%s2197 + $0x60] sm:$0xff]
    %v2211 = vld [vmem:[%s2197 + $0x68] sm:$0xff]
    %v2212 = vld [vmem:[%s2197 + $0x70] sm:$0xff]
    %v2213 = vld [vmem:[%s2197 + $0x78] sm:$0xff]
    %v2214 = vld [vmem:[%s2197 + $0x80] sm:$0xff]
    %v2215 = vld [vmem:[%s2197 + $0x88] sm:$0xff]
    %v2216 = vld [vmem:[%s2197 + $0x90] sm:$0xff]
    %v2217 = vld [vmem:[%s2197 + $0x98] sm:$0xff]
    %v2218 = vld [vmem:[%s2197 + $0xa0] sm:$0xf]
    %v2219 = vld [vmem:[%s2197 + $0xa8] sm:$0xf]
    %vm2220 = vcmask 687104
    %v2222 = vsel %vm2220, %v2184, 0
    %v2225 = vsel %vm2220, %v2189, 0
    %v2228 = vsel %vm2220, %v2194, 0
    %v2231 = vsel %vm1998, %v2218, 0
    %v2234 = vsel %vm1998, %v2219, 0
    %2236 = vmatprep.subr.mxu0 %v2199
    %2237 = vmatpush1.msra.mxu0 %v2198
    %2238 = vmatprep.subr.mxu0 %v2201
    %2239 = vmatpush1.msra.mxu0 %v2200
    %2240 = vmatprep.subr.mxu0 %v2203
    %2241 = vmatpush1.msra.mxu0 %v2202
    %2242 = vmatprep.subr.mxu0 %v2205
    %2243 = vmatpush1.msra.mxu0 %v2204
    %2244 = vmatprep.subr.mxu0 %v2207
    %2245 = vmatpush1.msra.mxu0 %v2206
    %2246 = vmatprep.subr.mxu0 %v2209
    %2247 = vmatpush1.msra.mxu0 %v2208
    %2248 = vmatprep.subr.mxu0 %v2211
    %2249 = vmatpush1.msra.mxu0 %v2210
    %2250 = vmatprep.subr.mxu0 %v2213
    %2251 = vmatpush1.msra.mxu0 %v2212
    %2252 = vmatprep.subr.mxu0 %v2215
    %2253 = vmatpush1.msra.mxu0 %v2214
    %2254 = vmatprep.subr.mxu0 %v2217
    %2255 = vmatpush1.msra.mxu0 %v2216
    %2256 = vmatprep.subr.mxu0 %v2234
    %2257 = vmatpush1.msra.mxu0 %v2231
    %2258 = vmatprep.subr.mxu0 0.0
    %2259 = vmatpush1.msra.mxu0 0.0
    %2260 = vmatprep.subr.mxu0 0.0
    %2261 = vmatpush1.msra.mxu0 0.0
    %2262 = vmatprep.subr.mxu0 0.0
    %2263 = vmatpush1.msra.mxu0 0.0
    %2264 = vmatprep.subr.mxu0 0.0
    %2265 = vmatpush1.msra.mxu0 0.0
    %2266 = vmatprep.subr.mxu0 0.0
    %2267 = vmatpush1.msra.mxu0 0.0
    %2268 = vmatprep.subr.mxu0 0.0
    %2269 = vmatpush1.msra.mxu0 0.0
    %2270 = vmatprep.subr.mxu0 0.0
    %2271 = vmatpush1.msra.mxu0 0.0
    %2272 = vmatprep.subr.mxu0 0.0
    %2273 = vmatpush1.msra.mxu0 0.0
    %2274 = vmatprep.subr.mxu0 0.0
    %2275 = vmatpush1.msra.mxu0 0.0
    %2276 = vmatprep.subr.mxu0 0.0
    %2277 = vmatpush1.msra.mxu0 0.0
    %2278 = vmatprep.subr.mxu0 0.0
    %2279 = vmatpush1.msra.mxu0 0.0
    %2280 = vmatprep.subr.mxu0 0.0
    %2281 = vmatpush1.msra.mxu0 0.0
    %2282 = vmatprep.subr.mxu0 0.0
    %2283 = vmatpush1.msra.mxu0 0.0
    %2284 = vmatprep.subr.mxu0 0.0
    %2285 = vmatpush1.msra.mxu0 0.0
    %2286 = vmatprep.subr.mxu0 0.0
    %2287 = vmatpush1.msra.mxu0 0.0
    %2288 = vmatprep.subr.mxu0 0.0
    %2289 = vmatpush1.msra.mxu0 0.0
    %2290 = vmatprep.subr.mxu0 0.0
    %2291 = vmatpush1.msra.mxu0 0.0
    %2292 = vmatprep.subr.mxu0 0.0
    %2293 = vmatpush1.msra.mxu0 0.0
    %2294 = vmatprep.subr.mxu0 0.0
    %2295 = vmatpush1.msra.mxu0 0.0
    %2296 = vmatprep.subr.mxu0 0.0
    %2297 = vmatpush1.msra.mxu0 0.0
    %2298 = vmatprep.subr.mxu0 0.0
    %2299 = vmatpush1.msra.mxu0 0.0
    %2300 = vmatprep.mubr.f32.mxu0 0.0
    %2301 = vmatmul.mubr.f32.gmra.mrb[0].mxu0 %v2222
    %v2302 = vpop.f32.mrb[0].mxu0
    %v2303 = vadd.f32 0.0, %v2302
    %v2304 = vpop.f32.mrb[0].mxu0
    %v2305 = vadd.f32 0.0, %v2304
    %2306 = vmatprep.mubr.f32.mxu0 0.0
    %2307 = vmatmul.mubr.f32.gmra.mrb[0].mxu0 %v2225
    %v2308 = vpop.f32.mrb[0].mxu0
    %v2309 = vadd.f32 0.0, %v2308
    %v2310 = vpop.f32.mrb[0].mxu0
    %v2311 = vadd.f32 0.0, %v2310
    %2312 = vmatprep.mubr.f32.mxu0 0.0
    %2313 = vmatmul.mubr.f32.gmra.mrb[0].mxu0 %v2228
    %v2314 = vpop.f32.mrb[0].mxu0
    %v2315 = vadd.f32 0.0, %v2314
    %v2316 = vpop.f32.mrb[0].mxu0
    %v2317 = vadd.f32 0.0, %v2316
    %2318 = vdwg.mxu0
    %v2320 = vsel %vm2220, %v2069, 0
    %v2323 = vsel %vm2220, %v2074, 0
    %v2326 = vsel %vm2220, %v2079, 0
    %v2329 = vsel %vm1998, %v2102, 0
    %v2332 = vsel %vm1998, %v2103, 0
    %2334 = vmatprep.subr.mxu0 %v2083
    %2335 = vmatpush1.msra.mxu0 %v2082
    %2336 = vmatprep.subr.mxu0 %v2085
    %2337 = vmatpush1.msra.mxu0 %v2084
    %2338 = vmatprep.subr.mxu0 %v2087
    %2339 = vmatpush1.msra.mxu0 %v2086
    %2340 = vmatprep.subr.mxu0 %v2089
    %2341 = vmatpush1.msra.mxu0 %v2088
    %2342 = vmatprep.subr.mxu0 %v2091
    %2343 = vmatpush1.msra.mxu0 %v2090
    %2344 = vmatprep.subr.mxu0 %v2093
    %2345 = vmatpush1.msra.mxu0 %v2092
    %2346 = vmatprep.subr.mxu0 %v2095
    %2347 = vmatpush1.msra.mxu0 %v2094
    %2348 = vmatprep.subr.mxu0 %v2097
    %2349 = vmatpush1.msra.mxu0 %v2096
    %2350 = vmatprep.subr.mxu0 %v2099
    %2351 = vmatpush1.msra.mxu0 %v2098
    %2352 = vmatprep.subr.mxu0 %v2101
    %2353 = vmatpush1.msra.mxu0 %v2100
    %2354 = vmatprep.subr.mxu0 %v2332
    %2355 = vmatpush1.msra.mxu0 %v2329
    %2356 = vmatprep.subr.mxu0 0.0
    %2357 = vmatpush1.msra.mxu0 0.0
    %2358 = vmatprep.subr.mxu0 0.0
    %2359 = vmatpush1.msra.mxu0 0.0
    %2360 = vmatprep.subr.mxu0 0.0
    %2361 = vmatpush1.msra.mxu0 0.0
    %2362 = vmatprep.subr.mxu0 0.0
    %2363 = vmatpush1.msra.mxu0 0.0
    %2364 = vmatprep.subr.mxu0 0.0
    %2365 = vmatpush1.msra.mxu0 0.0
    %2366 = vmatprep.subr.mxu0 0.0
    %2367 = vmatpush1.msra.mxu0 0.0
    %2368 = vmatprep.subr.mxu0 0.0
    %2369 = vmatpush1.msra.mxu0 0.0
    %2370 = vmatprep.subr.mxu0 0.0
    %2371 = vmatpush1.msra.mxu0 0.0
    %2372 = vmatprep.subr.mxu0 0.0
    %2373 = vmatpush1.msra.mxu0 0.0
    %2374 = vmatprep.subr.mxu0 0.0
    %2375 = vmatpush1.msra.mxu0 0.0
    %2376 = vmatprep.subr.mxu0 0.0
    %2377 = vmatpush1.msra.mxu0 0.0
    %2378 = vmatprep.subr.mxu0 0.0
    %2379 = vmatpush1.msra.mxu0 0.0
    %2380 = vmatprep.subr.mxu0 0.0
    %2381 = vmatpush1.msra.mxu0 0.0
    %2382 = vmatprep.subr.mxu0 0.0
    %2383 = vmatpush1.msra.mxu0 0.0
    %2384 = vmatprep.subr.mxu0 0.0
    %2385 = vmatpush1.msra.mxu0 0.0
    %2386 = vmatprep.subr.mxu0 0.0
    %2387 = vmatpush1.msra.mxu0 0.0
    %2388 = vmatprep.subr.mxu0 0.0
    %2389 = vmatpush1.msra.mxu0 0.0
    %2390 = vmatprep.subr.mxu0 0.0
    %2391 = vmatpush1.msra.mxu0 0.0
    %2392 = vmatprep.subr.mxu0 0.0
    %2393 = vmatpush1.msra.mxu0 0.0
    %2394 = vmatprep.subr.mxu0 0.0
    %2395 = vmatpush1.msra.mxu0 0.0
    %2396 = vmatprep.subr.mxu0 0.0
    %2397 = vmatpush1.msra.mxu0 0.0
    %2398 = vmatprep.mubr.f32.mxu0 0.0
    %2399 = vmatmul.mubr.f32.gmra.mrb[0].mxu0 %v2320
    %v2400 = vpop.f32.mrb[0].mxu0
    %v2401 = vadd.f32 %v2303, %v2400
    %v2402 = vpop.f32.mrb[0].mxu0
    %v2403 = vadd.f32 %v2305, %v2402
    %2404 = vmatprep.mubr.f32.mxu0 0.0
    %2405 = vmatmul.mubr.f32.gmra.mrb[0].mxu0 %v2323
    %v2406 = vpop.f32.mrb[0].mxu0
    %v2407 = vadd.f32 %v2309, %v2406
    %v2408 = vpop.f32.mrb[0].mxu0
    %v2409 = vadd.f32 %v2311, %v2408
    %2410 = vmatprep.mubr.f32.mxu0 0.0
    %2411 = vmatmul.mubr.f32.gmra.mrb[0].mxu0 %v2326
    %v2412 = vpop.f32.mrb[0].mxu0
    %v2413 = vadd.f32 %v2315, %v2412
    %v2414 = vpop.f32.mrb[0].mxu0
    %v2415 = vadd.f32 %v2317, %v2414
    %2416 = vdwg.mxu0
    %s2417 = scalar_lea.vmem %s6, 48
    %v2418 = vld [vmem:[%s2417] sm:$0xff]
    %v2419 = vld [vmem:[%s2417 + $0x8] sm:$0xff]
    %v2420 = vld [vmem:[%s2417 + $0x10] sm:$0xf]
    %v2422 = vsel %vm1988, %v2418, 0
    %v2425 = vsel %vm1988, %v2419, 0
    %v2428 = vsel %vm1988, %v2420, 0
    %2430 = vmatprep.subr.mxu0 0.0
    %2431 = vmatpush1.msra.mxu0 %v1981
    %2432 = vmatprep.subr.mxu0 0.0
    %2433 = vmatpush1.msra.mxu0 %v1982
    %2434 = vmatprep.subr.mxu0 0.0
    %2435 = vmatpush1.msra.mxu0 %v1983
    %2436 = vmatprep.subr.mxu0 0.0
    %2437 = vmatpush1.msra.mxu0 %v2000
    %2438 = vmatprep.subr.mxu0 0.0
    %2439 = vmatpush1.msra.mxu0 0.0
    %2440 = vmatprep.subr.mxu0 0.0
    %2441 = vmatpush1.msra.mxu0 0.0
    %2442 = vmatprep.subr.mxu0 0.0
    %2443 = vmatpush1.msra.mxu0 0.0
    %2444 = vmatprep.subr.mxu0 0.0
    %2445 = vmatpush1.msra.mxu0 0.0
    %2446 = vmatprep.subr.mxu0 0.0
    %2447 = vmatpush1.msra.mxu0 0.0
    %2448 = vmatprep.subr.mxu0 0.0
    %2449 = vmatpush1.msra.mxu0 0.0
    %2450 = vmatprep.subr.mxu0 0.0
    %2451 = vmatpush1.msra.mxu0 0.0
    %2452 = vmatprep.subr.mxu0 0.0
    %2453 = vmatpush1.msra.mxu0 0.0
    %2454 = vmatprep.subr.mxu0 0.0
    %2455 = vmatpush1.msra.mxu0 0.0
    %2456 = vmatprep.subr.mxu0 0.0
    %2457 = vmatpush1.msra.mxu0 0.0
    %2458 = vmatprep.subr.mxu0 0.0
    %2459 = vmatpush1.msra.mxu0 0.0
    %2460 = vmatprep.subr.mxu0 0.0
    %2461 = vmatpush1.msra.mxu0 0.0
    %2462 = vmatprep.subr.mxu0 0.0
    %2463 = vmatpush1.msra.mxu0 0.0
    %2464 = vmatprep.subr.mxu0 0.0
    %2465 = vmatpush1.msra.mxu0 0.0
    %2466 = vmatprep.subr.mxu0 0.0
    %2467 = vmatpush1.msra.mxu0 0.0
    %2468 = vmatprep.subr.mxu0 0.0
    %2469 = vmatpush1.msra.mxu0 0.0
    %2470 = vmatprep.subr.mxu0 0.0
    %2471 = vmatpush1.msra.mxu0 0.0
    %2472 = vmatprep.subr.mxu0 0.0
    %2473 = vmatpush1.msra.mxu0 0.0
    %2474 = vmatprep.subr.mxu0 0.0
    %2475 = vmatpush1.msra.mxu0 0.0
    %2476 = vmatprep.subr.mxu0 0.0
    %2477 = vmatpush1.msra.mxu0 0.0
    %2478 = vmatprep.subr.mxu0 0.0
    %2479 = vmatpush1.msra.mxu0 0.0
    %2480 = vmatprep.subr.mxu0 0.0
    %2481 = vmatpush1.msra.mxu0 0.0
    %2482 = vmatprep.subr.mxu0 0.0
    %2483 = vmatpush1.msra.mxu0 0.0
    %2484 = vmatprep.subr.mxu0 0.0
    %2485 = vmatpush1.msra.mxu0 0.0
    %2486 = vmatprep.subr.mxu0 0.0
    %2487 = vmatpush1.msra.mxu0 0.0
    %2488 = vmatprep.subr.mxu0 0.0
    %2489 = vmatpush1.msra.mxu0 0.0
    %2490 = vmatprep.subr.mxu0 0.0
    %2491 = vmatpush1.msra.mxu0 0.0
    %2492 = vmatprep.subr.mxu0 0.0
    %2493 = vmatpush1.msra.mxu0 0.0
    %2494 = vmatprep.mubr.f32.mxu0 0.0
    %2495 = vmatmul.mubr.f32.gmra.mrb[0].mxu0 %v2422
    %v2496 = vpop.f32.mrb[0].mxu0
    %v2497 = vadd.f32 0.0, %v2496
    %v2498 = vpop.f32.mrb[0].mxu0
    %2499 = vmatprep.mubr.f32.mxu0 0.0
    %2500 = vmatmul.mubr.f32.gmra.mrb[0].mxu0 %v2425
    %v2501 = vpop.f32.mrb[0].mxu0
    %v2502 = vadd.f32 0.0, %v2501
    %v2503 = vpop.f32.mrb[0].mxu0
    %2504 = vmatprep.mubr.f32.mxu0 0.0
    %2505 = vmatmul.mubr.f32.gmra.mrb[0].mxu0 %v2428
    %v2506 = vpop.f32.mrb[0].mxu0
    %v2507 = vadd.f32 0.0, %v2506
    %v2508 = vpop.f32.mrb[0].mxu0
    %2509 = vdwg.mxu0
    %s2510 = scalar_lea.vmem %s7, 352
    %v2511 = vld [vmem:[%s2510] sm:$0xff]
    %v2512 = vld [vmem:[%s2510 + $0x8] sm:$0xff]
    %v2513 = vld [vmem:[%s2510 + $0x10] sm:$0xff]
    %v2514 = vld [vmem:[%s2510 + $0x18] sm:$0xff]
    %v2515 = vld [vmem:[%s2510 + $0x20] sm:$0xff]
    %v2516 = vld [vmem:[%s2510 + $0x28] sm:$0xff]
    %v2517 = vld [vmem:[%s2510 + $0x30] sm:$0xff]
    %v2518 = vld [vmem:[%s2510 + $0x38] sm:$0xff]
    %v2519 = vld [vmem:[%s2510 + $0x40] sm:$0xff]
    %v2520 = vld [vmem:[%s2510 + $0x48] sm:$0xff]
    %v2521 = vld [vmem:[%s2510 + $0x50] sm:$0xff]
    %v2522 = vld [vmem:[%s2510 + $0x58] sm:$0xff]
    %v2523 = vld [vmem:[%s2510 + $0x60] sm:$0xff]
    %v2524 = vld [vmem:[%s2510 + $0x68] sm:$0xff]
    %v2525 = vld [vmem:[%s2510 + $0x70] sm:$0xff]
    %v2526 = vld [vmem:[%s2510 + $0x78] sm:$0xff]
    %v2527 = vld [vmem:[%s2510 + $0x80] sm:$0xff]
    %v2528 = vld [vmem:[%s2510 + $0x88] sm:$0xff]
    %v2529 = vld [vmem:[%s2510 + $0x90] sm:$0xff]
    %v2530 = vld [vmem:[%s2510 + $0x98] sm:$0xff]
    %v2531 = vld [vmem:[%s2510 + $0xa0] sm:$0xf]
    %v2532 = vld [vmem:[%s2510 + $0xa8] sm:$0xf]
    %v2534 = vsel %vm2220, %v2497, 0
    %v2537 = vsel %vm2220, %v2502, 0
    %v2540 = vsel %vm2220, %v2507, 0
    %v2543 = vsel %vm1998, %v2531, 0
    %v2546 = vsel %vm1998, %v2532, 0
    %2548 = vmatprep.subr.mxu0 %v2512
    %2549 = vmatpush1.msra.mxu0 %v2511
    %2550 = vmatprep.subr.mxu0 %v2514
    %2551 = vmatpush1.msra.mxu0 %v2513
    %2552 = vmatprep.subr.mxu0 %v2516
    %2553 = vmatpush1.msra.mxu0 %v2515
    %2554 = vmatprep.subr.mxu0 %v2518
    %2555 = vmatpush1.msra.mxu0 %v2517
    %2556 = vmatprep.subr.mxu0 %v2520
    %2557 = vmatpush1.msra.mxu0 %v2519
    %2558 = vmatprep.subr.mxu0 %v2522
    %2559 = vmatpush1.msra.mxu0 %v2521
    %2560 = vmatprep.subr.mxu0 %v2524
    %2561 = vmatpush1.msra.mxu0 %v2523
    %2562 = vmatprep.subr.mxu0 %v2526
    %2563 = vmatpush1.msra.mxu0 %v2525
    %2564 = vmatprep.subr.mxu0 %v2528
    %2565 = vmatpush1.msra.mxu0 %v2527
    %2566 = vmatprep.subr.mxu0 %v2530
    %2567 = vmatpush1.msra.mxu0 %v2529
    %2568 = vmatprep.subr.mxu0 %v2546
    %2569 = vmatpush1.msra.mxu0 %v2543
    %2570 = vmatprep.subr.mxu0 0.0
    %2571 = vmatpush1.msra.mxu0 0.0
    %2572 = vmatprep.subr.mxu0 0.0
    %2573 = vmatpush1.msra.mxu0 0.0
    %2574 = vmatprep.subr.mxu0 0.0
    %2575 = vmatpush1.msra.mxu0 0.0
    %2576 = vmatprep.subr.mxu0 0.0
    %2577 = vmatpush1.msra.mxu0 0.0
    %2578 = vmatprep.subr.mxu0 0.0
    %2579 = vmatpush1.msra.mxu0 0.0
    %2580 = vmatprep.subr.mxu0 0.0
    %2581 = vmatpush1.msra.mxu0 0.0
    %2582 = vmatprep.subr.mxu0 0.0
    %2583 = vmatpush1.msra.mxu0 0.0
    %2584 = vmatprep.subr.mxu0 0.0
    %2585 = vmatpush1.msra.mxu0 0.0
    %2586 = vmatprep.subr.mxu0 0.0
    %2587 = vmatpush1.msra.mxu0 0.0
    %2588 = vmatprep.subr.mxu0 0.0
    %2589 = vmatpush1.msra.mxu0 0.0
    %2590 = vmatprep.subr.mxu0 0.0
    %2591 = vmatpush1.msra.mxu0 0.0
    %2592 = vmatprep.subr.mxu0 0.0
    %2593 = vmatpush1.msra.mxu0 0.0
    %2594 = vmatprep.subr.mxu0 0.0
    %2595 = vmatpush1.msra.mxu0 0.0
    %2596 = vmatprep.subr.mxu0 0.0
    %2597 = vmatpush1.msra.mxu0 0.0
    %2598 = vmatprep.subr.mxu0 0.0
    %2599 = vmatpush1.msra.mxu0 0.0
    %2600 = vmatprep.subr.mxu0 0.0
    %2601 = vmatpush1.msra.mxu0 0.0
    %2602 = vmatprep.subr.mxu0 0.0
    %2603 = vmatpush1.msra.mxu0 0.0
    %2604 = vmatprep.subr.mxu0 0.0
    %2605 = vmatpush1.msra.mxu0 0.0
    %2606 = vmatprep.subr.mxu0 0.0
    %2607 = vmatpush1.msra.mxu0 0.0
    %2608 = vmatprep.subr.mxu0 0.0
    %2609 = vmatpush1.msra.mxu0 0.0
    %2610 = vmatprep.subr.mxu0 0.0
    %2611 = vmatpush1.msra.mxu0 0.0
    %2612 = vmatprep.mubr.f32.mxu0 0.0
    %2613 = vmatmul.mubr.f32.gmra.mrb[0].mxu0 %v2534
    %v2614 = vpop.f32.mrb[0].mxu0
    %v2615 = vadd.f32 0.0, %v2614
    %v2616 = vpop.f32.mrb[0].mxu0
    %v2617 = vadd.f32 0.0, %v2616
    %2618 = vmatprep.mubr.f32.mxu0 0.0
    %2619 = vmatmul.mubr.f32.gmra.mrb[0].mxu0 %v2537
    %v2620 = vpop.f32.mrb[0].mxu0
    %v2621 = vadd.f32 0.0, %v2620
    %v2622 = vpop.f32.mrb[0].mxu0
    %v2623 = vadd.f32 0.0, %v2622
    %2624 = vmatprep.mubr.f32.mxu0 0.0
    %2625 = vmatmul.mubr.f32.gmra.mrb[0].mxu0 %v2540
    %v2626 = vpop.f32.mrb[0].mxu0
    %v2627 = vadd.f32 0.0, %v2626
    %v2628 = vpop.f32.mrb[0].mxu0
    %v2629 = vadd.f32 0.0, %v2628
    %2630 = vdwg.mxu0
    %v2631 = vadd.f32 %v2401, %v2615
    %v2632 = vadd.f32 %v2403, %v2617
    %v2633 = vadd.f32 %v2407, %v2621
    %v2634 = vadd.f32 %v2409, %v2623
    %v2635 = vadd.f32 %v2413, %v2627
    %v2636 = vadd.f32 %v2415, %v2629
    %s2637 = scalar_lea.vmem %s6, 72
    %v2638 = vld [vmem:[%s2637] sm:$0xff]
    %v2639 = vld [vmem:[%s2637 + $0x8] sm:$0xff]
    %v2640 = vld [vmem:[%s2637 + $0x10] sm:$0xf]
    %v2642 = vsel %vm1988, %v2638, 0
    %v2645 = vsel %vm1988, %v2639, 0
    %v2648 = vsel %vm1988, %v2640, 0
    %2650 = vmatprep.subr.mxu0 0.0
    %2651 = vmatpush1.msra.mxu0 %v1981
    %2652 = vmatprep.subr.mxu0 0.0
    %2653 = vmatpush1.msra.mxu0 %v1982
    %2654 = vmatprep.subr.mxu0 0.0
    %2655 = vmatpush1.msra.mxu0 %v1983
    %2656 = vmatprep.subr.mxu0 0.0
    %2657 = vmatpush1.msra.mxu0 %v2000
    %2658 = vmatprep.subr.mxu0 0.0
    %2659 = vmatpush1.msra.mxu0 0.0
    %2660 = vmatprep.subr.mxu0 0.0
    %2661 = vmatpush1.msra.mxu0 0.0
    %2662 = vmatprep.subr.mxu0 0.0
    %2663 = vmatpush1.msra.mxu0 0.0
    %2664 = vmatprep.subr.mxu0 0.0
    %2665 = vmatpush1.msra.mxu0 0.0
    %2666 = vmatprep.subr.mxu0 0.0
    %2667 = vmatpush1.msra.mxu0 0.0
    %2668 = vmatprep.subr.mxu0 0.0
    %2669 = vmatpush1.msra.mxu0 0.0
    %2670 = vmatprep.subr.mxu0 0.0
    %2671 = vmatpush1.msra.mxu0 0.0
    %2672 = vmatprep.subr.mxu0 0.0
    %2673 = vmatpush1.msra.mxu0 0.0
    %2674 = vmatprep.subr.mxu0 0.0
    %2675 = vmatpush1.msra.mxu0 0.0
    %2676 = vmatprep.subr.mxu0 0.0
    %2677 = vmatpush1.msra.mxu0 0.0
    %2678 = vmatprep.subr.mxu0 0.0
    %2679 = vmatpush1.msra.mxu0 0.0
    %2680 = vmatprep.subr.mxu0 0.0
    %2681 = vmatpush1.msra.mxu0 0.0
    %2682 = vmatprep.subr.mxu0 0.0
    %2683 = vmatpush1.msra.mxu0 0.0
    %2684 = vmatprep.subr.mxu0 0.0
    %2685 = vmatpush1.msra.mxu0 0.0
    %2686 = vmatprep.subr.mxu0 0.0
    %2687 = vmatpush1.msra.mxu0 0.0
    %2688 = vmatprep.subr.mxu0 0.0
    %2689 = vmatpush1.msra.mxu0 0.0
    %2690 = vmatprep.subr.mxu0 0.0
    %2691 = vmatpush1.msra.mxu0 0.0
    %2692 = vmatprep.subr.mxu0 0.0
    %2693 = vmatpush1.msra.mxu0 0.0
    %2694 = vmatprep.subr.mxu0 0.0
    %2695 = vmatpush1.msra.mxu0 0.0
    %2696 = vmatprep.subr.mxu0 0.0
    %2697 = vmatpush1.msra.mxu0 0.0
    %2698 = vmatprep.subr.mxu0 0.0
    %2699 = vmatpush1.msra.mxu0 0.0
    %2700 = vmatprep.subr.mxu0 0.0
    %2701 = vmatpush1.msra.mxu0 0.0
    %2702 = vmatprep.subr.mxu0 0.0
    %2703 = vmatpush1.msra.mxu0 0.0
    %2704 = vmatprep.subr.mxu0 0.0
    %2705 = vmatpush1.msra.mxu0 0.0
    %2706 = vmatprep.subr.mxu0 0.0
    %2707 = vmatpush1.msra.mxu0 0.0
    %2708 = vmatprep.subr.mxu0 0.0
    %2709 = vmatpush1.msra.mxu0 0.0
    %2710 = vmatprep.subr.mxu0 0.0
    %2711 = vmatpush1.msra.mxu0 0.0
    %2712 = vmatprep.subr.mxu0 0.0
    %2713 = vmatpush1.msra.mxu0 0.0
    %2714 = vmatprep.mubr.f32.mxu0 0.0
    %2715 = vmatmul.mubr.f32.gmra.mrb[0].mxu0 %v2642
    %v2716 = vpop.f32.mrb[0].mxu0
    %v2717 = vadd.f32 0.0, %v2716
    %v2718 = vpop.f32.mrb[0].mxu0
    %2719 = vmatprep.mubr.f32.mxu0 0.0
    %2720 = vmatmul.mubr.f32.gmra.mrb[0].mxu0 %v2645
    %v2721 = vpop.f32.mrb[0].mxu0
    %v2722 = vadd.f32 0.0, %v2721
    %v2723 = vpop.f32.mrb[0].mxu0
    %2724 = vmatprep.mubr.f32.mxu0 0.0
    %2725 = vmatmul.mubr.f32.gmra.mrb[0].mxu0 %v2648
    %v2726 = vpop.f32.mrb[0].mxu0
    %v2727 = vadd.f32 0.0, %v2726
    %v2728 = vpop.f32.mrb[0].mxu0
    %2729 = vdwg.mxu0
    %s2730 = scalar_lea.vmem %s7, 528
    %v2731 = vld [vmem:[%s2730] sm:$0xff]
    %v2732 = vld [vmem:[%s2730 + $0x8] sm:$0xff]
    %v2733 = vld [vmem:[%s2730 + $0x10] sm:$0xff]
    %v2734 = vld [vmem:[%s2730 + $0x18] sm:$0xff]
    %v2735 = vld [vmem:[%s2730 + $0x20] sm:$0xff]
    %v2736 = vld [vmem:[%s2730 + $0x28] sm:$0xff]
    %v2737 = vld [vmem:[%s2730 + $0x30] sm:$0xff]
    %v2738 = vld [vmem:[%s2730 + $0x38] sm:$0xff]
    %v2739 = vld [vmem:[%s2730 + $0x40] sm:$0xff]
    %v2740 = vld [vmem:[%s2730 + $0x48] sm:$0xff]
    %v2741 = vld [vmem:[%s2730 + $0x50] sm:$0xff]
    %v2742 = vld [vmem:[%s2730 + $0x58] sm:$0xff]
    %v2743 = vld [vmem:[%s2730 + $0x60] sm:$0xff]
    %v2744 = vld [vmem:[%s2730 + $0x68] sm:$0xff]
    %v2745 = vld [vmem:[%s2730 + $0x70] sm:$0xff]
    %v2746 = vld [vmem:[%s2730 + $0x78] sm:$0xff]
    %v2747 = vld [vmem:[%s2730 + $0x80] sm:$0xff]
    %v2748 = vld [vmem:[%s2730 + $0x88] sm:$0xff]
    %v2749 = vld [vmem:[%s2730 + $0x90] sm:$0xff]
    %v2750 = vld [vmem:[%s2730 + $0x98] sm:$0xff]
    %v2751 = vld [vmem:[%s2730 + $0xa0] sm:$0xf]
    %v2752 = vld [vmem:[%s2730 + $0xa8] sm:$0xf]
    %v2754 = vsel %vm2220, %v2717, 0
    %v2757 = vsel %vm2220, %v2722, 0
    %v2760 = vsel %vm2220, %v2727, 0
    %v2763 = vsel %vm1998, %v2751, 0
    %v2766 = vsel %vm1998, %v2752, 0
    %2768 = vmatprep.subr.mxu0 %v2732
    %2769 = vmatpush1.msra.mxu0 %v2731
    %2770 = vmatprep.subr.mxu0 %v2734
    %2771 = vmatpush1.msra.mxu0 %v2733
    %2772 = vmatprep.subr.mxu0 %v2736
    %2773 = vmatpush1.msra.mxu0 %v2735
    %2774 = vmatprep.subr.mxu0 %v2738
    %2775 = vmatpush1.msra.mxu0 %v2737
    %2776 = vmatprep.subr.mxu0 %v2740
    %2777 = vmatpush1.msra.mxu0 %v2739
    %2778 = vmatprep.subr.mxu0 %v2742
    %2779 = vmatpush1.msra.mxu0 %v2741
    %2780 = vmatprep.subr.mxu0 %v2744
    %2781 = vmatpush1.msra.mxu0 %v2743
    %2782 = vmatprep.subr.mxu0 %v2746
    %2783 = vmatpush1.msra.mxu0 %v2745
    %2784 = vmatprep.subr.mxu0 %v2748
    %2785 = vmatpush1.msra.mxu0 %v2747
    %2786 = vmatprep.subr.mxu0 %v2750
    %2787 = vmatpush1.msra.mxu0 %v2749
    %2788 = vmatprep.subr.mxu0 %v2766
    %2789 = vmatpush1.msra.mxu0 %v2763
    %2790 = vmatprep.subr.mxu0 0.0
    %2791 = vmatpush1.msra.mxu0 0.0
    %2792 = vmatprep.subr.mxu0 0.0
    %2793 = vmatpush1.msra.mxu0 0.0
    %2794 = vmatprep.subr.mxu0 0.0
    %2795 = vmatpush1.msra.mxu0 0.0
    %2796 = vmatprep.subr.mxu0 0.0
    %2797 = vmatpush1.msra.mxu0 0.0
    %2798 = vmatprep.subr.mxu0 0.0
    %2799 = vmatpush1.msra.mxu0 0.0
    %2800 = vmatprep.subr.mxu0 0.0
    %2801 = vmatpush1.msra.mxu0 0.0
    %2802 = vmatprep.subr.mxu0 0.0
    %2803 = vmatpush1.msra.mxu0 0.0
    %2804 = vmatprep.subr.mxu0 0.0
    %2805 = vmatpush1.msra.mxu0 0.0
    %2806 = vmatprep.subr.mxu0 0.0
    %2807 = vmatpush1.msra.mxu0 0.0
    %2808 = vmatprep.subr.mxu0 0.0
    %2809 = vmatpush1.msra.mxu0 0.0
    %2810 = vmatprep.subr.mxu0 0.0
    %2811 = vmatpush1.msra.mxu0 0.0
    %2812 = vmatprep.subr.mxu0 0.0
    %2813 = vmatpush1.msra.mxu0 0.0
    %2814 = vmatprep.subr.mxu0 0.0
    %2815 = vmatpush1.msra.mxu0 0.0
    %2816 = vmatprep.subr.mxu0 0.0
    %2817 = vmatpush1.msra.mxu0 0.0
    %2818 = vmatprep.subr.mxu0 0.0
    %2819 = vmatpush1.msra.mxu0 0.0
    %2820 = vmatprep.subr.mxu0 0.0
    %2821 = vmatpush1.msra.mxu0 0.0
    %2822 = vmatprep.subr.mxu0 0.0
    %2823 = vmatpush1.msra.mxu0 0.0
    %2824 = vmatprep.subr.mxu0 0.0
    %2825 = vmatpush1.msra.mxu0 0.0
    %2826 = vmatprep.subr.mxu0 0.0
    %2827 = vmatpush1.msra.mxu0 0.0
    %2828 = vmatprep.subr.mxu0 0.0
    %2829 = vmatpush1.msra.mxu0 0.0
    %2830 = vmatprep.subr.mxu0 0.0
    %2831 = vmatpush1.msra.mxu0 0.0
    %2832 = vmatprep.mubr.f32.mxu0 0.0
    %2833 = vmatmul.mubr.f32.gmra.mrb[0].mxu0 %v2754
    %v2834 = vpop.f32.mrb[0].mxu0
    %v2835 = vadd.f32 0.0, %v2834
    %v2836 = vpop.f32.mrb[0].mxu0
    %v2837 = vadd.f32 0.0, %v2836
    %2838 = vmatprep.mubr.f32.mxu0 0.0
    %2839 = vmatmul.mubr.f32.gmra.mrb[0].mxu0 %v2757
    %v2840 = vpop.f32.mrb[0].mxu0
    %v2841 = vadd.f32 0.0, %v2840
    %v2842 = vpop.f32.mrb[0].mxu0
    %v2843 = vadd.f32 0.0, %v2842
    %2844 = vmatprep.mubr.f32.mxu0 0.0
    %2845 = vmatmul.mubr.f32.gmra.mrb[0].mxu0 %v2760
    %v2846 = vpop.f32.mrb[0].mxu0
    %v2847 = vadd.f32 0.0, %v2846
    %v2848 = vpop.f32.mrb[0].mxu0
    %v2849 = vadd.f32 0.0, %v2848
    %2850 = vdwg.mxu0
    %v2851 = vadd.f32 %v2631, %v2835
    %v2852 = vadd.f32 %v2632, %v2837
    %v2853 = vadd.f32 %v2633, %v2841
    %v2854 = vadd.f32 %v2634, %v2843
    %v2855 = vadd.f32 %v2635, %v2847
    %v2856 = vadd.f32 %v2636, %v2849
    %s2857 = scalar_lea.vmem %s6, 96
    %v2858 = vld [vmem:[%s2857] sm:$0xff]
    %v2859 = vld [vmem:[%s2857 + $0x8] sm:$0xff]
    %v2860 = vld [vmem:[%s2857 + $0x10] sm:$0xf]
    %v2862 = vsel %vm1988, %v2858, 0
    %v2865 = vsel %vm1988, %v2859, 0
    %v2868 = vsel %vm1988, %v2860, 0
    %2870 = vmatprep.subr.mxu0 0.0
    %2871 = vmatpush1.msra.mxu0 %v1981
    %2872 = vmatprep.subr.mxu0 0.0
    %2873 = vmatpush1.msra.mxu0 %v1982
    %2874 = vmatprep.subr.mxu0 0.0
    %2875 = vmatpush1.msra.mxu0 %v1983
    %2876 = vmatprep.subr.mxu0 0.0
    %2877 = vmatpush1.msra.mxu0 %v2000
    %2878 = vmatprep.subr.mxu0 0.0
    %2879 = vmatpush1.msra.mxu0 0.0
    %2880 = vmatprep.subr.mxu0 0.0
    %2881 = vmatpush1.msra.mxu0 0.0
    %2882 = vmatprep.subr.mxu0 0.0
    %2883 = vmatpush1.msra.mxu0 0.0
    %2884 = vmatprep.subr.mxu0 0.0
    %2885 = vmatpush1.msra.mxu0 0.0
    %2886 = vmatprep.subr.mxu0 0.0
    %2887 = vmatpush1.msra.mxu0 0.0
    %2888 = vmatprep.subr.mxu0 0.0
    %2889 = vmatpush1.msra.mxu0 0.0
    %2890 = vmatprep.subr.mxu0 0.0
    %2891 = vmatpush1.msra.mxu0 0.0
    %2892 = vmatprep.subr.mxu0 0.0
    %2893 = vmatpush1.msra.mxu0 0.0
    %2894 = vmatprep.subr.mxu0 0.0
    %2895 = vmatpush1.msra.mxu0 0.0
    %2896 = vmatprep.subr.mxu0 0.0
    %2897 = vmatpush1.msra.mxu0 0.0
    %2898 = vmatprep.subr.mxu0 0.0
    %2899 = vmatpush1.msra.mxu0 0.0
    %2900 = vmatprep.subr.mxu0 0.0
    %2901 = vmatpush1.msra.mxu0 0.0
    %2902 = vmatprep.subr.mxu0 0.0
    %2903 = vmatpush1.msra.mxu0 0.0
    %2904 = vmatprep.subr.mxu0 0.0
    %2905 = vmatpush1.msra.mxu0 0.0
    %2906 = vmatprep.subr.mxu0 0.0
    %2907 = vmatpush1.msra.mxu0 0.0
    %2908 = vmatprep.subr.mxu0 0.0
    %2909 = vmatpush1.msra.mxu0 0.0
    %2910 = vmatprep.subr.mxu0 0.0
    %2911 = vmatpush1.msra.mxu0 0.0
    %2912 = vmatprep.subr.mxu0 0.0
    %2913 = vmatpush1.msra.mxu0 0.0
    %2914 = vmatprep.subr.mxu0 0.0
    %2915 = vmatpush1.msra.mxu0 0.0
    %2916 = vmatprep.subr.mxu0 0.0
    %2917 = vmatpush1.msra.mxu0 0.0
    %2918 = vmatprep.subr.mxu0 0.0
    %2919 = vmatpush1.msra.mxu0 0.0
    %2920 = vmatprep.subr.mxu0 0.0
    %2921 = vmatpush1.msra.mxu0 0.0
    %2922 = vmatprep.subr.mxu0 0.0
    %2923 = vmatpush1.msra.mxu0 0.0
    %2924 = vmatprep.subr.mxu0 0.0
    %2925 = vmatpush1.msra.mxu0 0.0
    %2926 = vmatprep.subr.mxu0 0.0
    %2927 = vmatpush1.msra.mxu0 0.0
    %2928 = vmatprep.subr.mxu0 0.0
    %2929 = vmatpush1.msra.mxu0 0.0
    %2930 = vmatprep.subr.mxu0 0.0
    %2931 = vmatpush1.msra.mxu0 0.0
    %2932 = vmatprep.subr.mxu0 0.0
    %2933 = vmatpush1.msra.mxu0 0.0
    %2934 = vmatprep.mubr.f32.mxu0 0.0
    %2935 = vmatmul.mubr.f32.gmra.mrb[0].mxu0 %v2862
    %v2936 = vpop.f32.mrb[0].mxu0
    %v2937 = vadd.f32 0.0, %v2936
    %v2938 = vpop.f32.mrb[0].mxu0
    %2939 = vmatprep.mubr.f32.mxu0 0.0
    %2940 = vmatmul.mubr.f32.gmra.mrb[0].mxu0 %v2865
    %v2941 = vpop.f32.mrb[0].mxu0
    %v2942 = vadd.f32 0.0, %v2941
    %v2943 = vpop.f32.mrb[0].mxu0
    %2944 = vmatprep.mubr.f32.mxu0 0.0
    %2945 = vmatmul.mubr.f32.gmra.mrb[0].mxu0 %v2868
    %v2946 = vpop.f32.mrb[0].mxu0
    %v2947 = vadd.f32 0.0, %v2946
    %v2948 = vpop.f32.mrb[0].mxu0
    %2949 = vdwg.mxu0
    %s2950 = scalar_lea.vmem %s7, 704
    %v2951 = vld [vmem:[%s2950] sm:$0xff]
    %v2952 = vld [vmem:[%s2950 + $0x8] sm:$0xff]
    %v2953 = vld [vmem:[%s2950 + $0x10] sm:$0xff]
    %v2954 = vld [vmem:[%s2950 + $0x18] sm:$0xff]
    %v2955 = vld [vmem:[%s2950 + $0x20] sm:$0xff]
    %v2956 = vld [vmem:[%s2950 + $0x28] sm:$0xff]
    %v2957 = vld [vmem:[%s2950 + $0x30] sm:$0xff]
    %v2958 = vld [vmem:[%s2950 + $0x38] sm:$0xff]
    %v2959 = vld [vmem:[%s2950 + $0x40] sm:$0xff]
    %v2960 = vld [vmem:[%s2950 + $0x48] sm:$0xff]
    %v2961 = vld [vmem:[%s2950 + $0x50] sm:$0xff]
    %v2962 = vld [vmem:[%s2950 + $0x58] sm:$0xff]
    %v2963 = vld [vmem:[%s2950 + $0x60] sm:$0xff]
    %v2964 = vld [vmem:[%s2950 + $0x68] sm:$0xff]
    %v2965 = vld [vmem:[%s2950 + $0x70] sm:$0xff]
    %v2966 = vld [vmem:[%s2950 + $0x78] sm:$0xff]
    %v2967 = vld [vmem:[%s2950 + $0x80] sm:$0xff]
    %v2968 = vld [vmem:[%s2950 + $0x88] sm:$0xff]
    %v2969 = vld [vmem:[%s2950 + $0x90] sm:$0xff]
    %v2970 = vld [vmem:[%s2950 + $0x98] sm:$0xff]
    %v2971 = vld [vmem:[%s2950 + $0xa0] sm:$0xf]
    %v2972 = vld [vmem:[%s2950 + $0xa8] sm:$0xf]
    %v2974 = vsel %vm2220, %v2937, 0
    %v2977 = vsel %vm2220, %v2942, 0
    %v2980 = vsel %vm2220, %v2947, 0
    %v2983 = vsel %vm1998, %v2971, 0
    %v2986 = vsel %vm1998, %v2972, 0
    %2988 = vmatprep.subr.mxu0 %v2952
    %2989 = vmatpush1.msra.mxu0 %v2951
    %2990 = vmatprep.subr.mxu0 %v2954
    %2991 = vmatpush1.msra.mxu0 %v2953
    %2992 = vmatprep.subr.mxu0 %v2956
    %2993 = vmatpush1.msra.mxu0 %v2955
    %2994 = vmatprep.subr.mxu0 %v2958
    %2995 = vmatpush1.msra.mxu0 %v2957
    %2996 = vmatprep.subr.mxu0 %v2960
    %2997 = vmatpush1.msra.mxu0 %v2959
    %2998 = vmatprep.subr.mxu0 %v2962
    %2999 = vmatpush1.msra.mxu0 %v2961
    %3000 = vmatprep.subr.mxu0 %v2964
    %3001 = vmatpush1.msra.mxu0 %v2963
    %3002 = vmatprep.subr.mxu0 %v2966
    %3003 = vmatpush1.msra.mxu0 %v2965
    %3004 = vmatprep.subr.mxu0 %v2968
    %3005 = vmatpush1.msra.mxu0 %v2967
    %3006 = vmatprep.subr.mxu0 %v2970
    %3007 = vmatpush1.msra.mxu0 %v2969
    %3008 = vmatprep.subr.mxu0 %v2986
    %3009 = vmatpush1.msra.mxu0 %v2983
    %3010 = vmatprep.subr.mxu0 0.0
    %3011 = vmatpush1.msra.mxu0 0.0
    %3012 = vmatprep.subr.mxu0 0.0
    %3013 = vmatpush1.msra.mxu0 0.0
    %3014 = vmatprep.subr.mxu0 0.0
    %3015 = vmatpush1.msra.mxu0 0.0
    %3016 = vmatprep.subr.mxu0 0.0
    %3017 = vmatpush1.msra.mxu0 0.0
    %3018 = vmatprep.subr.mxu0 0.0
    %3019 = vmatpush1.msra.mxu0 0.0
    %3020 = vmatprep.subr.mxu0 0.0
    %3021 = vmatpush1.msra.mxu0 0.0
    %3022 = vmatprep.subr.mxu0 0.0
    %3023 = vmatpush1.msra.mxu0 0.0
    %3024 = vmatprep.subr.mxu0 0.0
    %3025 = vmatpush1.msra.mxu0 0.0
    %3026 = vmatprep.subr.mxu0 0.0
    %3027 = vmatpush1.msra.mxu0 0.0
    %3028 = vmatprep.subr.mxu0 0.0
    %3029 = vmatpush1.msra.mxu0 0.0
    %3030 = vmatprep.subr.mxu0 0.0
    %3031 = vmatpush1.msra.mxu0 0.0
    %3032 = vmatprep.subr.mxu0 0.0
    %3033 = vmatpush1.msra.mxu0 0.0
    %3034 = vmatprep.subr.mxu0 0.0
    %3035 = vmatpush1.msra.mxu0 0.0
    %3036 = vmatprep.subr.mxu0 0.0
    %3037 = vmatpush1.msra.mxu0 0.0
    %3038 = vmatprep.subr.mxu0 0.0
    %3039 = vmatpush1.msra.mxu0 0.0
    %3040 = vmatprep.subr.mxu0 0.0
    %3041 = vmatpush1.msra.mxu0 0.0
    %3042 = vmatprep.subr.mxu0 0.0
    %3043 = vmatpush1.msra.mxu0 0.0
    %3044 = vmatprep.subr.mxu0 0.0
    %3045 = vmatpush1.msra.mxu0 0.0
    %3046 = vmatprep.subr.mxu0 0.0
    %3047 = vmatpush1.msra.mxu0 0.0
    %3048 = vmatprep.subr.mxu0 0.0
    %3049 = vmatpush1.msra.mxu0 0.0
    %3050 = vmatprep.subr.mxu0 0.0
    %3051 = vmatpush1.msra.mxu0 0.0
    %3052 = vmatprep.mubr.f32.mxu0 0.0
    %3053 = vmatmul.mubr.f32.gmra.mrb[0].mxu0 %v2974
    %v3054 = vpop.f32.mrb[0].mxu0
    %v3055 = vadd.f32 0.0, %v3054
    %v3056 = vpop.f32.mrb[0].mxu0
    %v3057 = vadd.f32 0.0, %v3056
    %3058 = vmatprep.mubr.f32.mxu0 0.0
    %3059 = vmatmul.mubr.f32.gmra.mrb[0].mxu0 %v2977
    %v3060 = vpop.f32.mrb[0].mxu0
    %v3061 = vadd.f32 0.0, %v3060
    %v3062 = vpop.f32.mrb[0].mxu0
    %v3063 = vadd.f32 0.0, %v3062
    %3064 = vmatprep.mubr.f32.mxu0 0.0
    %3065 = vmatmul.mubr.f32.gmra.mrb[0].mxu0 %v2980
    %v3066 = vpop.f32.mrb[0].mxu0
    %v3067 = vadd.f32 0.0, %v3066
    %v3068 = vpop.f32.mrb[0].mxu0
    %v3069 = vadd.f32 0.0, %v3068
    %3070 = vdwg.mxu0
    %v3071 = vadd.f32 %v2851, %v3055
    %v3072 = vadd.f32 %v2852, %v3057
    %v3073 = vadd.f32 %v2853, %v3061
    %v3074 = vadd.f32 %v2854, %v3063
    %v3075 = vadd.f32 %v2855, %v3067
    %v3076 = vadd.f32 %v2856, %v3069
    %v3077 = vld [vmem:[%s9] sm:$0xff]
    %v3078 = vld [vmem:[%s9 + $0x8] sm:$0x3]
    %vm3079 = vcmask 162816
    %v3081 = vsel %vm3079, %v3077, 0
    %v3084 = vsel %vm3079, %v3078, 0
    %v3087 = vsel %vm1998, %v3075, 0
    %v3090 = vsel %vm1998, %v3076, 0
    %3092 = vmatprep.subr.mxu0 %v3072
    %3093 = vmatpush1.msra.mxu0 %v3071
    %3094 = vmatprep.subr.mxu0 %v3074
    %3095 = vmatpush1.msra.mxu0 %v3073
    %3096 = vmatprep.subr.mxu0 %v3090
    %3097 = vmatpush1.msra.mxu0 %v3087
    %3098 = vmatprep.subr.mxu0 0.0
    %3099 = vmatpush1.msra.mxu0 0.0
    %3100 = vmatprep.subr.mxu0 0.0
    %3101 = vmatpush1.msra.mxu0 0.0
    %3102 = vmatprep.subr.mxu0 0.0
    %3103 = vmatpush1.msra.mxu0 0.0
    %3104 = vmatprep.subr.mxu0 0.0
    %3105 = vmatpush1.msra.mxu0 0.0
    %3106 = vmatprep.subr.mxu0 0.0
    %3107 = vmatpush1.msra.mxu0 0.0
    %3108 = vmatprep.subr.mxu0 0.0
    %3109 = vmatpush1.msra.mxu0 0.0
    %3110 = vmatprep.subr.mxu0 0.0
    %3111 = vmatpush1.msra.mxu0 0.0
    %3112 = vmatprep.subr.mxu0 0.0
    %3113 = vmatpush1.msra.mxu0 0.0
    %3114 = vmatprep.subr.mxu0 0.0
    %3115 = vmatpush1.msra.mxu0 0.0
    %3116 = vmatprep.subr.mxu0 0.0
    %3117 = vmatpush1.msra.mxu0 0.0
    %3118 = vmatprep.subr.mxu0 0.0
    %3119 = vmatpush1.msra.mxu0 0.0
    %3120 = vmatprep.subr.mxu0 0.0
    %3121 = vmatpush1.msra.mxu0 0.0
    %3122 = vmatprep.subr.mxu0 0.0
    %3123 = vmatpush1.msra.mxu0 0.0
    %3124 = vmatprep.subr.mxu0 0.0
    %3125 = vmatpush1.msra.mxu0 0.0
    %3126 = vmatprep.subr.mxu0 0.0
    %3127 = vmatpush1.msra.mxu0 0.0
    %3128 = vmatprep.subr.mxu0 0.0
    %3129 = vmatpush1.msra.mxu0 0.0
    %3130 = vmatprep.subr.mxu0 0.0
    %3131 = vmatpush1.msra.mxu0 0.0
    %3132 = vmatprep.subr.mxu0 0.0
    %3133 = vmatpush1.msra.mxu0 0.0
    %3134 = vmatprep.subr.mxu0 0.0
    %3135 = vmatpush1.msra.mxu0 0.0
    %3136 = vmatprep.subr.mxu0 0.0
    %3137 = vmatpush1.msra.mxu0 0.0
    %3138 = vmatprep.subr.mxu0 0.0
    %3139 = vmatpush1.msra.mxu0 0.0
    %3140 = vmatprep.subr.mxu0 0.0
    %3141 = vmatpush1.msra.mxu0 0.0
    %3142 = vmatprep.subr.mxu0 0.0
    %3143 = vmatpush1.msra.mxu0 0.0
    %3144 = vmatprep.subr.mxu0 0.0
    %3145 = vmatpush1.msra.mxu0 0.0
    %3146 = vmatprep.subr.mxu0 0.0
    %3147 = vmatpush1.msra.mxu0 0.0
    %3148 = vmatprep.subr.mxu0 0.0
    %3149 = vmatpush1.msra.mxu0 0.0
    %3150 = vmatprep.subr.mxu0 0.0
    %3151 = vmatpush1.msra.mxu0 0.0
    %3152 = vmatprep.subr.mxu0 0.0
    %3153 = vmatpush1.msra.mxu0 0.0
    %3154 = vmatprep.subr.mxu0 0.0
    %3155 = vmatpush1.msra.mxu0 0.0
    %3156 = vmatprep.mubr.f32.mxu0 0.0
    %3157 = vmatmul.mubr.f32.gmra.mrb[0].mxu0 %v3081
    %v3158 = vpop.f32.mrb[0].mxu0
    %v3159 = vadd.f32 0.0, %v3158
    %v3160 = vpop.f32.mrb[0].mxu0
    %v3161 = vadd.f32 0.0, %v3160
    %3162 = vmatprep.mubr.f32.mxu0 0.0
    %3163 = vmatmul.mubr.f32.gmra.mrb[0].mxu0 %v3084
    %v3164 = vpop.f32.mrb[0].mxu0
    %v3165 = vadd.f32 0.0, %v3164
    %v3166 = vpop.f32.mrb[0].mxu0
    %v3167 = vadd.f32 0.0, %v3166
    %3168 = vdwg.mxu0
    %s3169 = scalar_lea.vmem %s9, 16
    %v3170 = vld [vmem:[%s3169] sm:$0xff]
    %v3171 = vld [vmem:[%s3169 + $0x8] sm:$0x3]
    %v3173 = vsel %vm3079, %v3170, 0
    %v3176 = vsel %vm3079, %v3171, 0
    %3178 = vmatprep.subr.mxu0 %v3072
    %3179 = vmatpush1.msra.mxu0 %v3071
    %3180 = vmatprep.subr.mxu0 %v3074
    %3181 = vmatpush1.msra.mxu0 %v3073
    %3182 = vmatprep.subr.mxu0 %v3090
    %3183 = vmatpush1.msra.mxu0 %v3087
    %3184 = vmatprep.subr.mxu0 0.0
    %3185 = vmatpush1.msra.mxu0 0.0
    %3186 = vmatprep.subr.mxu0 0.0
    %3187 = vmatpush1.msra.mxu0 0.0
    %3188 = vmatprep.subr.mxu0 0.0
    %3189 = vmatpush1.msra.mxu0 0.0
    %3190 = vmatprep.subr.mxu0 0.0
    %3191 = vmatpush1.msra.mxu0 0.0
    %3192 = vmatprep.subr.mxu0 0.0
    %3193 = vmatpush1.msra.mxu0 0.0
    %3194 = vmatprep.subr.mxu0 0.0
    %3195 = vmatpush1.msra.mxu0 0.0
    %3196 = vmatprep.subr.mxu0 0.0
    %3197 = vmatpush1.msra.mxu0 0.0
    %3198 = vmatprep.subr.mxu0 0.0
    %3199 = vmatpush1.msra.mxu0 0.0
    %3200 = vmatprep.subr.mxu0 0.0
    %3201 = vmatpush1.msra.mxu0 0.0
    %3202 = vmatprep.subr.mxu0 0.0
    %3203 = vmatpush1.msra.mxu0 0.0
    %3204 = vmatprep.subr.mxu0 0.0
    %3205 = vmatpush1.msra.mxu0 0.0
    %3206 = vmatprep.subr.mxu0 0.0
    %3207 = vmatpush1.msra.mxu0 0.0
    %3208 = vmatprep.subr.mxu0 0.0
    %3209 = vmatpush1.msra.mxu0 0.0
    %3210 = vmatprep.subr.mxu0 0.0
    %3211 = vmatpush1.msra.mxu0 0.0
    %3212 = vmatprep.subr.mxu0 0.0
    %3213 = vmatpush1.msra.mxu0 0.0
    %3214 = vmatprep.subr.mxu0 0.0
    %3215 = vmatpush1.msra.mxu0 0.0
    %3216 = vmatprep.subr.mxu0 0.0
    %3217 = vmatpush1.msra.mxu0 0.0
    %3218 = vmatprep.subr.mxu0 0.0
    %3219 = vmatpush1.msra.mxu0 0.0
    %3220 = vmatprep.subr.mxu0 0.0
    %3221 = vmatpush1.msra.mxu0 0.0
    %3222 = vmatprep.subr.mxu0 0.0
    %3223 = vmatpush1.msra.mxu0 0.0
    %3224 = vmatprep.subr.mxu0 0.0
    %3225 = vmatpush1.msra.mxu0 0.0
    %3226 = vmatprep.subr.mxu0 0.0
    %3227 = vmatpush1.msra.mxu0 0.0
    %3228 = vmatprep.subr.mxu0 0.0
    %3229 = vmatpush1.msra.mxu0 0.0
    %3230 = vmatprep.subr.mxu0 0.0
    %3231 = vmatpush1.msra.mxu0 0.0
    %3232 = vmatprep.subr.mxu0 0.0
    %3233 = vmatpush1.msra.mxu0 0.0
    %3234 = vmatprep.subr.mxu0 0.0
    %3235 = vmatpush1.msra.mxu0 0.0
    %3236 = vmatprep.subr.mxu0 0.0
    %3237 = vmatpush1.msra.mxu0 0.0
    %3238 = vmatprep.subr.mxu0 0.0
    %3239 = vmatpush1.msra.mxu0 0.0
    %3240 = vmatprep.subr.mxu0 0.0
    %3241 = vmatpush1.msra.mxu0 0.0
    %3242 = vmatprep.mubr.f32.mxu0 0.0
    %3243 = vmatmul.mubr.f32.gmra.mrb[0].mxu0 %v3173
    %v3244 = vpop.f32.mrb[0].mxu0
    %v3245 = vadd.f32 0.0, %v3244
    %v3246 = vpop.f32.mrb[0].mxu0
    %v3247 = vadd.f32 0.0, %v3246
    %3248 = vmatprep.mubr.f32.mxu0 0.0
    %3249 = vmatmul.mubr.f32.gmra.mrb[0].mxu0 %v3176
    %v3250 = vpop.f32.mrb[0].mxu0
    %v3251 = vadd.f32 0.0, %v3250
    %v3252 = vpop.f32.mrb[0].mxu0
    %v3253 = vadd.f32 0.0, %v3252
    %3254 = vdwg.mxu0
    %v3255 = vmax.f32 %v3159, %v3245
    %v3256 = vmax.f32 %v3161, %v3247
    %v3257 = vmax.f32 %v3165, %v3251
    %v3258 = vmax.f32 %v3167, %v3253
    %v3259 = vld [vmem:[%s10] sm:$0xff]
    %v3260 = vld [vmem:[%s10 + $0x8] sm:$0xff]
    %v3261 = vld [vmem:[%s10 + $0x10] sm:$0xff]
    %v3262 = vld [vmem:[%s10 + $0x18] sm:$0xff]
    %v3263 = vld [vmem:[%s10 + $0x20] sm:$0xff]
    %v3264 = vld [vmem:[%s10 + $0x28] sm:$0xff]
    %v3265 = vld [vmem:[%s10 + $0x30] sm:$0xff]
    %v3266 = vld [vmem:[%s10 + $0x38] sm:$0xff]
    %v3267 = vld [vmem:[%s10 + $0x40] sm:$0xff]
    %v3268 = vld [vmem:[%s10 + $0x48] sm:$0xff]
    %v3269 = vld [vmem:[%s10 + $0x50] sm:$0xff]
    %v3270 = vld [vmem:[%s10 + $0x58] sm:$0xff]
    %v3271 = vld [vmem:[%s10 + $0x60] sm:$0xff]
    %v3272 = vld [vmem:[%s10 + $0x68] sm:$0xff]
    %v3273 = vld [vmem:[%s10 + $0x70] sm:$0xff]
    %v3274 = vld [vmem:[%s10 + $0x78] sm:$0xff]
    %v3275 = vld [vmem:[%s10 + $0x80] sm:$0xff]
    %v3276 = vld [vmem:[%s10 + $0x88] sm:$0xff]
    %v3277 = vld [vmem:[%s10 + $0x90] sm:$0xff]
    %v3278 = vld [vmem:[%s10 + $0x98] sm:$0xff]
    %vm3279 = vcmask 261120
    %v3281 = vsel %vm3279, %v3256, 0
    %v3284 = vsel %vm3279, %v3258, 0
    %3286 = vmatprep.subr.mxu0 0.0
    %3287 = vmatpush1.msra.mxu0 %v3259
    %3288 = vmatprep.subr.mxu0 0.0
    %3289 = vmatpush1.msra.mxu0 %v3260
    %3290 = vmatprep.subr.mxu0 0.0
    %3291 = vmatpush1.msra.mxu0 %v3261
    %3292 = vmatprep.subr.mxu0 0.0
    %3293 = vmatpush1.msra.mxu0 %v3262
    %3294 = vmatprep.subr.mxu0 0.0
    %3295 = vmatpush1.msra.mxu0 %v3263
    %3296 = vmatprep.subr.mxu0 0.0
    %3297 = vmatpush1.msra.mxu0 %v3264
    %3298 = vmatprep.subr.mxu0 0.0
    %3299 = vmatpush1.msra.mxu0 %v3265
    %3300 = vmatprep.subr.mxu0 0.0
    %3301 = vmatpush1.msra.mxu0 %v3266
    %3302 = vmatprep.subr.mxu0 0.0
    %3303 = vmatpush1.msra.mxu0 %v3267
    %3304 = vmatprep.subr.mxu0 0.0
    %3305 = vmatpush1.msra.mxu0 %v3268
    %3306 = vmatprep.subr.mxu0 0.0
    %3307 = vmatpush1.msra.mxu0 %v3269
    %3308 = vmatprep.subr.mxu0 0.0
    %3309 = vmatpush1.msra.mxu0 %v3270
    %3310 = vmatprep.subr.mxu0 0.0
    %3311 = vmatpush1.msra.mxu0 %v3271
    %3312 = vmatprep.subr.mxu0 0.0
    %3313 = vmatpush1.msra.mxu0 %v3272
    %3314 = vmatprep.subr.mxu0 0.0
    %3315 = vmatpush1.msra.mxu0 %v3273
    %3316 = vmatprep.subr.mxu0 0.0
    %3317 = vmatpush1.msra.mxu0 %v3274
    %3318 = vmatprep.subr.mxu0 0.0
    %3319 = vmatpush1.msra.mxu0 %v3275
    %3320 = vmatprep.subr.mxu0 0.0
    %3321 = vmatpush1.msra.mxu0 %v3276
    %3322 = vmatprep.subr.mxu0 0.0
    %3323 = vmatpush1.msra.mxu0 %v3277
    %3324 = vmatprep.subr.mxu0 0.0
    %3325 = vmatpush1.msra.mxu0 %v3278
    %3326 = vmatprep.subr.mxu0 0.0
    %3327 = vmatpush1.msra.mxu0 0.0
    %3328 = vmatprep.subr.mxu0 0.0
    %3329 = vmatpush1.msra.mxu0 0.0
    %3330 = vmatprep.subr.mxu0 0.0
    %3331 = vmatpush1.msra.mxu0 0.0
    %3332 = vmatprep.subr.mxu0 0.0
    %3333 = vmatpush1.msra.mxu0 0.0
    %3334 = vmatprep.subr.mxu0 0.0
    %3335 = vmatpush1.msra.mxu0 0.0
    %3336 = vmatprep.subr.mxu0 0.0
    %3337 = vmatpush1.msra.mxu0 0.0
    %3338 = vmatprep.subr.mxu0 0.0
    %3339 = vmatpush1.msra.mxu0 0.0
    %3340 = vmatprep.subr.mxu0 0.0
    %3341 = vmatpush1.msra.mxu0 0.0
    %3342 = vmatprep.subr.mxu0 0.0
    %3343 = vmatpush1.msra.mxu0 0.0
    %3344 = vmatprep.subr.mxu0 0.0
    %3345 = vmatpush1.msra.mxu0 0.0
    %3346 = vmatprep.subr.mxu0 0.0
    %3347 = vmatpush1.msra.mxu0 0.0
    %3348 = vmatprep.subr.mxu0 0.0
    %3349 = vmatpush1.msra.mxu0 0.0
    %3350 = vmatprep.mubr.f32.mxu0 %v3281
    %3351 = vmatmul.mubr.f32.gmra.mrb[0].mxu0 %v3255
    %v3352 = vpop.f32.mrb[0].mxu0
    %v3353 = vadd.f32 0.0, %v3352
    %v3354 = vpop.f32.mrb[0].mxu0
    %3355 = vmatprep.mubr.f32.mxu0 %v3284
    %3356 = vmatmul.mubr.f32.gmra.mrb[0].mxu0 %v3257
    %v3357 = vpop.f32.mrb[0].mxu0
    %v3358 = vadd.f32 0.0, %v3357
    %v3359 = vpop.f32.mrb[0].mxu0
    %3360 = vdwg.mxu0
    %s3361 = scalar_lea.vmem %s10, 160
    %v3362 = vld [vmem:[%s3361] sm:$0xff]
    %v3363 = vld [vmem:[%s3361 + $0x8] sm:$0xff]
    %v3364 = vld [vmem:[%s3361 + $0x10] sm:$0xff]
    %v3365 = vld [vmem:[%s3361 + $0x18] sm:$0xff]
    %v3366 = vld [vmem:[%s3361 + $0x20] sm:$0xff]
    %v3367 = vld [vmem:[%s3361 + $0x28] sm:$0xff]
    %v3368 = vld [vmem:[%s3361 + $0x30] sm:$0xff]
    %v3369 = vld [vmem:[%s3361 + $0x38] sm:$0xff]
    %v3370 = vld [vmem:[%s3361 + $0x40] sm:$0xff]
    %v3371 = vld [vmem:[%s3361 + $0x48] sm:$0xff]
    %v3372 = vld [vmem:[%s3361 + $0x50] sm:$0xff]
    %v3373 = vld [vmem:[%s3361 + $0x58] sm:$0xff]
    %v3374 = vld [vmem:[%s3361 + $0x60] sm:$0xff]
    %v3375 = vld [vmem:[%s3361 + $0x68] sm:$0xff]
    %v3376 = vld [vmem:[%s3361 + $0x70] sm:$0xff]
    %v3377 = vld [vmem:[%s3361 + $0x78] sm:$0xff]
    %v3378 = vld [vmem:[%s3361 + $0x80] sm:$0xff]
    %v3379 = vld [vmem:[%s3361 + $0x88] sm:$0xff]
    %v3380 = vld [vmem:[%s3361 + $0x90] sm:$0xff]
    %v3381 = vld [vmem:[%s3361 + $0x98] sm:$0xff]
    %3382 = vmatprep.subr.mxu0 0.0
    %3383 = vmatpush1.msra.mxu0 %v3362
    %3384 = vmatprep.subr.mxu0 0.0
    %3385 = vmatpush1.msra.mxu0 %v3363
    %3386 = vmatprep.subr.mxu0 0.0
    %3387 = vmatpush1.msra.mxu0 %v3364
    %3388 = vmatprep.subr.mxu0 0.0
    %3389 = vmatpush1.msra.mxu0 %v3365
    %3390 = vmatprep.subr.mxu0 0.0
    %3391 = vmatpush1.msra.mxu0 %v3366
    %3392 = vmatprep.subr.mxu0 0.0
    %3393 = vmatpush1.msra.mxu0 %v3367
    %3394 = vmatprep.subr.mxu0 0.0
    %3395 = vmatpush1.msra.mxu0 %v3368
    %3396 = vmatprep.subr.mxu0 0.0
    %3397 = vmatpush1.msra.mxu0 %v3369
    %3398 = vmatprep.subr.mxu0 0.0
    %3399 = vmatpush1.msra.mxu0 %v3370
    %3400 = vmatprep.subr.mxu0 0.0
    %3401 = vmatpush1.msra.mxu0 %v3371
    %3402 = vmatprep.subr.mxu0 0.0
    %3403 = vmatpush1.msra.mxu0 %v3372
    %3404 = vmatprep.subr.mxu0 0.0
    %3405 = vmatpush1.msra.mxu0 %v3373
    %3406 = vmatprep.subr.mxu0 0.0
    %3407 = vmatpush1.msra.mxu0 %v3374
    %3408 = vmatprep.subr.mxu0 0.0
    %3409 = vmatpush1.msra.mxu0 %v3375
    %3410 = vmatprep.subr.mxu0 0.0
    %3411 = vmatpush1.msra.mxu0 %v3376
    %3412 = vmatprep.subr.mxu0 0.0
    %3413 = vmatpush1.msra.mxu0 %v3377
    %3414 = vmatprep.subr.mxu0 0.0
    %3415 = vmatpush1.msra.mxu0 %v3378
    %3416 = vmatprep.subr.mxu0 0.0
    %3417 = vmatpush1.msra.mxu0 %v3379
    %3418 = vmatprep.subr.mxu0 0.0
    %3419 = vmatpush1.msra.mxu0 %v3380
    %3420 = vmatprep.subr.mxu0 0.0
    %3421 = vmatpush1.msra.mxu0 %v3381
    %3422 = vmatprep.subr.mxu0 0.0
    %3423 = vmatpush1.msra.mxu0 0.0
    %3424 = vmatprep.subr.mxu0 0.0
    %3425 = vmatpush1.msra.mxu0 0.0
    %3426 = vmatprep.subr.mxu0 0.0
    %3427 = vmatpush1.msra.mxu0 0.0
    %3428 = vmatprep.subr.mxu0 0.0
    %3429 = vmatpush1.msra.mxu0 0.0
    %3430 = vmatprep.subr.mxu0 0.0
    %3431 = vmatpush1.msra.mxu0 0.0
    %3432 = vmatprep.subr.mxu0 0.0
    %3433 = vmatpush1.msra.mxu0 0.0
    %3434 = vmatprep.subr.mxu0 0.0
    %3435 = vmatpush1.msra.mxu0 0.0
    %3436 = vmatprep.subr.mxu0 0.0
    %3437 = vmatpush1.msra.mxu0 0.0
    %3438 = vmatprep.subr.mxu0 0.0
    %3439 = vmatpush1.msra.mxu0 0.0
    %3440 = vmatprep.subr.mxu0 0.0
    %3441 = vmatpush1.msra.mxu0 0.0
    %3442 = vmatprep.subr.mxu0 0.0
    %3443 = vmatpush1.msra.mxu0 0.0
    %3444 = vmatprep.subr.mxu0 0.0
    %3445 = vmatpush1.msra.mxu0 0.0
    %3446 = vmatprep.mubr.f32.mxu0 %v3281
    %3447 = vmatmul.mubr.f32.gmra.mrb[0].mxu0 %v3255
    %v3448 = vpop.f32.mrb[0].mxu0
    %v3449 = vadd.f32 0.0, %v3448
    %v3450 = vpop.f32.mrb[0].mxu0
    %3451 = vmatprep.mubr.f32.mxu0 %v3284
    %3452 = vmatmul.mubr.f32.gmra.mrb[0].mxu0 %v3257
    %v3453 = vpop.f32.mrb[0].mxu0
    %v3454 = vadd.f32 0.0, %v3453
    %v3455 = vpop.f32.mrb[0].mxu0
    %3456 = vdwg.mxu0
    %v3457 = vmax.f32 %v3353, %v3449
    %v3458 = vmax.f32 %v3358, %v3454
    %v3459 = vld [vmem:[%s8] sm:$0x1]
    %v3461 = vlaneseq
    %v3462 = vshrl.u32 %v3461, 7
    %v3463 = vsub.s32 0, %v3462
    %v3464 = vrot.slane %v3459, %v3463
    %v3466 = vadd.f32 %v3457, %v3464
    %v3467 = vadd.f32 %v3458, %v3464
    %v3468 = vmax.f32 %v3466, 0.0
    %v3469 = vmax.f32 %v3467, 0.0
    %v3470 = vld [vmem:[%s11] sm:$0x3]
    %vm3471 = vcmask 80896
    %v3473 = vsel %vm3471, %v3470, 0
    %vm3475 = vcmask 1041408
    %v3477 = vsel %vm3475, %v3469, 0
    %3479 = vmatprep.subr.mxu0 0.0
    %3480 = vmatpush1.msra.mxu0 %v3468
    %3481 = vmatprep.subr.mxu0 0.0
    %3482 = vmatpush1.msra.mxu0 %v3477
    %3483 = vmatprep.subr.mxu0 0.0
    %3484 = vmatpush1.msra.mxu0 0.0
    %3485 = vmatprep.subr.mxu0 0.0
    %3486 = vmatpush1.msra.mxu0 0.0
    %3487 = vmatprep.subr.mxu0 0.0
    %3488 = vmatpush1.msra.mxu0 0.0
    %3489 = vmatprep.subr.mxu0 0.0
    %3490 = vmatpush1.msra.mxu0 0.0
    %3491 = vmatprep.subr.mxu0 0.0
    %3492 = vmatpush1.msra.mxu0 0.0
    %3493 = vmatprep.subr.mxu0 0.0
    %3494 = vmatpush1.msra.mxu0 0.0
    %3495 = vmatprep.subr.mxu0 0.0
    %3496 = vmatpush1.msra.mxu0 0.0
    %3497 = vmatprep.subr.mxu0 0.0
    %3498 = vmatpush1.msra.mxu0 0.0
    %3499 = vmatprep.subr.mxu0 0.0
    %3500 = vmatpush1.msra.mxu0 0.0
    %3501 = vmatprep.subr.mxu0 0.0
    %3502 = vmatpush1.msra.mxu0 0.0
    %3503 = vmatprep.subr.mxu0 0.0
    %3504 = vmatpush1.msra.mxu0 0.0
    %3505 = vmatprep.subr.mxu0 0.0
    %3506 = vmatpush1.msra.mxu0 0.0
    %3507 = vmatprep.subr.mxu0 0.0
    %3508 = vmatpush1.msra.mxu0 0.0
    %3509 = vmatprep.subr.mxu0 0.0
    %3510 = vmatpush1.msra.mxu0 0.0
    %3511 = vmatprep.subr.mxu0 0.0
    %3512 = vmatpush1.msra.mxu0 0.0
    %3513 = vmatprep.subr.mxu0 0.0
    %3514 = vmatpush1.msra.mxu0 0.0
    %3515 = vmatprep.subr.mxu0 0.0
    %3516 = vmatpush1.msra.mxu0 0.0
    %3517 = vmatprep.subr.mxu0 0.0
    %3518 = vmatpush1.msra.mxu0 0.0
    %3519 = vmatprep.subr.mxu0 0.0
    %3520 = vmatpush1.msra.mxu0 0.0
    %3521 = vmatprep.subr.mxu0 0.0
    %3522 = vmatpush1.msra.mxu0 0.0
    %3523 = vmatprep.subr.mxu0 0.0
    %3524 = vmatpush1.msra.mxu0 0.0
    %3525 = vmatprep.subr.mxu0 0.0
    %3526 = vmatpush1.msra.mxu0 0.0
    %3527 = vmatprep.subr.mxu0 0.0
    %3528 = vmatpush1.msra.mxu0 0.0
    %3529 = vmatprep.subr.mxu0 0.0
    %3530 = vmatpush1.msra.mxu0 0.0
    %3531 = vmatprep.subr.mxu0 0.0
    %3532 = vmatpush1.msra.mxu0 0.0
    %3533 = vmatprep.subr.mxu0 0.0
    %3534 = vmatpush1.msra.mxu0 0.0
    %3535 = vmatprep.subr.mxu0 0.0
    %3536 = vmatpush1.msra.mxu0 0.0
    %3537 = vmatprep.subr.mxu0 0.0
    %3538 = vmatpush1.msra.mxu0 0.0
    %3539 = vmatprep.subr.mxu0 0.0
    %3540 = vmatpush1.msra.mxu0 0.0
    %3541 = vmatprep.subr.mxu0 0.0
    %3542 = vmatpush1.msra.mxu0 0.0
    %3543 = vmatprep.mubr.f32.mxu0 0.0
    %3544 = vmatmul.mubr.f32.gmra.mrb[0].mxu0 %v3473
    %v3545 = vpop.f32.mrb[0].mxu0
    %v3546 = vadd.f32 0.0, %v3545
    %v3547 = vpop.f32.mrb[0].mxu0
    %3548 = vdwg.mxu0
    %v3549 = vld [vmem:[%s12] sm:$0xff]
    %v3550 = vld [vmem:[%s12 + $0x8] sm:$0xff]
    %v3551 = vld [vmem:[%s12 + $0x10] sm:$0xff]
    %v3552 = vld [vmem:[%s12 + $0x18] sm:$0xff]
    %v3553 = vld [vmem:[%s12 + $0x20] sm:$0xff]
    %v3554 = vld [vmem:[%s12 + $0x28] sm:$0xff]
    %v3555 = vld [vmem:[%s12 + $0x30] sm:$0xff]
    %v3556 = vld [vmem:[%s12 + $0x38] sm:$0xff]
    %v3557 = vld [vmem:[%s12 + $0x40] sm:$0xff]
    %v3558 = vld [vmem:[%s12 + $0x48] sm:$0xff]
    %s3559 = scalar_lea.vmem %s11, 2
    %v3560 = vld [vmem:[%s3559] sm:$0x3]
    %v3562 = vsel %vm3471, %v3560, 0
    %3564 = vmatprep.subr.mxu0 0.0
    %3565 = vmatpush1.msra.mxu0 %v3468
    %3566 = vmatprep.subr.mxu0 0.0
    %3567 = vmatpush1.msra.mxu0 %v3477
    %3568 = vmatprep.subr.mxu0 0.0
    %3569 = vmatpush1.msra.mxu0 0.0
    %3570 = vmatprep.subr.mxu0 0.0
    %3571 = vmatpush1.msra.mxu0 0.0
    %3572 = vmatprep.subr.mxu0 0.0
    %3573 = vmatpush1.msra.mxu0 0.0
    %3574 = vmatprep.subr.mxu0 0.0
    %3575 = vmatpush1.msra.mxu0 0.0
    %3576 = vmatprep.subr.mxu0 0.0
    %3577 = vmatpush1.msra.mxu0 0.0
    %3578 = vmatprep.subr.mxu0 0.0
    %3579 = vmatpush1.msra.mxu0 0.0
    %3580 = vmatprep.subr.mxu0 0.0
    %3581 = vmatpush1.msra.mxu0 0.0
    %3582 = vmatprep.subr.mxu0 0.0
    %3583 = vmatpush1.msra.mxu0 0.0
    %3584 = vmatprep.subr.mxu0 0.0
    %3585 = vmatpush1.msra.mxu0 0.0
    %3586 = vmatprep.subr.mxu0 0.0
    %3587 = vmatpush1.msra.mxu0 0.0
    %3588 = vmatprep.subr.mxu0 0.0
    %3589 = vmatpush1.msra.mxu0 0.0
    %3590 = vmatprep.subr.mxu0 0.0
    %3591 = vmatpush1.msra.mxu0 0.0
    %3592 = vmatprep.subr.mxu0 0.0
    %3593 = vmatpush1.msra.mxu0 0.0
    %3594 = vmatprep.subr.mxu0 0.0
    %3595 = vmatpush1.msra.mxu0 0.0
    %3596 = vmatprep.subr.mxu0 0.0
    %3597 = vmatpush1.msra.mxu0 0.0
    %3598 = vmatprep.subr.mxu0 0.0
    %3599 = vmatpush1.msra.mxu0 0.0
    %3600 = vmatprep.subr.mxu0 0.0
    %3601 = vmatpush1.msra.mxu0 0.0
    %3602 = vmatprep.subr.mxu0 0.0
    %3603 = vmatpush1.msra.mxu0 0.0
    %3604 = vmatprep.subr.mxu0 0.0
    %3605 = vmatpush1.msra.mxu0 0.0
    %3606 = vmatprep.subr.mxu0 0.0
    %3607 = vmatpush1.msra.mxu0 0.0
    %3608 = vmatprep.subr.mxu0 0.0
    %3609 = vmatpush1.msra.mxu0 0.0
    %3610 = vmatprep.subr.mxu0 0.0
    %3611 = vmatpush1.msra.mxu0 0.0
    %3612 = vmatprep.subr.mxu0 0.0
    %3613 = vmatpush1.msra.mxu0 0.0
    %3614 = vmatprep.subr.mxu0 0.0
    %3615 = vmatpush1.msra.mxu0 0.0
    %3616 = vmatprep.subr.mxu0 0.0
    %3617 = vmatpush1.msra.mxu0 0.0
    %3618 = vmatprep.subr.mxu0 0.0
    %3619 = vmatpush1.msra.mxu0 0.0
    %3620 = vmatprep.subr.mxu0 0.0
    %3621 = vmatpush1.msra.mxu0 0.0
    %3622 = vmatprep.subr.mxu0 0.0
    %3623 = vmatpush1.msra.mxu0 0.0
    %3624 = vmatprep.subr.mxu0 0.0
    %3625 = vmatpush1.msra.mxu0 0.0
    %3626 = vmatprep.subr.mxu0 0.0
    %3627 = vmatpush1.msra.mxu0 0.0
    %3628 = vmatprep.mubr.f32.mxu0 0.0
    %3629 = vmatmul.mubr.f32.gmra.mrb[0].mxu0 %v3562
    %v3630 = vpop.f32.mrb[0].mxu0
    %v3631 = vadd.f32 0.0, %v3630
    %v3632 = vpop.f32.mrb[0].mxu0
    %3633 = vdwg.mxu0
    %v3634 = vld [vmem:[%s12 + $0x50] sm:$0xff]
    %v3635 = vld [vmem:[%s12 + $0x58] sm:$0xff]
    %v3636 = vld [vmem:[%s12 + $0x60] sm:$0xff]
    %v3637 = vld [vmem:[%s12 + $0x68] sm:$0xff]
    %v3638 = vld [vmem:[%s12 + $0x70] sm:$0xff]
    %v3639 = vld [vmem:[%s12 + $0x78] sm:$0xff]
    %v3640 = vld [vmem:[%s12 + $0x80] sm:$0xff]
    %v3641 = vld [vmem:[%s12 + $0x88] sm:$0xff]
    %v3642 = vld [vmem:[%s12 + $0x90] sm:$0xff]
    %v3643 = vld [vmem:[%s12 + $0x98] sm:$0xff]
    %vm3644 = vcmask 654336
    %v3646 = vsel %vm3644, %v3631, 0
    %3648 = vmatprep.subr.mxu0 0.0
    %3649 = vmatpush1.msra.mxu0 %v3634
    %3650 = vmatprep.subr.mxu0 0.0
    %3651 = vmatpush1.msra.mxu0 %v3635
    %3652 = vmatprep.subr.mxu0 0.0
    %3653 = vmatpush1.msra.mxu0 %v3636
    %3654 = vmatprep.subr.mxu0 0.0
    %3655 = vmatpush1.msra.mxu0 %v3637
    %3656 = vmatprep.subr.mxu0 0.0
    %3657 = vmatpush1.msra.mxu0 %v3638
    %3658 = vmatprep.subr.mxu0 0.0
    %3659 = vmatpush1.msra.mxu0 %v3639
    %3660 = vmatprep.subr.mxu0 0.0
    %3661 = vmatpush1.msra.mxu0 %v3640
    %3662 = vmatprep.subr.mxu0 0.0
    %3663 = vmatpush1.msra.mxu0 %v3641
    %3664 = vmatprep.subr.mxu0 0.0
    %3665 = vmatpush1.msra.mxu0 %v3642
    %3666 = vmatprep.subr.mxu0 0.0
    %3667 = vmatpush1.msra.mxu0 %v3643
    %3668 = vmatprep.subr.mxu0 0.0
    %3669 = vmatpush1.msra.mxu0 0.0
    %3670 = vmatprep.subr.mxu0 0.0
    %3671 = vmatpush1.msra.mxu0 0.0
    %3672 = vmatprep.subr.mxu0 0.0
    %3673 = vmatpush1.msra.mxu0 0.0
    %3674 = vmatprep.subr.mxu0 0.0
    %3675 = vmatpush1.msra.mxu0 0.0
    %3676 = vmatprep.subr.mxu0 0.0
    %3677 = vmatpush1.msra.mxu0 0.0
    %3678 = vmatprep.subr.mxu0 0.0
    %3679 = vmatpush1.msra.mxu0 0.0
    %3680 = vmatprep.subr.mxu0 0.0
    %3681 = vmatpush1.msra.mxu0 0.0
    %3682 = vmatprep.subr.mxu0 0.0
    %3683 = vmatpush1.msra.mxu0 0.0
    %3684 = vmatprep.subr.mxu0 0.0
    %3685 = vmatpush1.msra.mxu0 0.0
    %3686 = vmatprep.subr.mxu0 0.0
    %3687 = vmatpush1.msra.mxu0 0.0
    %3688 = vmatprep.subr.mxu0 0.0
    %3689 = vmatpush1.msra.mxu0 0.0
    %3690 = vmatprep.subr.mxu0 0.0
    %3691 = vmatpush1.msra.mxu0 0.0
    %3692 = vmatprep.subr.mxu0 0.0
    %3693 = vmatpush1.msra.mxu0 0.0
    %3694 = vmatprep.subr.mxu0 0.0
    %3695 = vmatpush1.msra.mxu0 0.0
    %3696 = vmatprep.subr.mxu0 0.0
    %3697 = vmatpush1.msra.mxu0 0.0
    %3698 = vmatprep.subr.mxu0 0.0
    %3699 = vmatpush1.msra.mxu0 0.0
    %3700 = vmatprep.subr.mxu0 0.0
    %3701 = vmatpush1.msra.mxu0 0.0
    %3702 = vmatprep.subr.mxu0 0.0
    %3703 = vmatpush1.msra.mxu0 0.0
    %3704 = vmatprep.subr.mxu0 0.0
    %3705 = vmatpush1.msra.mxu0 0.0
    %3706 = vmatprep.subr.mxu0 0.0
    %3707 = vmatpush1.msra.mxu0 0.0
    %3708 = vmatprep.subr.mxu0 0.0
    %3709 = vmatpush1.msra.mxu0 0.0
    %3710 = vmatprep.subr.mxu0 0.0
    %3711 = vmatpush1.msra.mxu0 0.0
    %3712 = vmatprep.mubr.f32.mxu0 0.0
    %3713 = vmatmul.mubr.f32.gmra.mrb[0].mxu0 %v3646
    %v3714 = vpop.f32.mrb[0].mxu0
    %v3715 = vadd.f32 0.0, %v3714
    %v3716 = vpop.f32.mrb[0].mxu0
    %3717 = vdwg.mxu0
    %v3719 = vsel %vm3644, %v3546, 0
    %3721 = vmatprep.subr.mxu0 0.0
    %3722 = vmatpush1.msra.mxu0 %v3549
    %3723 = vmatprep.subr.mxu0 0.0
    %3724 = vmatpush1.msra.mxu0 %v3550
    %3725 = vmatprep.subr.mxu0 0.0
    %3726 = vmatpush1.msra.mxu0 %v3551
    %3727 = vmatprep.subr.mxu0 0.0
    %3728 = vmatpush1.msra.mxu0 %v3552
    %3729 = vmatprep.subr.mxu0 0.0
    %3730 = vmatpush1.msra.mxu0 %v3553
    %3731 = vmatprep.subr.mxu0 0.0
    %3732 = vmatpush1.msra.mxu0 %v3554
    %3733 = vmatprep.subr.mxu0 0.0
    %3734 = vmatpush1.msra.mxu0 %v3555
    %3735 = vmatprep.subr.mxu0 0.0
    %3736 = vmatpush1.msra.mxu0 %v3556
    %3737 = vmatprep.subr.mxu0 0.0
    %3738 = vmatpush1.msra.mxu0 %v3557
    %3739 = vmatprep.subr.mxu0 0.0
    %3740 = vmatpush1.msra.mxu0 %v3558
    %3741 = vmatprep.subr.mxu0 0.0
    %3742 = vmatpush1.msra.mxu0 0.0
    %3743 = vmatprep.subr.mxu0 0.0
    %3744 = vmatpush1.msra.mxu0 0.0
    %3745 = vmatprep.subr.mxu0 0.0
    %3746 = vmatpush1.msra.mxu0 0.0
    %3747 = vmatprep.subr.mxu0 0.0
    %3748 = vmatpush1.msra.mxu0 0.0
    %3749 = vmatprep.subr.mxu0 0.0
    %3750 = vmatpush1.msra.mxu0 0.0
    %3751 = vmatprep.subr.mxu0 0.0
    %3752 = vmatpush1.msra.mxu0 0.0
    %3753 = vmatprep.subr.mxu0 0.0
    %3754 = vmatpush1.msra.mxu0 0.0
    %3755 = vmatprep.subr.mxu0 0.0
    %3756 = vmatpush1.msra.mxu0 0.0
    %3757 = vmatprep.subr.mxu0 0.0
    %3758 = vmatpush1.msra.mxu0 0.0
    %3759 = vmatprep.subr.mxu0 0.0
    %3760 = vmatpush1.msra.mxu0 0.0
    %3761 = vmatprep.subr.mxu0 0.0
    %3762 = vmatpush1.msra.mxu0 0.0
    %3763 = vmatprep.subr.mxu0 0.0
    %3764 = vmatpush1.msra.mxu0 0.0
    %3765 = vmatprep.subr.mxu0 0.0
    %3766 = vmatpush1.msra.mxu0 0.0
    %3767 = vmatprep.subr.mxu0 0.0
    %3768 = vmatpush1.msra.mxu0 0.0
    %3769 = vmatprep.subr.mxu0 0.0
    %3770 = vmatpush1.msra.mxu0 0.0
    %3771 = vmatprep.subr.mxu0 0.0
    %3772 = vmatpush1.msra.mxu0 0.0
    %3773 = vmatprep.subr.mxu0 0.0
    %3774 = vmatpush1.msra.mxu0 0.0
    %3775 = vmatprep.subr.mxu0 0.0
    %3776 = vmatpush1.msra.mxu0 0.0
    %3777 = vmatprep.subr.mxu0 0.0
    %3778 = vmatpush1.msra.mxu0 0.0
    %3779 = vmatprep.subr.mxu0 0.0
    %3780 = vmatpush1.msra.mxu0 0.0
    %3781 = vmatprep.subr.mxu0 0.0
    %3782 = vmatpush1.msra.mxu0 0.0
    %3783 = vmatprep.subr.mxu0 0.0
    %3784 = vmatpush1.msra.mxu0 0.0
    %3785 = vmatprep.mubr.f32.mxu0 0.0
    %3786 = vmatmul.mubr.f32.gmra.mrb[0].mxu0 %v3719
    %v3787 = vpop.f32.mrb[0].mxu0
    %v3788 = vadd.f32 %v3715, %v3787
    %v3789 = vpop.f32.mrb[0].mxu0
    %3790 = vdwg.mxu0
    %s3791 = scalar_lea.vmem %s11, 4
    %v3792 = vld [vmem:[%s3791] sm:$0x3]
    %v3794 = vsel %vm3471, %v3792, 0
    %3796 = vmatprep.subr.mxu0 0.0
    %3797 = vmatpush1.msra.mxu0 %v3468
    %3798 = vmatprep.subr.mxu0 0.0
    %3799 = vmatpush1.msra.mxu0 %v3477
    %3800 = vmatprep.subr.mxu0 0.0
    %3801 = vmatpush1.msra.mxu0 0.0
    %3802 = vmatprep.subr.mxu0 0.0
    %3803 = vmatpush1.msra.mxu0 0.0
    %3804 = vmatprep.subr.mxu0 0.0
    %3805 = vmatpush1.msra.mxu0 0.0
    %3806 = vmatprep.subr.mxu0 0.0
    %3807 = vmatpush1.msra.mxu0 0.0
    %3808 = vmatprep.subr.mxu0 0.0
    %3809 = vmatpush1.msra.mxu0 0.0
    %3810 = vmatprep.subr.mxu0 0.0
    %3811 = vmatpush1.msra.mxu0 0.0
    %3812 = vmatprep.subr.mxu0 0.0
    %3813 = vmatpush1.msra.mxu0 0.0
    %3814 = vmatprep.subr.mxu0 0.0
    %3815 = vmatpush1.msra.mxu0 0.0
    %3816 = vmatprep.subr.mxu0 0.0
    %3817 = vmatpush1.msra.mxu0 0.0
    %3818 = vmatprep.subr.mxu0 0.0
    %3819 = vmatpush1.msra.mxu0 0.0
    %3820 = vmatprep.subr.mxu0 0.0
    %3821 = vmatpush1.msra.mxu0 0.0
    %3822 = vmatprep.subr.mxu0 0.0
    %3823 = vmatpush1.msra.mxu0 0.0
    %3824 = vmatprep.subr.mxu0 0.0
    %3825 = vmatpush1.msra.mxu0 0.0
    %3826 = vmatprep.subr.mxu0 0.0
    %3827 = vmatpush1.msra.mxu0 0.0
    %3828 = vmatprep.subr.mxu0 0.0
    %3829 = vmatpush1.msra.mxu0 0.0
    %3830 = vmatprep.subr.mxu0 0.0
    %3831 = vmatpush1.msra.mxu0 0.0
    %3832 = vmatprep.subr.mxu0 0.0
    %3833 = vmatpush1.msra.mxu0 0.0
    %3834 = vmatprep.subr.mxu0 0.0
    %3835 = vmatpush1.msra.mxu0 0.0
    %3836 = vmatprep.subr.mxu0 0.0
    %3837 = vmatpush1.msra.mxu0 0.0
    %3838 = vmatprep.subr.mxu0 0.0
    %3839 = vmatpush1.msra.mxu0 0.0
    %3840 = vmatprep.subr.mxu0 0.0
    %3841 = vmatpush1.msra.mxu0 0.0
    %3842 = vmatprep.subr.mxu0 0.0
    %3843 = vmatpush1.msra.mxu0 0.0
    %3844 = vmatprep.subr.mxu0 0.0
    %3845 = vmatpush1.msra.mxu0 0.0
    %3846 = vmatprep.subr.mxu0 0.0
    %3847 = vmatpush1.msra.mxu0 0.0
    %3848 = vmatprep.subr.mxu0 0.0
    %3849 = vmatpush1.msra.mxu0 0.0
    %3850 = vmatprep.subr.mxu0 0.0
    %3851 = vmatpush1.msra.mxu0 0.0
    %3852 = vmatprep.subr.mxu0 0.0
    %3853 = vmatpush1.msra.mxu0 0.0
    %3854 = vmatprep.subr.mxu0 0.0
    %3855 = vmatpush1.msra.mxu0 0.0
    %3856 = vmatprep.subr.mxu0 0.0
    %3857 = vmatpush1.msra.mxu0 0.0
    %3858 = vmatprep.subr.mxu0 0.0
    %3859 = vmatpush1.msra.mxu0 0.0
    %3860 = vmatprep.mubr.f32.mxu0 0.0
    %3861 = vmatmul.mubr.f32.gmra.mrb[0].mxu0 %v3794
    %v3862 = vpop.f32.mrb[0].mxu0
    %v3863 = vadd.f32 0.0, %v3862
    %v3864 = vpop.f32.mrb[0].mxu0
    %3865 = vdwg.mxu0
    %v3866 = vld [vmem:[%s12 + $0xa0] sm:$0xff]
    %v3867 = vld [vmem:[%s12 + $0xa8] sm:$0xff]
    %v3868 = vld [vmem:[%s12 + $0xb0] sm:$0xff]
    %v3869 = vld [vmem:[%s12 + $0xb8] sm:$0xff]
    %v3870 = vld [vmem:[%s12 + $0xc0] sm:$0xff]
    %v3871 = vld [vmem:[%s12 + $0xc8] sm:$0xff]
    %v3872 = vld [vmem:[%s12 + $0xd0] sm:$0xff]
    %v3873 = vld [vmem:[%s12 + $0xd8] sm:$0xff]
    %v3874 = vld [vmem:[%s12 + $0xe0] sm:$0xff]
    %v3875 = vld [vmem:[%s12 + $0xe8] sm:$0xff]
    %v3877 = vsel %vm3644, %v3863, 0
    %3879 = vmatprep.subr.mxu0 0.0
    %3880 = vmatpush1.msra.mxu0 %v3866
    %3881 = vmatprep.subr.mxu0 0.0
    %3882 = vmatpush1.msra.mxu0 %v3867
    %3883 = vmatprep.subr.mxu0 0.0
    %3884 = vmatpush1.msra.mxu0 %v3868
    %3885 = vmatprep.subr.mxu0 0.0
    %3886 = vmatpush1.msra.mxu0 %v3869
    %3887 = vmatprep.subr.mxu0 0.0
    %3888 = vmatpush1.msra.mxu0 %v3870
    %3889 = vmatprep.subr.mxu0 0.0
    %3890 = vmatpush1.msra.mxu0 %v3871
    %3891 = vmatprep.subr.mxu0 0.0
    %3892 = vmatpush1.msra.mxu0 %v3872
    %3893 = vmatprep.subr.mxu0 0.0
    %3894 = vmatpush1.msra.mxu0 %v3873
    %3895 = vmatprep.subr.mxu0 0.0
    %3896 = vmatpush1.msra.mxu0 %v3874
    %3897 = vmatprep.subr.mxu0 0.0
    %3898 = vmatpush1.msra.mxu0 %v3875
    %3899 = vmatprep.subr.mxu0 0.0
    %3900 = vmatpush1.msra.mxu0 0.0
    %3901 = vmatprep.subr.mxu0 0.0
    %3902 = vmatpush1.msra.mxu0 0.0
    %3903 = vmatprep.subr.mxu0 0.0
    %3904 = vmatpush1.msra.mxu0 0.0
    %3905 = vmatprep.subr.mxu0 0.0
    %3906 = vmatpush1.msra.mxu0 0.0
    %3907 = vmatprep.subr.mxu0 0.0
    %3908 = vmatpush1.msra.mxu0 0.0
    %3909 = vmatprep.subr.mxu0 0.0
    %3910 = vmatpush1.msra.mxu0 0.0
    %3911 = vmatprep.subr.mxu0 0.0
    %3912 = vmatpush1.msra.mxu0 0.0
    %3913 = vmatprep.subr.mxu0 0.0
    %3914 = vmatpush1.msra.mxu0 0.0
    %3915 = vmatprep.subr.mxu0 0.0
    %3916 = vmatpush1.msra.mxu0 0.0
    %3917 = vmatprep.subr.mxu0 0.0
    %3918 = vmatpush1.msra.mxu0 0.0
    %3919 = vmatprep.subr.mxu0 0.0
    %3920 = vmatpush1.msra.mxu0 0.0
    %3921 = vmatprep.subr.mxu0 0.0
    %3922 = vmatpush1.msra.mxu0 0.0
    %3923 = vmatprep.subr.mxu0 0.0
    %3924 = vmatpush1.msra.mxu0 0.0
    %3925 = vmatprep.subr.mxu0 0.0
    %3926 = vmatpush1.msra.mxu0 0.0
    %3927 = vmatprep.subr.mxu0 0.0
    %3928 = vmatpush1.msra.mxu0 0.0
    %3929 = vmatprep.subr.mxu0 0.0
    %3930 = vmatpush1.msra.mxu0 0.0
    %3931 = vmatprep.subr.mxu0 0.0
    %3932 = vmatpush1.msra.mxu0 0.0
    %3933 = vmatprep.subr.mxu0 0.0
    %3934 = vmatpush1.msra.mxu0 0.0
    %3935 = vmatprep.subr.mxu0 0.0
    %3936 = vmatpush1.msra.mxu0 0.0
    %3937 = vmatprep.subr.mxu0 0.0
    %3938 = vmatpush1.msra.mxu0 0.0
    %3939 = vmatprep.subr.mxu0 0.0
    %3940 = vmatpush1.msra.mxu0 0.0
    %3941 = vmatprep.subr.mxu0 0.0
    %3942 = vmatpush1.msra.mxu0 0.0
    %3943 = vmatprep.mubr.f32.mxu0 0.0
    %3944 = vmatmul.mubr.f32.gmra.mrb[0].mxu0 %v3877
    %v3945 = vpop.f32.mrb[0].mxu0
    %v3946 = vadd.f32 0.0, %v3945
    %v3947 = vpop.f32.mrb[0].mxu0
    %3948 = vdwg.mxu0
    %v3949 = vadd.f32 %v3788, %v3946
    %s3950 = scalar_lea.vmem %s11, 6
    %v3951 = vld [vmem:[%s3950] sm:$0x3]
    %v3953 = vsel %vm3471, %v3951, 0
    %3955 = vmatprep.subr.mxu0 0.0
    %3956 = vmatpush1.msra.mxu0 %v3468
    %3957 = vmatprep.subr.mxu0 0.0
    %3958 = vmatpush1.msra.mxu0 %v3477
    %3959 = vmatprep.subr.mxu0 0.0
    %3960 = vmatpush1.msra.mxu0 0.0
    %3961 = vmatprep.subr.mxu0 0.0
    %3962 = vmatpush1.msra.mxu0 0.0
    %3963 = vmatprep.subr.mxu0 0.0
    %3964 = vmatpush1.msra.mxu0 0.0
    %3965 = vmatprep.subr.mxu0 0.0
    %3966 = vmatpush1.msra.mxu0 0.0
    %3967 = vmatprep.subr.mxu0 0.0
    %3968 = vmatpush1.msra.mxu0 0.0
    %3969 = vmatprep.subr.mxu0 0.0
    %3970 = vmatpush1.msra.mxu0 0.0
    %3971 = vmatprep.subr.mxu0 0.0
    %3972 = vmatpush1.msra.mxu0 0.0
    %3973 = vmatprep.subr.mxu0 0.0
    %3974 = vmatpush1.msra.mxu0 0.0
    %3975 = vmatprep.subr.mxu0 0.0
    %3976 = vmatpush1.msra.mxu0 0.0
    %3977 = vmatprep.subr.mxu0 0.0
    %3978 = vmatpush1.msra.mxu0 0.0
    %3979 = vmatprep.subr.mxu0 0.0
    %3980 = vmatpush1.msra.mxu0 0.0
    %3981 = vmatprep.subr.mxu0 0.0
    %3982 = vmatpush1.msra.mxu0 0.0
    %3983 = vmatprep.subr.mxu0 0.0
    %3984 = vmatpush1.msra.mxu0 0.0
    %3985 = vmatprep.subr.mxu0 0.0
    %3986 = vmatpush1.msra.mxu0 0.0
    %3987 = vmatprep.subr.mxu0 0.0
    %3988 = vmatpush1.msra.mxu0 0.0
    %3989 = vmatprep.subr.mxu0 0.0
    %3990 = vmatpush1.msra.mxu0 0.0
    %3991 = vmatprep.subr.mxu0 0.0
    %3992 = vmatpush1.msra.mxu0 0.0
    %3993 = vmatprep.subr.mxu0 0.0
    %3994 = vmatpush1.msra.mxu0 0.0
    %3995 = vmatprep.subr.mxu0 0.0
    %3996 = vmatpush1.msra.mxu0 0.0
    %3997 = vmatprep.subr.mxu0 0.0
    %3998 = vmatpush1.msra.mxu0 0.0
    %3999 = vmatprep.subr.mxu0 0.0
    %4000 = vmatpush1.msra.mxu0 0.0
    %4001 = vmatprep.subr.mxu0 0.0
    %4002 = vmatpush1.msra.mxu0 0.0
    %4003 = vmatprep.subr.mxu0 0.0
    %4004 = vmatpush1.msra.mxu0 0.0
    %4005 = vmatprep.subr.mxu0 0.0
    %4006 = vmatpush1.msra.mxu0 0.0
    %4007 = vmatprep.subr.mxu0 0.0
    %4008 = vmatpush1.msra.mxu0 0.0
    %4009 = vmatprep.subr.mxu0 0.0
    %4010 = vmatpush1.msra.mxu0 0.0
    %4011 = vmatprep.subr.mxu0 0.0
    %4012 = vmatpush1.msra.mxu0 0.0
    %4013 = vmatprep.subr.mxu0 0.0
    %4014 = vmatpush1.msra.mxu0 0.0
    %4015 = vmatprep.subr.mxu0 0.0
    %4016 = vmatpush1.msra.mxu0 0.0
    %4017 = vmatprep.subr.mxu0 0.0
    %4018 = vmatpush1.msra.mxu0 0.0
    %4019 = vmatprep.mubr.f32.mxu0 0.0
    %4020 = vmatmul.mubr.f32.gmra.mrb[0].mxu0 %v3953
    %v4021 = vpop.f32.mrb[0].mxu0
    %v4022 = vadd.f32 0.0, %v4021
    %v4023 = vpop.f32.mrb[0].mxu0
    %4024 = vdwg.mxu0
    %v4025 = vld [vmem:[%s12 + $0xf0] sm:$0xff]
    %v4026 = vld [vmem:[%s12 + $0xf8] sm:$0xff]
    %v4027 = vld [vmem:[%s12 + $0x100] sm:$0xff]
    %v4028 = vld [vmem:[%s12 + $0x108] sm:$0xff]
    %v4029 = vld [vmem:[%s12 + $0x110] sm:$0xff]
    %v4030 = vld [vmem:[%s12 + $0x118] sm:$0xff]
    %v4031 = vld [vmem:[%s12 + $0x120] sm:$0xff]
    %v4032 = vld [vmem:[%s12 + $0x128] sm:$0xff]
    %v4033 = vld [vmem:[%s12 + $0x130] sm:$0xff]
    %v4034 = vld [vmem:[%s12 + $0x138] sm:$0xff]
    %v4036 = vsel %vm3644, %v4022, 0
    %4038 = vmatprep.subr.mxu0 0.0
    %4039 = vmatpush1.msra.mxu0 %v4025
    %4040 = vmatprep.subr.mxu0 0.0
    %4041 = vmatpush1.msra.mxu0 %v4026
    %4042 = vmatprep.subr.mxu0 0.0
    %4043 = vmatpush1.msra.mxu0 %v4027
    %4044 = vmatprep.subr.mxu0 0.0
    %4045 = vmatpush1.msra.mxu0 %v4028
    %4046 = vmatprep.subr.mxu0 0.0
    %4047 = vmatpush1.msra.mxu0 %v4029
    %4048 = vmatprep.subr.mxu0 0.0
    %4049 = vmatpush1.msra.mxu0 %v4030
    %4050 = vmatprep.subr.mxu0 0.0
    %4051 = vmatpush1.msra.mxu0 %v4031
    %4052 = vmatprep.subr.mxu0 0.0
    %4053 = vmatpush1.msra.mxu0 %v4032
    %4054 = vmatprep.subr.mxu0 0.0
    %4055 = vmatpush1.msra.mxu0 %v4033
    %4056 = vmatprep.subr.mxu0 0.0
    %4057 = vmatpush1.msra.mxu0 %v4034
    %4058 = vmatprep.subr.mxu0 0.0
    %4059 = vmatpush1.msra.mxu0 0.0
    %4060 = vmatprep.subr.mxu0 0.0
    %4061 = vmatpush1.msra.mxu0 0.0
    %4062 = vmatprep.subr.mxu0 0.0
    %4063 = vmatpush1.msra.mxu0 0.0
    %4064 = vmatprep.subr.mxu0 0.0
    %4065 = vmatpush1.msra.mxu0 0.0
    %4066 = vmatprep.subr.mxu0 0.0
    %4067 = vmatpush1.msra.mxu0 0.0
    %4068 = vmatprep.subr.mxu0 0.0
    %4069 = vmatpush1.msra.mxu0 0.0
    %4070 = vmatprep.subr.mxu0 0.0
    %4071 = vmatpush1.msra.mxu0 0.0
    %4072 = vmatprep.subr.mxu0 0.0
    %4073 = vmatpush1.msra.mxu0 0.0
    %4074 = vmatprep.subr.mxu0 0.0
    %4075 = vmatpush1.msra.mxu0 0.0
    %4076 = vmatprep.subr.mxu0 0.0
    %4077 = vmatpush1.msra.mxu0 0.0
    %4078 = vmatprep.subr.mxu0 0.0
    %4079 = vmatpush1.msra.mxu0 0.0
    %4080 = vmatprep.subr.mxu0 0.0
    %4081 = vmatpush1.msra.mxu0 0.0
    %4082 = vmatprep.subr.mxu0 0.0
    %4083 = vmatpush1.msra.mxu0 0.0
    %4084 = vmatprep.subr.mxu0 0.0
    %4085 = vmatpush1.msra.mxu0 0.0
    %4086 = vmatprep.subr.mxu0 0.0
    %4087 = vmatpush1.msra.mxu0 0.0
    %4088 = vmatprep.subr.mxu0 0.0
    %4089 = vmatpush1.msra.mxu0 0.0
    %4090 = vmatprep.subr.mxu0 0.0
    %4091 = vmatpush1.msra.mxu0 0.0
    %4092 = vmatprep.subr.mxu0 0.0
    %4093 = vmatpush1.msra.mxu0 0.0
    %4094 = vmatprep.subr.mxu0 0.0
    %4095 = vmatpush1.msra.mxu0 0.0
    %4096 = vmatprep.subr.mxu0 0.0
    %4097 = vmatpush1.msra.mxu0 0.0
    %4098 = vmatprep.subr.mxu0 0.0
    %4099 = vmatpush1.msra.mxu0 0.0
    %4100 = vmatprep.subr.mxu0 0.0
    %4101 = vmatpush1.msra.mxu0 0.0
    %4102 = vmatprep.mubr.f32.mxu0 0.0
    %4103 = vmatmul.mubr.f32.gmra.mrb[0].mxu0 %v4036
    %v4104 = vpop.f32.mrb[0].mxu0
    %v4105 = vadd.f32 0.0, %v4104
    %v4106 = vpop.f32.mrb[0].mxu0
    %4107 = vdwg.mxu0
    %v4108 = vadd.f32 %v3949, %v4105
    %s4109 = scalar_lea.vmem %s11, 8
    %v4110 = vld [vmem:[%s4109] sm:$0x3]
    %v4112 = vsel %vm3471, %v4110, 0
    %4114 = vmatprep.subr.mxu0 0.0
    %4115 = vmatpush1.msra.mxu0 %v3468
    %4116 = vmatprep.subr.mxu0 0.0
    %4117 = vmatpush1.msra.mxu0 %v3477
    %4118 = vmatprep.subr.mxu0 0.0
    %4119 = vmatpush1.msra.mxu0 0.0
    %4120 = vmatprep.subr.mxu0 0.0
    %4121 = vmatpush1.msra.mxu0 0.0
    %4122 = vmatprep.subr.mxu0 0.0
    %4123 = vmatpush1.msra.mxu0 0.0
    %4124 = vmatprep.subr.mxu0 0.0
    %4125 = vmatpush1.msra.mxu0 0.0
    %4126 = vmatprep.subr.mxu0 0.0
    %4127 = vmatpush1.msra.mxu0 0.0
    %4128 = vmatprep.subr.mxu0 0.0
    %4129 = vmatpush1.msra.mxu0 0.0
    %4130 = vmatprep.subr.mxu0 0.0
    %4131 = vmatpush1.msra.mxu0 0.0
    %4132 = vmatprep.subr.mxu0 0.0
    %4133 = vmatpush1.msra.mxu0 0.0
    %4134 = vmatprep.subr.mxu0 0.0
    %4135 = vmatpush1.msra.mxu0 0.0
    %4136 = vmatprep.subr.mxu0 0.0
    %4137 = vmatpush1.msra.mxu0 0.0
    %4138 = vmatprep.subr.mxu0 0.0
    %4139 = vmatpush1.msra.mxu0 0.0
    %4140 = vmatprep.subr.mxu0 0.0
    %4141 = vmatpush1.msra.mxu0 0.0
    %4142 = vmatprep.subr.mxu0 0.0
    %4143 = vmatpush1.msra.mxu0 0.0
    %4144 = vmatprep.subr.mxu0 0.0
    %4145 = vmatpush1.msra.mxu0 0.0
    %4146 = vmatprep.subr.mxu0 0.0
    %4147 = vmatpush1.msra.mxu0 0.0
    %4148 = vmatprep.subr.mxu0 0.0
    %4149 = vmatpush1.msra.mxu0 0.0
    %4150 = vmatprep.subr.mxu0 0.0
    %4151 = vmatpush1.msra.mxu0 0.0
    %4152 = vmatprep.subr.mxu0 0.0
    %4153 = vmatpush1.msra.mxu0 0.0
    %4154 = vmatprep.subr.mxu0 0.0
    %4155 = vmatpush1.msra.mxu0 0.0
    %4156 = vmatprep.subr.mxu0 0.0
    %4157 = vmatpush1.msra.mxu0 0.0
    %4158 = vmatprep.subr.mxu0 0.0
    %4159 = vmatpush1.msra.mxu0 0.0
    %4160 = vmatprep.subr.mxu0 0.0
    %4161 = vmatpush1.msra.mxu0 0.0
    %4162 = vmatprep.subr.mxu0 0.0
    %4163 = vmatpush1.msra.mxu0 0.0
    %4164 = vmatprep.subr.mxu0 0.0
    %4165 = vmatpush1.msra.mxu0 0.0
    %4166 = vmatprep.subr.mxu0 0.0
    %4167 = vmatpush1.msra.mxu0 0.0
    %4168 = vmatprep.subr.mxu0 0.0
    %4169 = vmatpush1.msra.mxu0 0.0
    %4170 = vmatprep.subr.mxu0 0.0
    %4171 = vmatpush1.msra.mxu0 0.0
    %4172 = vmatprep.subr.mxu0 0.0
    %4173 = vmatpush1.msra.mxu0 0.0
    %4174 = vmatprep.subr.mxu0 0.0
    %4175 = vmatpush1.msra.mxu0 0.0
    %4176 = vmatprep.subr.mxu0 0.0
    %4177 = vmatpush1.msra.mxu0 0.0
    %4178 = vmatprep.mubr.f32.mxu0 0.0
    %4179 = vmatmul.mubr.f32.gmra.mrb[0].mxu0 %v4112
    %v4180 = vpop.f32.mrb[0].mxu0
    %v4181 = vadd.f32 0.0, %v4180
    %v4182 = vpop.f32.mrb[0].mxu0
    %4183 = vdwg.mxu0
    %v4184 = vld [vmem:[%s12 + $0x140] sm:$0xff]
    %v4185 = vld [vmem:[%s12 + $0x148] sm:$0xff]
    %v4186 = vld [vmem:[%s12 + $0x150] sm:$0xff]
    %v4187 = vld [vmem:[%s12 + $0x158] sm:$0xff]
    %v4188 = vld [vmem:[%s12 + $0x160] sm:$0xff]
    %v4189 = vld [vmem:[%s12 + $0x168] sm:$0xff]
    %v4190 = vld [vmem:[%s12 + $0x170] sm:$0xff]
    %v4191 = vld [vmem:[%s12 + $0x178] sm:$0xff]
    %v4192 = vld [vmem:[%s12 + $0x180] sm:$0xff]
    %v4193 = vld [vmem:[%s12 + $0x188] sm:$0xff]
    %v4195 = vsel %vm3644, %v4181, 0
    %4197 = vmatprep.subr.mxu0 0.0
    %4198 = vmatpush1.msra.mxu0 %v4184
    %4199 = vmatprep.subr.mxu0 0.0
    %4200 = vmatpush1.msra.mxu0 %v4185
    %4201 = vmatprep.subr.mxu0 0.0
    %4202 = vmatpush1.msra.mxu0 %v4186
    %4203 = vmatprep.subr.mxu0 0.0
    %4204 = vmatpush1.msra.mxu0 %v4187
    %4205 = vmatprep.subr.mxu0 0.0
    %4206 = vmatpush1.msra.mxu0 %v4188
    %4207 = vmatprep.subr.mxu0 0.0
    %4208 = vmatpush1.msra.mxu0 %v4189
    %4209 = vmatprep.subr.mxu0 0.0
    %4210 = vmatpush1.msra.mxu0 %v4190
    %4211 = vmatprep.subr.mxu0 0.0
    %4212 = vmatpush1.msra.mxu0 %v4191
    %4213 = vmatprep.subr.mxu0 0.0
    %4214 = vmatpush1.msra.mxu0 %v4192
    %4215 = vmatprep.subr.mxu0 0.0
    %4216 = vmatpush1.msra.mxu0 %v4193
    %4217 = vmatprep.subr.mxu0 0.0
    %4218 = vmatpush1.msra.mxu0 0.0
    %4219 = vmatprep.subr.mxu0 0.0
    %4220 = vmatpush1.msra.mxu0 0.0
    %4221 = vmatprep.subr.mxu0 0.0
    %4222 = vmatpush1.msra.mxu0 0.0
    %4223 = vmatprep.subr.mxu0 0.0
    %4224 = vmatpush1.msra.mxu0 0.0
    %4225 = vmatprep.subr.mxu0 0.0
    %4226 = vmatpush1.msra.mxu0 0.0
    %4227 = vmatprep.subr.mxu0 0.0
    %4228 = vmatpush1.msra.mxu0 0.0
    %4229 = vmatprep.subr.mxu0 0.0
    %4230 = vmatpush1.msra.mxu0 0.0
    %4231 = vmatprep.subr.mxu0 0.0
    %4232 = vmatpush1.msra.mxu0 0.0
    %4233 = vmatprep.subr.mxu0 0.0
    %4234 = vmatpush1.msra.mxu0 0.0
    %4235 = vmatprep.subr.mxu0 0.0
    %4236 = vmatpush1.msra.mxu0 0.0
    %4237 = vmatprep.subr.mxu0 0.0
    %4238 = vmatpush1.msra.mxu0 0.0
    %4239 = vmatprep.subr.mxu0 0.0
    %4240 = vmatpush1.msra.mxu0 0.0
    %4241 = vmatprep.subr.mxu0 0.0
    %4242 = vmatpush1.msra.mxu0 0.0
    %4243 = vmatprep.subr.mxu0 0.0
    %4244 = vmatpush1.msra.mxu0 0.0
    %4245 = vmatprep.subr.mxu0 0.0
    %4246 = vmatpush1.msra.mxu0 0.0
    %4247 = vmatprep.subr.mxu0 0.0
    %4248 = vmatpush1.msra.mxu0 0.0
    %4249 = vmatprep.subr.mxu0 0.0
    %4250 = vmatpush1.msra.mxu0 0.0
    %4251 = vmatprep.subr.mxu0 0.0
    %4252 = vmatpush1.msra.mxu0 0.0
    %4253 = vmatprep.subr.mxu0 0.0
    %4254 = vmatpush1.msra.mxu0 0.0
    %4255 = vmatprep.subr.mxu0 0.0
    %4256 = vmatpush1.msra.mxu0 0.0
    %4257 = vmatprep.subr.mxu0 0.0
    %4258 = vmatpush1.msra.mxu0 0.0
    %4259 = vmatprep.subr.mxu0 0.0
    %4260 = vmatpush1.msra.mxu0 0.0
    %4261 = vmatprep.mubr.f32.mxu0 0.0
    %4262 = vmatmul.mubr.f32.gmra.mrb[0].mxu0 %v4195
    %v4263 = vpop.f32.mrb[0].mxu0
    %v4264 = vadd.f32 0.0, %v4263
    %v4265 = vpop.f32.mrb[0].mxu0
    %4266 = vdwg.mxu0
    %v4267 = vadd.f32 %v4108, %v4264
    %v4268 = vld [vmem:[%s13] sm:$0x1]
    %v4270 = vlaneseq
    %v4271 = vshrl.u32 %v4270, 7
    %v4272 = vsub.s32 0, %v4271
    %v4273 = vrot.slane %v4268, %v4272
    %v4275 = vadd.f32 %v4267, %v4273
    %v4276 = vmax.f32 %v4275, 0.0
    %v4277 = vld [vmem:[%s14] sm:$0xff]
    %v4278 = vld [vmem:[%s14 + $0x8] sm:$0xff]
    %v4279 = vld [vmem:[%s14 + $0x10] sm:$0xff]
    %v4280 = vld [vmem:[%s14 + $0x18] sm:$0xff]
    %v4281 = vld [vmem:[%s14 + $0x20] sm:$0xff]
    %v4282 = vld [vmem:[%s14 + $0x28] sm:$0xff]
    %v4283 = vld [vmem:[%s14 + $0x30] sm:$0xff]
    %v4284 = vld [vmem:[%s14 + $0x38] sm:$0xff]
    %v4285 = vld [vmem:[%s14 + $0x40] sm:$0xff]
    %v4286 = vld [vmem:[%s14 + $0x48] sm:$0xff]
    %v4287 = vld [vmem:[%s14 + $0x50] sm:$0xff]
    %v4288 = vld [vmem:[%s14 + $0x58] sm:$0xff]
    %v4289 = vld [vmem:[%s14 + $0x60] sm:$0xff]
    %v4290 = vld [vmem:[%s14 + $0x68] sm:$0xff]
    %v4291 = vld [vmem:[%s14 + $0x70] sm:$0xff]
    %v4292 = vld [vmem:[%s15] sm:$0x1]
    %v4294 = vlaneseq
    %v4295 = vshrl.u32 %v4294, 7
    %v4296 = vsub.s32 0, %v4295
    %v4297 = vrot.slane %v4292, %v4296
    %vm4299 = vcmask 982016
    %v4301 = vsel %vm4299, %v4276, 0
    %4303 = vmatprep.subr.mxu0 0.0
    %4304 = vmatpush1.msra.mxu0 %v4277
    %4305 = vmatprep.subr.mxu0 0.0
    %4306 = vmatpush1.msra.mxu0 %v4278
    %4307 = vmatprep.subr.mxu0 0.0
    %4308 = vmatpush1.msra.mxu0 %v4279
    %4309 = vmatprep.subr.mxu0 0.0
    %4310 = vmatpush1.msra.mxu0 %v4280
    %4311 = vmatprep.subr.mxu0 0.0
    %4312 = vmatpush1.msra.mxu0 %v4281
    %4313 = vmatprep.subr.mxu0 0.0
    %4314 = vmatpush1.msra.mxu0 %v4282
    %4315 = vmatprep.subr.mxu0 0.0
    %4316 = vmatpush1.msra.mxu0 %v4283
    %4317 = vmatprep.subr.mxu0 0.0
    %4318 = vmatpush1.msra.mxu0 %v4284
    %4319 = vmatprep.subr.mxu0 0.0
    %4320 = vmatpush1.msra.mxu0 %v4285
    %4321 = vmatprep.subr.mxu0 0.0
    %4322 = vmatpush1.msra.mxu0 %v4286
    %4323 = vmatprep.subr.mxu0 0.0
    %4324 = vmatpush1.msra.mxu0 %v4287
    %4325 = vmatprep.subr.mxu0 0.0
    %4326 = vmatpush1.msra.mxu0 %v4288
    %4327 = vmatprep.subr.mxu0 0.0
    %4328 = vmatpush1.msra.mxu0 %v4289
    %4329 = vmatprep.subr.mxu0 0.0
    %4330 = vmatpush1.msra.mxu0 %v4290
    %4331 = vmatprep.subr.mxu0 0.0
    %4332 = vmatpush1.msra.mxu0 %v4291
    %4333 = vmatprep.subr.mxu0 0.0
    %4334 = vmatpush1.msra.mxu0 0.0
    %4335 = vmatprep.subr.mxu0 0.0
    %4336 = vmatpush1.msra.mxu0 0.0
    %4337 = vmatprep.subr.mxu0 0.0
    %4338 = vmatpush1.msra.mxu0 0.0
    %4339 = vmatprep.subr.mxu0 0.0
    %4340 = vmatpush1.msra.mxu0 0.0
    %4341 = vmatprep.subr.mxu0 0.0
    %4342 = vmatpush1.msra.mxu0 0.0
    %4343 = vmatprep.subr.mxu0 0.0
    %4344 = vmatpush1.msra.mxu0 0.0
    %4345 = vmatprep.subr.mxu0 0.0
    %4346 = vmatpush1.msra.mxu0 0.0
    %4347 = vmatprep.subr.mxu0 0.0
    %4348 = vmatpush1.msra.mxu0 0.0
    %4349 = vmatprep.subr.mxu0 0.0
    %4350 = vmatpush1.msra.mxu0 0.0
    %4351 = vmatprep.subr.mxu0 0.0
    %4352 = vmatpush1.msra.mxu0 0.0
    %4353 = vmatprep.subr.mxu0 0.0
    %4354 = vmatpush1.msra.mxu0 0.0
    %4355 = vmatprep.subr.mxu0 0.0
    %4356 = vmatpush1.msra.mxu0 0.0
    %4357 = vmatprep.subr.mxu0 0.0
    %4358 = vmatpush1.msra.mxu0 0.0
    %4359 = vmatprep.subr.mxu0 0.0
    %4360 = vmatpush1.msra.mxu0 0.0
    %4361 = vmatprep.subr.mxu0 0.0
    %4362 = vmatpush1.msra.mxu0 0.0
    %4363 = vmatprep.subr.mxu0 0.0
    %4364 = vmatpush1.msra.mxu0 0.0
    %4365 = vmatprep.subr.mxu0 0.0
    %4366 = vmatpush1.msra.mxu0 0.0
    %4367 = vmatprep.mubr.f32.mxu0 0.0
    %4368 = vmatmul.mubr.f32.gmra.mrb[0].mxu0 %v4301
    %v4369 = vpop.f32.mrb[0].mxu0
    %v4370 = vadd.f32 %v4297, %v4369
    %v4371 = vpop.f32.mrb[0].mxu0
    %4372 = vdwg.mxu0
    %v4373 = vmax.f32 %v4370, 0.0
    %v4374 = vld [vmem:[%s16] sm:$0xff]
    %v4375 = vld [vmem:[%s16 + $0x8] sm:$0xff]
    %v4376 = vld [vmem:[%s16 + $0x10] sm:$0xff]
    %v4377 = vld [vmem:[%s16 + $0x18] sm:$0xff]
    %v4378 = vld [vmem:[%s16 + $0x20] sm:$0xff]
    %v4379 = vld [vmem:[%s16 + $0x28] sm:$0xff]
    %v4380 = vld [vmem:[%s16 + $0x30] sm:$0xff]
    %v4381 = vld [vmem:[%s16 + $0x38] sm:$0xff]
    %v4382 = vld [vmem:[%s16 + $0x40] sm:$0xff]
    %v4383 = vld [vmem:[%s16 + $0x48] sm:$0xff]
    %v4384 = vld [vmem:[%s16 + $0x50] sm:$0xf]
    %v4385 = vld [vmem:[%s17] sm:$0x1]
    %v4387 = vlaneseq
    %v4388 = vshrl.u32 %v4387, 7
    %v4389 = vsub.s32 0, %v4388
    %v4390 = vrot.slane %v4385, %v4389
    %v4393 = vsel %vm2220, %v4373, 0
    %v4396 = vsel %vm1998, %v4384, 0
    %4398 = vmatprep.subr.mxu0 0.0
    %4399 = vmatpush1.msra.mxu0 %v4374
    %4400 = vmatprep.subr.mxu0 0.0
    %4401 = vmatpush1.msra.mxu0 %v4375
    %4402 = vmatprep.subr.mxu0 0.0
    %4403 = vmatpush1.msra.mxu0 %v4376
    %4404 = vmatprep.subr.mxu0 0.0
    %4405 = vmatpush1.msra.mxu0 %v4377
    %4406 = vmatprep.subr.mxu0 0.0
    %4407 = vmatpush1.msra.mxu0 %v4378
    %4408 = vmatprep.subr.mxu0 0.0
    %4409 = vmatpush1.msra.mxu0 %v4379
    %4410 = vmatprep.subr.mxu0 0.0
    %4411 = vmatpush1.msra.mxu0 %v4380
    %4412 = vmatprep.subr.mxu0 0.0
    %4413 = vmatpush1.msra.mxu0 %v4381
    %4414 = vmatprep.subr.mxu0 0.0
    %4415 = vmatpush1.msra.mxu0 %v4382
    %4416 = vmatprep.subr.mxu0 0.0
    %4417 = vmatpush1.msra.mxu0 %v4383
    %4418 = vmatprep.subr.mxu0 0.0
    %4419 = vmatpush1.msra.mxu0 %v4396
    %4420 = vmatprep.subr.mxu0 0.0
    %4421 = vmatpush1.msra.mxu0 0.0
    %4422 = vmatprep.subr.mxu0 0.0
    %4423 = vmatpush1.msra.mxu0 0.0
    %4424 = vmatprep.subr.mxu0 0.0
    %4425 = vmatpush1.msra.mxu0 0.0
    %4426 = vmatprep.subr.mxu0 0.0
    %4427 = vmatpush1.msra.mxu0 0.0
    %4428 = vmatprep.subr.mxu0 0.0
    %4429 = vmatpush1.msra.mxu0 0.0
    %4430 = vmatprep.subr.mxu0 0.0
    %4431 = vmatpush1.msra.mxu0 0.0
    %4432 = vmatprep.subr.mxu0 0.0
    %4433 = vmatpush1.msra.mxu0 0.0
    %4434 = vmatprep.subr.mxu0 0.0
    %4435 = vmatpush1.msra.mxu0 0.0
    %4436 = vmatprep.subr.mxu0 0.0
    %4437 = vmatpush1.msra.mxu0 0.0
    %4438 = vmatprep.subr.mxu0 0.0
    %4439 = vmatpush1.msra.mxu0 0.0
    %4440 = vmatprep.subr.mxu0 0.0
    %4441 = vmatpush1.msra.mxu0 0.0
    %4442 = vmatprep.subr.mxu0 0.0
    %4443 = vmatpush1.msra.mxu0 0.0
    %4444 = vmatprep.subr.mxu0 0.0
    %4445 = vmatpush1.msra.mxu0 0.0
    %4446 = vmatprep.subr.mxu0 0.0
    %4447 = vmatpush1.msra.mxu0 0.0
    %4448 = vmatprep.subr.mxu0 0.0
    %4449 = vmatpush1.msra.mxu0 0.0
    %4450 = vmatprep.subr.mxu0 0.0
    %4451 = vmatpush1.msra.mxu0 0.0
    %4452 = vmatprep.subr.mxu0 0.0
    %4453 = vmatpush1.msra.mxu0 0.0
    %4454 = vmatprep.subr.mxu0 0.0
    %4455 = vmatpush1.msra.mxu0 0.0
    %4456 = vmatprep.subr.mxu0 0.0
    %4457 = vmatpush1.msra.mxu0 0.0
    %4458 = vmatprep.subr.mxu0 0.0
    %4459 = vmatpush1.msra.mxu0 0.0
    %4460 = vmatprep.subr.mxu0 0.0
    %4461 = vmatpush1.msra.mxu0 0.0
    %4462 = vmatprep.mubr.f32.mxu0 0.0
    %4463 = vmatmul.mubr.f32.gmra.mrb[0].mxu0 %v4393
    %v4464 = vpop.f32.mrb[0].mxu0
    %v4465 = vadd.f32 %v4390, %v4464
    %v4466 = vpop.f32.mrb[0].mxu0
    %4467 = vdwg.mxu0
    %vm4468 = vcmask 74752
    %4469 = vst.msk [vmem:[#allocation2] sm:$0x3] %vm4468, %v4465
    // Predicated region
    $region74: #{net_forward.1} parent=1 // pred_check
      _
    $region75: #{net_forward.1} parent=1 // pred_check_branch
      %4471 = sbr.rel (0) target = $region77
    $region76: #{net_forward.1} parent=1 // pred_region
      %s4473 = ssub.s32 32, 32
      %4474 = vsyncadd [#allocation3], %s4473
      %s4476 = sshll.u32 [#allocation2], 4
      %s4477 = int_to_ptr.vmem [resolvable:$true] %s4476
      %4479 = dma.vmem_to_hbm [thread:$0]  %s4477, 32, %s18, [#allocation3]
    $region77: #{net_forward.1} parent=1 // pred_fallthru
      _
    // Predicated region
    $region78: #{net_forward.1} parent=1 // pred_check
      _
    $region79: #{net_forward.1} parent=1 // pred_check_branch
      %4481 = sbr.rel (0) target = $region81
    $region80: #{net_forward.1} parent=1 // pred_region
      %4482 = dma.done [#allocation3], 32
    $region81: #{net_forward.1} parent=1 // pred_fallthru
      _
    %4483 = vsyncpa [#allocation3], 1

</llo_original>
